<compile_context>
chip_gen: v7x
topology: tpu7x:2x2x1
jax: 0.10.0
libtpu: 0.0.40
codegen_flags: <defaults>
</compile_context>

<pallas_src>
import functools

import jax
import jax.numpy as jnp
from jax import lax
from jax.experimental import pallas as pl
from jax.experimental.pallas import tpu as pltpu

BN_EPS = 1e-5
LANE = 128
_VMEM_LIMIT = 32 * 1024 * 1024  # fits the scoped VMEM of every generation (v5e/v6e/v7x)


def _round_up(x, m):
    return (x + m - 1) // m * m


# ---------------------------------------------------------------------------
# Kernel 1: implicit-GEMM convolution + per-tile BatchNorm partial statistics
# ---------------------------------------------------------------------------
def _conv_stats_kernel(x_ref, w_ref, y_ref, stats_ref, *, taps, th, wo):
    # x_ref:     (P, Hq, Wq, Cin)   bf16 -- padded / phase-split image (one batch elem)
    # w_ref:     (T, Cin, Coutp)    bf16 -- one (Cin, Coutp) matrix per tap
    # y_ref:     (TH*Wo, Coutp)     f32  -- conv output rows for this (n, row-tile)
    # stats_ref: (1, 2, Coutp)      f32  -- per-tile [sum, sum-of-squares]
    coutp = w_ref.shape[-1]
    h0 = pl.program_id(1) * th
    acc = jnp.zeros((th * wo, coutp), jnp.float32)
    for t, (p, qi, qj) in enumerate(taps):            # unrolled tap loop (<= 9)
        xt = x_ref[p, pl.ds(h0 + qi, th), pl.ds(qj, wo), :]     # (TH, Wo, Cin)
        a = xt.reshape(th * wo, xt.shape[-1])
        acc = acc + jnp.dot(a, w_ref[t], preferred_element_type=jnp.float32)
    y_ref[...] = acc
    s = jnp.sum(acc, axis=0, keepdims=True)
    ss = jnp.sum(acc * acc, axis=0, keepdims=True)
    stats_ref[...] = jnp.concatenate([s, ss], axis=0).reshape(1, 2, coutp)


def conv_stats(xph, w, taps, *, n, p, ho, wo, th, coutp):
    """Implicit-GEMM conv.  Returns (y: (M, Coutp) f32, stats: (N*NHT, 2, Coutp) f32)."""
    _, hq, wq, cin = xph.shape
    t = len(taps)
    assert ho % th == 0
    assert w.shape == (t, cin, coutp)
    nht = ho // th
    m = n * ho * wo
    kernel = functools.partial(_conv_stats_kernel, taps=taps, th=th, wo=wo)
    return pl.pallas_call(
        kernel,
        out_shape=(
            jax.ShapeDtypeStruct((m, coutp), jnp.float32),
            jax.ShapeDtypeStruct((n * nht, 2, coutp), jnp.float32),
        ),
        grid=(n, nht),
        in_specs=[
            # Whole (phase-split) padded image for batch element n; its block index
            # only depends on n, so it is DMA'd once per n and revisited across the
            # row-tile axis.
            pl.BlockSpec((p, hq, wq, cin), lambda i, j: (i, 0, 0, 0)),
            pl.BlockSpec((t, cin, coutp), lambda i, j: (0, 0, 0)),
        ],
        out_specs=(
            pl.BlockSpec((th * wo, coutp), lambda i, j: (i * nht + j, 0)),
            pl.BlockSpec((1, 2, coutp), lambda i, j: (i * nht + j, 0, 0)),
        ),
        compiler_params=pltpu.CompilerParams(
            dimension_semantics=("parallel", "parallel"),
            vmem_limit_bytes=_VMEM_LIMIT,
        ),
    )(xph, w)


# ---------------------------------------------------------------------------
# Kernel 2: normalize (+ optional residual with its own folded BN) + ReLU
# ---------------------------------------------------------------------------
def _bn_act_kernel(y_ref, sc_ref, bi_ref, o_ref, *, relu):
    out = y_ref[...] * sc_ref[...] + bi_ref[...]
    if relu:
        out = jnp.maximum(out, 0.0)
    o_ref[...] = out.astype(o_ref.dtype)


def _bn_add_act_kernel(y_ref, sc_ref, bi_ref, r_ref, rsc_ref, rbi_ref, o_ref, *, relu):
    out = (y_ref[...] * sc_ref[...] + bi_ref[...]
           + r_ref[...].astype(jnp.float32) * rsc_ref[...] + rbi_ref[...])
    if relu:
        out = jnp.maximum(out, 0.0)
    o_ref[...] = out.astype(o_ref.dtype)


def bn_apply(y, scale, bias, residual=None, rscale=None, rbias=None, *,
             relu, out_dtype):
    m, coutp = y.shape
    tm = _pick_m_tile(m)
    row_spec = pl.BlockSpec((tm, coutp), lambda i: (i, 0))
    vec_spec = pl.BlockSpec((1, coutp), lambda i: (0, 0))
    if residual is None:
        kernel = functools.partial(_bn_act_kernel, relu=relu)
        in_specs = [row_spec, vec_spec, vec_spec]
        args = (y, scale, bias)
    else:
        kernel = functools.partial(_bn_add_act_kernel, relu=relu)
        in_specs = [row_spec, vec_spec, vec_spec, row_spec, vec_spec, vec_spec]
        args = (y, scale, bias, residual, rscale, rbias)
    return pl.pallas_call(
        kernel,
        out_shape=jax.ShapeDtypeStruct((m, coutp), out_dtype),
        grid=(m // tm,),
        in_specs=in_specs,
        out_specs=row_spec,
        compiler_params=pltpu.CompilerParams(
            dimension_semantics=("parallel",),
            vmem_limit_bytes=_VMEM_LIMIT,
        ),
    )(*args)


# ---------------------------------------------------------------------------
# Tiling helpers and plain-JAX glue (pad / polyphase split / weight re-layout)
# ---------------------------------------------------------------------------
def _pick_row_tile(ho, wo, target_rows=512):
    cands = [t for t in range(1, ho + 1)
             if ho % t == 0 and t * wo <= target_rows and (t * wo) % 8 == 0]
    if not cands:
        return ho
    best = max(cands)
    if best == ho:                      # prefer >= 2 row tiles so the grid pipelines
        smaller = [t for t in cands if t < ho]
        if smaller:
            best = max(smaller)
    return best


def _pick_m_tile(m, target=512):
    best = None
    for t in range(8, min(m, target) + 1, 8):
        if m % t == 0:
            best = t
    return best if best is not None else m


def _make_phases(x_nhwc, kh, kw, stride, pad):
    """Pad + (for stride>1) polyphase-split so every conv tap is a contiguous slice
    of a (N*P, Hq, Wq, C) slab.  Total size stays ~1x the input (no 9x im2col)."""
    n, h, w, c = x_nhwc.shape
    s = stride
    ho = (h + 2 * pad - kh) // s + 1
    wo = (w + 2 * pad - kw) // s + 1
    xp = jnp.pad(x_nhwc, ((0, 0), (pad, pad), (pad, pad), (0, 0)))
    hp, wp = h + 2 * pad, w + 2 * pad
    hq, wq = -(-hp // s), -(-wp // s)
    if s == 1:
        flat = xp                                        # P = 1
    else:
        phases = []
        for a in range(s):
            for b in range(s):
                ph = xp[:, a::s, b::s, :]
                ph = jnp.pad(ph, ((0, 0), (0, hq - ph.shape[1]),
                                  (0, wq - ph.shape[2]), (0, 0)))
                phases.append(ph)
        flat = jnp.stack(phases, axis=1).reshape(n * s * s, hq, wq, c)
    taps = [((di % s) * s + (dj % s), di // s, dj // s)
            for di in range(kh) for dj in range(kw)]
    return flat, taps, ho, wo, s * s


def _fold_bn(stats, m, gamma_p, beta_p):
    """Fold per-tile partial sums into per-channel scale/bias (training-mode BN)."""
    tot = jnp.sum(stats, axis=0)                         # (2, Coutp)
    mean = tot[0] / m
    var = jnp.maximum(tot[1] / m - mean * mean, 0.0)     # biased variance (PyTorch BN)
    inv = lax.rsqrt(var + BN_EPS)
    scale = gamma_p * inv
    bias = beta_p - mean * scale
    return scale.reshape(1, -1), bias.reshape(1, -1)


def _prep_conv_w(w_oihw, cin_eff, coutp):
    cout, cin, kh, kw = w_oihw.shape
    w = jnp.transpose(w_oihw, (2, 3, 1, 0)).reshape(kh * kw, cin, cout)  # tap-major
    w = jnp.pad(w, ((0, 0), (0, cin_eff - cin), (0, coutp - cout)))
    return w.astype(jnp.bfloat16)


def _pad_vec(v, coutp):
    return jnp.pad(v, (0, coutp - v.shape[0])).astype(jnp.float32)


def prepare_block(params, in_channels, out_channels, stride):
    """One-time weight re-layout / channel padding (hoisted out of the forward path)."""
    coutp = _round_up(out_channels, LANE)
    prep = {
        "cout": out_channels,
        "coutp": coutp,
        "has_proj": stride != 1 or in_channels != out_channels,
        "w1": _prep_conv_w(params["w1"], in_channels, coutp),
        "g1": _pad_vec(params["g1"], coutp),
        "b1": _pad_vec(params["b1"], coutp),
        # conv2 consumes the channel-padded activation, so pad its input dim too
        "w2": _prep_conv_w(params["w2"], coutp, coutp),
        "g2": _pad_vec(params["g2"], coutp),
        "b2": _pad_vec(params["b2"], coutp),
    }
    if prep["has_proj"]:
        prep["wsc"] = _prep_conv_w(params["wsc"], in_channels, coutp)
        prep["gsc"] = _pad_vec(params["gsc"], coutp)
        prep["bsc"] = _pad_vec(params["bsc"], coutp)
    else:
        prep["id_scale"] = jnp.ones((1, coutp), jnp.float32)
        prep["id_bias"] = jnp.zeros((1, coutp), jnp.float32)
    return prep


# ---------------------------------------------------------------------------
# BasicBlock forward (Pallas-backed)
# ---------------------------------------------------------------------------
def basic_block_forward(x_nchw, prep, stride):
    # TODO(synk): running_mean/running_var buffers of nn.BatchNorm2d are not updated
    # (normalization uses batch statistics, matching BatchNorm2d.forward in training mode).
    x = jnp.transpose(x_nchw, (0, 2, 3, 1)).astype(jnp.float32)          # NHWC
    n, h, w, cin = x.shape
    cout, coutp = prep["cout"], prep["coutp"]
    x_bf16 = x.astype(jnp.bfloat16)

    # ---- conv1 (3x3, stride) + bn1 + relu -----------------------------------
    xph, taps1, ho, wo, p1 = _make_phases(x_bf16, 3, 3, stride, 1)
    th = _pick_row_tile(ho, wo)
    m = n * ho * wo
    y1, st1 = conv_stats(xph, prep["w1"], taps1, n=n, p=p1, ho=ho, wo=wo,
                         th=th, coutp=coutp)
    sc1, bi1 = _fold_bn(st1, m, prep["g1"], prep["b1"])
    a1 = bn_apply(y1, sc1, bi1, relu=True, out_dtype=jnp.bfloat16)       # (M, Coutp)

    # ---- shortcut -------------------------------------------------------------
    if prep["has_proj"]:
        xs = x_bf16[:, ::stride, ::stride, :]                            # 1x1-conv input
        ysc, stsc = conv_stats(xs, prep["wsc"], [(0, 0, 0)], n=n, p=1,
                               ho=ho, wo=wo, th=th, coutp=coutp)
        rscale, rbias = _fold_bn(stsc, m, prep["gsc"], prep["bsc"])
        resid = ysc                                                      # raw conv out (f32)
    else:
        resid = jnp.pad(x.reshape(m, cin), ((0, 0), (0, coutp - cin)))   # identity
        rscale, rbias = prep["id_scale"], prep["id_bias"]

    # ---- conv2 (3x3, stride 1) + bn2 + shortcut-BN + add + relu (fused epilogue)
    # TODO(synk): the spatial re-pad of a1 between conv1 and conv2 is plain-JAX glue
    # (one ~1x HBM copy); it could be removed by writing a1 into a pre-padded buffer.
    a1ph, taps2, ho2, wo2, _ = _make_phases(a1.reshape(n, ho, wo, coutp), 3, 3, 1, 1)
    assert (ho2, wo2) == (ho, wo)
    y2, st2 = conv_stats(a1ph, prep["w2"], taps2, n=n, p=1, ho=ho, wo=wo,
                         th=th, coutp=coutp)
    sc2, bi2 = _fold_bn(st2, m, prep["g2"], prep["b2"])
    out = bn_apply(y2, sc2, bi2, residual=resid, rscale=rscale, rbias=rbias,
                   relu=True, out_dtype=jnp.float32)

    out = out.reshape(n, ho, wo, coutp)[..., :cout]
    return jnp.transpose(out, (0, 3, 1, 2))                              # back to NCHW


# ---------------------------------------------------------------------------
# Reference (lax.conv with the same bf16 MXU-input rounding, f32 accumulation)
# ---------------------------------------------------------------------------
def _ref_conv(x, w, stride, pad):
    return lax.conv_general_dilated(
        x.astype(jnp.bfloat16), w.astype(jnp.bfloat16),
        (stride, stride), ((pad, pad), (pad, pad)),
        dimension_numbers=("NCHW", "OIHW", "NCHW"),
        preferred_element_type=jnp.float32)


def _ref_bn(x, g, b):
    mean = jnp.mean(x, axis=(0, 2, 3), keepdims=True)
    var = jnp.mean(jnp.square(x - mean), axis=(0, 2, 3), keepdims=True)
    return (x - mean) * lax.rsqrt(var + BN_EPS) * g.reshape(1, -1, 1, 1) + b.reshape(1, -1, 1, 1)


def basic_block_ref(x, params, stride):
    cin = x.shape[1]
    cout = params["w1"].shape[0]
    out = jax.nn.relu(_ref_bn(_ref_conv(x, params["w1"], stride, 1), params["g1"], params["b1"]))
    out = _ref_bn(_ref_conv(out, params["w2"], 1, 1), params["g2"], params["b2"])
    if stride != 1 or cin != cout:
        sc = _ref_bn(_ref_conv(x, params["wsc"], stride, 0), params["gsc"], params["bsc"])
    else:
        sc = x
    return jax.nn.relu(out + sc)


# ---------------------------------------------------------------------------
# Parameter construction (deterministic, synthetic, PyTorch layout)
# ---------------------------------------------------------------------------
def make_params(key, in_channels, out_channels, stride):
    ks = jax.random.split(key, 10)
    params = {
        "w1": 0.1 * jax.random.normal(ks[0], (out_channels, in_channels, 3, 3), jnp.float32),
        "g1": 1.0 + 0.1 * jax.random.normal(ks[1], (out_channels,), jnp.float32),
        "b1": 0.1 * jax.random.normal(ks[2], (out_channels,), jnp.float32),
        "w2": 0.1 * jax.random.normal(ks[3], (out_channels, out_channels, 3, 3), jnp.float32),
        "g2": 1.0 + 0.1 * jax.random.normal(ks[4], (out_channels,), jnp.float32),
        "b2": 0.1 * jax.random.normal(ks[5], (out_channels,), jnp.float32),
    }
    if stride != 1 or in_channels != out_channels:
        params.update({
            "wsc": 0.1 * jax.random.normal(ks[6], (out_channels, in_channels, 1, 1), jnp.float32),
            "gsc": 1.0 + 0.1 * jax.random.normal(ks[7], (out_channels,), jnp.float32),
            "bsc": 0.1 * jax.random.normal(ks[8], (out_channels,), jnp.float32),
        })
    return params


if __name__ == "__main__":
    key = jax.random.PRNGKey(0)
    k_x, k_p1, k_p2 = jax.random.split(key, 3)
    x = jax.random.normal(k_x, (2, 4, 16, 16), jnp.float32)

    # Case 1: projection shortcut (stride=2, 4 -> 8 channels)
    params_proj = make_params(k_p1, in_channels=4, out_channels=8, stride=2)
    prep_proj = prepare_block(params_proj, 4, 8, 2)
    fwd_proj = jax.jit(lambda t: basic_block_forward(t, prep_proj, 2))
    out_proj = jax.block_until_ready(fwd_proj(x))
    ref_proj = basic_block_ref(x, params_proj, 2)
    assert out_proj.shape == (2, 8, 8, 8)
    err_p = float(jnp.max(jnp.abs(out_proj - ref_proj)))
    assert jnp.allclose(out_proj, ref_proj, rtol=1e-2, atol=1e-2), f"proj mismatch {err_p}"

    # Case 2: identity shortcut (stride=1, same channels)
    params_id = make_params(k_p2, in_channels=4, out_channels=4, stride=1)
    prep_id = prepare_block(params_id, 4, 4, 1)
    fwd_id = jax.jit(lambda t: basic_block_forward(t, prep_id, 1))
    out_id = jax.block_until_ready(fwd_id(x))
    ref_id = basic_block_ref(x, params_id, 1)
    assert out_id.shape == (2, 4, 16, 16)
    err_i = float(jnp.max(jnp.abs(out_id - ref_id)))
    assert jnp.allclose(out_id, ref_id, rtol=1e-2, atol=1e-2), f"identity mismatch {err_i}"

    print("KERNEL_OK")
</pallas_src>

<mosaic_0001>
module attributes {stable_mosaic.version = 11 : i64} {
  func.func @_conv_stats_kernel(%arg0: i32, %arg1: i32, %arg2: memref<1x8x8x4xbf16, #tpu.memory_space<vmem>>, %arg3: memref<1x4x128xbf16, #tpu.memory_space<vmem>>, %arg4: memref<32x128xf32, #tpu.memory_space<vmem>>, %arg5: memref<1x2x128xf32, #tpu.memory_space<vmem>>) attributes {dimension_semantics = [#tpu.dimension_semantics<parallel>, #tpu.dimension_semantics<parallel>], iteration_bounds = array<i64: 2, 2>, scalar_prefetch = 0 : i64, scratch_operands = 0 : i64, tpu.core_type = #tpu.core_type<tc>, window_params = [{transform_indices = @transform_0, window_bounds = array<i64: 1, 8, 8, 4>}, {pipeline_mode = #tpu.pipeline_mode<synchronous>, transform_indices = @transform_1, window_bounds = array<i64: 1, 4, 128>}, {transform_indices = @transform_2, window_bounds = array<i64: 32, 128>}, {transform_indices = @transform_3, window_bounds = array<i64: 1, 2, 128>}]} {
    %c4_i32 = arith.constant 4 : i32
    %0 = arith.muli %arg1, %c4_i32 : i32
    %cst = arith.constant 0.000000e+00 : f32
    %1 = vector.broadcast %cst : f32 to vector<32x128xf32>
    %c0_i32 = arith.constant 0 : i32
    %2 = arith.addi %0, %c0_i32 : i32
    %c0 = arith.constant 0 : index
    %3 = arith.index_cast %2 : i32 to index
    %c0_0 = arith.constant 0 : index
    %c0_1 = arith.constant 0 : index
    %4 = vector.load %arg2[%c0, %3, %c0_0, %c0_1] : memref<1x8x8x4xbf16, #tpu.memory_space<vmem>>, vector<1x4x8x4xbf16>
    %5 = vector.shape_cast %4 : vector<1x4x8x4xbf16> to vector<4x8x4xbf16>
    %6 = vector.shape_cast %5 : vector<4x8x4xbf16> to vector<32x4xbf16>
    %c0_2 = arith.constant 0 : index
    %c0_3 = arith.constant 0 : index
    %c0_4 = arith.constant 0 : index
    %7 = vector.load %arg3[%c0_2, %c0_3, %c0_4] : memref<1x4x128xbf16, #tpu.memory_space<vmem>>, vector<1x4x128xbf16>
    %8 = vector.shape_cast %7 : vector<1x4x128xbf16> to vector<4x128xbf16>
    %cst_5 = arith.constant dense<0.000000e+00> : vector<32x128xf32>
    %9 = tpu.matmul %6, %8, %cst_5 {dimension_numbers = #tpu.dot_dimension_numbers<[1], [0], [0], [1], [0, 0, 1, 1], [], []>} : vector<32x4xbf16>, vector<4x128xbf16>, vector<32x128xf32> -> vector<32x128xf32>
    %10 = arith.addf %1, %9 : vector<32x128xf32>
    %c0_6 = arith.constant 0 : index
    %c0_7 = arith.constant 0 : index
    %11 = vector.load %arg4[%c0_6, %c0_7] : memref<32x128xf32, #tpu.memory_space<vmem>>, vector<32x128xf32>
    tpu.vector_store %arg4[%c0_6, %c0_7], %10 {strides = array<i32>} : memref<32x128xf32, #tpu.memory_space<vmem>>, vector<32x128xf32>,
    %cst_8 = arith.constant dense<0.000000e+00> : vector<128xf32>
    %12 = vector.multi_reduction <add>, %10, %cst_8 [0] : vector<32x128xf32> to vector<128xf32>
    %13 = vector.shape_cast %12 : vector<128xf32> to vector<1x128xf32>
    %14 = arith.mulf %10, %10 : vector<32x128xf32>
    %cst_9 = arith.constant dense<0.000000e+00> : vector<128xf32>
    %15 = vector.multi_reduction <add>, %14, %cst_9 [0] : vector<32x128xf32> to vector<128xf32>
    %16 = vector.shape_cast %15 : vector<128xf32> to vector<1x128xf32>
    %17 = tpu.concatenate %13, %16 in 0 : vector<1x128xf32>, vector<1x128xf32> -> vector<2x128xf32>
    %18 = vector.shape_cast %17 : vector<2x128xf32> to vector<1x2x128xf32>
    %c0_10 = arith.constant 0 : index
    %c0_11 = arith.constant 0 : index
    %c0_12 = arith.constant 0 : index
    %19 = vector.load %arg5[%c0_10, %c0_11, %c0_12] : memref<1x2x128xf32, #tpu.memory_space<vmem>>, vector<1x2x128xf32>
    tpu.vector_store %arg5[%c0_10, %c0_11, %c0_12], %18 {strides = array<i32>} : memref<1x2x128xf32, #tpu.memory_space<vmem>>, vector<1x2x128xf32>,
    return
  }
  func.func @transform_0(%arg0: i32, %arg1: i32) -> (i32, i32, i32, i32) {
    %c0_i32 = arith.constant 0 : i32
    %c0_i32_0 = arith.constant 0 : i32
    %c0_i32_1 = arith.constant 0 : i32
    %c0_i32_2 = arith.constant 0 : i32
    return %arg0, %c0_i32, %c0_i32_0, %c0_i32_1 : i32, i32, i32, i32
  }
  func.func @transform_1(%arg0: i32, %arg1: i32) -> (i32, i32, i32) {
    %c0_i32 = arith.constant 0 : i32
    %c0_i32_0 = arith.constant 0 : i32
    %c0_i32_1 = arith.constant 0 : i32
    %c0_i32_2 = arith.constant 0 : i32
    return %c0_i32, %c0_i32_0, %c0_i32_1 : i32, i32, i32
  }
  func.func @transform_2(%arg0: i32, %arg1: i32) -> (i32, i32) {
    %c2_i32 = arith.constant 2 : i32
    %0 = arith.muli %arg0, %c2_i32 : i32
    %1 = arith.addi %0, %arg1 : i32
    %c0_i32 = arith.constant 0 : i32
    %c0_i32_0 = arith.constant 0 : i32
    return %1, %c0_i32 : i32, i32
  }
  func.func @transform_3(%arg0: i32, %arg1: i32) -> (i32, i32, i32) {
    %c2_i32 = arith.constant 2 : i32
    %0 = arith.muli %arg0, %c2_i32 : i32
    %1 = arith.addi %0, %arg1 : i32
    %c0_i32 = arith.constant 0 : i32
    %c0_i32_0 = arith.constant 0 : i32
    %c0_i32_1 = arith.constant 0 : i32
    return %1, %c0_i32, %c0_i32_0 : i32, i32, i32
  }
}

module attributes {stable_mosaic.version = 11 : i64} {
  func.func @_conv_stats_kernel(%arg0: i32, %arg1: i32, %arg2: memref<4x9x9x4xbf16, #tpu.memory_space<vmem>>, %arg3: memref<9x4x128xbf16, #tpu.memory_space<vmem>>, %arg4: memref<32x128xf32, #tpu.memory_space<vmem>>, %arg5: memref<1x2x128xf32, #tpu.memory_space<vmem>>) attributes {dimension_semantics = [#tpu.dimension_semantics<parallel>, #tpu.dimension_semantics<parallel>], iteration_bounds = array<i64: 2, 2>, scalar_prefetch = 0 : i64, scratch_operands = 0 : i64, tpu.core_type = #tpu.core_type<tc>, window_params = [{transform_indices = @transform_0, window_bounds = array<i64: 4, 9, 9, 4>}, {pipeline_mode = #tpu.pipeline_mode<synchronous>, transform_indices = @transform_1, window_bounds = array<i64: 9, 4, 128>}, {transform_indices = @transform_2, window_bounds = array<i64: 32, 128>}, {transform_indices = @transform_3, window_bounds = array<i64: 1, 2, 128>}]} {
    %c4_i32 = arith.constant 4 : i32
    %0 = arith.muli %arg1, %c4_i32 : i32
    %cst = arith.constant 0.000000e+00 : f32
    %1 = vector.broadcast %cst : f32 to vector<32x128xf32>
    %c0_i32 = arith.constant 0 : i32
    %2 = arith.addi %0, %c0_i32 : i32
    %c0 = arith.constant 0 : index
    %3 = arith.index_cast %2 : i32 to index
    %c0_0 = arith.constant 0 : index
    %c0_1 = arith.constant 0 : index
    %4 = vector.load %arg2[%c0, %3, %c0_0, %c0_1] : memref<4x9x9x4xbf16, #tpu.memory_space<vmem>>, vector<1x4x8x4xbf16>
    %5 = vector.shape_cast %4 : vector<1x4x8x4xbf16> to vector<4x8x4xbf16>
    %6 = vector.shape_cast %5 : vector<4x8x4xbf16> to vector<32x4xbf16>
    %c0_2 = arith.constant 0 : index
    %c0_3 = arith.constant 0 : index
    %c0_4 = arith.constant 0 : index
    %7 = vector.load %arg3[%c0_2, %c0_3, %c0_4] : memref<9x4x128xbf16, #tpu.memory_space<vmem>>, vector<1x4x128xbf16>
    %8 = vector.shape_cast %7 : vector<1x4x128xbf16> to vector<4x128xbf16>
    %cst_5 = arith.constant dense<0.000000e+00> : vector<32x128xf32>
    %9 = tpu.matmul %6, %8, %cst_5 {dimension_numbers = #tpu.dot_dimension_numbers<[1], [0], [0], [1], [0, 0, 1, 1], [], []>} : vector<32x4xbf16>, vector<4x128xbf16>, vector<32x128xf32> -> vector<32x128xf32>
    %10 = arith.addf %1, %9 : vector<32x128xf32>
    %c0_i32_6 = arith.constant 0 : i32
    %11 = arith.addi %0, %c0_i32_6 : i32
    %c1 = arith.constant 1 : index
    %12 = arith.index_cast %11 : i32 to index
    %c0_7 = arith.constant 0 : index
    %c0_8 = arith.constant 0 : index
    %13 = vector.load %arg2[%c1, %12, %c0_7, %c0_8] : memref<4x9x9x4xbf16, #tpu.memory_space<vmem>>, vector<1x4x8x4xbf16>
    %14 = vector.shape_cast %13 : vector<1x4x8x4xbf16> to vector<4x8x4xbf16>
    %15 = vector.shape_cast %14 : vector<4x8x4xbf16> to vector<32x4xbf16>
    %c1_9 = arith.constant 1 : index
    %c0_10 = arith.constant 0 : index
    %c0_11 = arith.constant 0 : index
    %16 = vector.load %arg3[%c1_9, %c0_10, %c0_11] : memref<9x4x128xbf16, #tpu.memory_space<vmem>>, vector<1x4x128xbf16>
    %17 = vector.shape_cast %16 : vector<1x4x128xbf16> to vector<4x128xbf16>
    %cst_12 = arith.constant dense<0.000000e+00> : vector<32x128xf32>
    %18 = tpu.matmul %15, %17, %cst_12 {dimension_numbers = #tpu.dot_dimension_numbers<[1], [0], [0], [1], [0, 0, 1, 1], [], []>} : vector<32x4xbf16>, vector<4x128xbf16>, vector<32x128xf32> -> vector<32x128xf32>
    %19 = arith.addf %10, %18 : vector<32x128xf32>
    %c0_i32_13 = arith.constant 0 : i32
    %20 = arith.addi %0, %c0_i32_13 : i32
    %c0_14 = arith.constant 0 : index
    %21 = arith.index_cast %20 : i32 to index
    %c1_15 = arith.constant 1 : index
    %c0_16 = arith.constant 0 : index
    %22 = vector.load %arg2[%c0_14, %21, %c1_15, %c0_16] : memref<4x9x9x4xbf16, #tpu.memory_space<vmem>>, vector<1x4x8x4xbf16>
    %23 = vector.shape_cast %22 : vector<1x4x8x4xbf16> to vector<4x8x4xbf16>
    %24 = vector.shape_cast %23 : vector<4x8x4xbf16> to vector<32x4xbf16>
    %c2 = arith.constant 2 : index
    %c0_17 = arith.constant 0 : index
    %c0_18 = arith.constant 0 : index
    %25 = vector.load %arg3[%c2, %c0_17, %c0_18] : memref<9x4x128xbf16, #tpu.memory_space<vmem>>, vector<1x4x128xbf16>
    %26 = vector.shape_cast %25 : vector<1x4x128xbf16> to vector<4x128xbf16>
    %cst_19 = arith.constant dense<0.000000e+00> : vector<32x128xf32>
    %27 = tpu.matmul %24, %26, %cst_19 {dimension_numbers = #tpu.dot_dimension_numbers<[1], [0], [0], [1], [0, 0, 1, 1], [], []>} : vector<32x4xbf16>, vector<4x128xbf16>, vector<32x128xf32> -> vector<32x128xf32>
    %28 = arith.addf %19, %27 : vector<32x128xf32>
    %c0_i32_20 = arith.constant 0 : i32
    %29 = arith.addi %0, %c0_i32_20 : i32
    %c2_21 = arith.constant 2 : index
    %30 = arith.index_cast %29 : i32 to index
    %c0_22 = arith.constant 0 : index
    %c0_23 = arith.constant 0 : index
    %31 = vector.load %arg2[%c2_21, %30, %c0_22, %c0_23] : memref<4x9x9x4xbf16, #tpu.memory_space<vmem>>, vector<1x4x8x4xbf16>
    %32 = vector.shape_cast %31 : vector<1x4x8x4xbf16> to vector<4x8x4xbf16>
    %33 = vector.shape_cast %32 : vector<4x8x4xbf16> to vector<32x4xbf16>
    %c3 = arith.constant 3 : index
    %c0_24 = arith.constant 0 : index
    %c0_25 = arith.constant 0 : index
    %34 = vector.load %arg3[%c3, %c0_24, %c0_25] : memref<9x4x128xbf16, #tpu.memory_space<vmem>>, vector<1x4x128xbf16>
    %35 = vector.shape_cast %34 : vector<1x4x128xbf16> to vector<4x128xbf16>
    %cst_26 = arith.constant dense<0.000000e+00> : vector<32x128xf32>
    %36 = tpu.matmul %33, %35, %cst_26 {dimension_numbers = #tpu.dot_dimension_numbers<[1], [0], [0], [1], [0, 0, 1, 1], [], []>} : vector<32x4xbf16>, vector<4x128xbf16>, vector<32x128xf32> -> vector<32x128xf32>
    %37 = arith.addf %28, %36 : vector<32x128xf32>
    %c0_i32_27 = arith.constant 0 : i32
    %38 = arith.addi %0, %c0_i32_27 : i32
    %c3_28 = arith.constant 3 : index
    %39 = arith.index_cast %38 : i32 to index
    %c0_29 = arith.constant 0 : index
    %c0_30 = arith.constant 0 : index
    %40 = vector.load %arg2[%c3_28, %39, %c0_29, %c0_30] : memref<4x9x9x4xbf16, #tpu.memory_space<vmem>>, vector<1x4x8x4xbf16>
    %41 = vector.shape_cast %40 : vector<1x4x8x4xbf16> to vector<4x8x4xbf16>
    %42 = vector.shape_cast %41 : vector<4x8x4xbf16> to vector<32x4xbf16>
    %c4 = arith.constant 4 : index
    %c0_31 = arith.constant 0 : index
    %c0_32 = arith.constant 0 : index
    %43 = vector.load %arg3[%c4, %c0_31, %c0_32] : memref<9x4x128xbf16, #tpu.memory_space<vmem>>, vector<1x4x128xbf16>
    %44 = vector.shape_cast %43 : vector<1x4x128xbf16> to vector<4x128xbf16>
    %cst_33 = arith.constant dense<0.000000e+00> : vector<32x128xf32>
    %45 = tpu.matmul %42, %44, %cst_33 {dimension_numbers = #tpu.dot_dimension_numbers<[1], [0], [0], [1], [0, 0, 1, 1], [], []>} : vector<32x4xbf16>, vector<4x128xbf16>, vector<32x128xf32> -> vector<32x128xf32>
    %46 = arith.addf %37, %45 : vector<32x128xf32>
    %c0_i32_34 = arith.constant 0 : i32
    %47 = arith.addi %0, %c0_i32_34 : i32
    %c2_35 = arith.constant 2 : index
    %48 = arith.index_cast %47 : i32 to index
    %c1_36 = arith.constant 1 : index
    %c0_37 = arith.constant 0 : index
    %49 = vector.load %arg2[%c2_35, %48, %c1_36, %c0_37] : memref<4x9x9x4xbf16, #tpu.memory_space<vmem>>, vector<1x4x8x4xbf16>
    %50 = vector.shape_cast %49 : vector<1x4x8x4xbf16> to vector<4x8x4xbf16>
    %51 = vector.shape_cast %50 : vector<4x8x4xbf16> to vector<32x4xbf16>
    %c5 = arith.constant 5 : index
    %c0_38 = arith.constant 0 : index
    %c0_39 = arith.constant 0 : index
    %52 = vector.load %arg3[%c5, %c0_38, %c0_39] : memref<9x4x128xbf16, #tpu.memory_space<vmem>>, vector<1x4x128xbf16>
    %53 = vector.shape_cast %52 : vector<1x4x128xbf16> to vector<4x128xbf16>
    %cst_40 = arith.constant dense<0.000000e+00> : vector<32x128xf32>
    %54 = tpu.matmul %51, %53, %cst_40 {dimension_numbers = #tpu.dot_dimension_numbers<[1], [0], [0], [1], [0, 0, 1, 1], [], []>} : vector<32x4xbf16>, vector<4x128xbf16>, vector<32x128xf32> -> vector<32x128xf32>
    %55 = arith.addf %46, %54 : vector<32x128xf32>
    %c1_i32 = arith.constant 1 : i32
    %56 = arith.addi %0, %c1_i32 : i32
    %c0_41 = arith.constant 0 : index
    %57 = arith.index_cast %56 : i32 to index
    %c0_42 = arith.constant 0 : index
    %c0_43 = arith.constant 0 : index
    %58 = vector.load %arg2[%c0_41, %57, %c0_42, %c0_43] : memref<4x9x9x4xbf16, #tpu.memory_space<vmem>>, vector<1x4x8x4xbf16>
    %59 = vector.shape_cast %58 : vector<1x4x8x4xbf16> to vector<4x8x4xbf16>
    %60 = vector.shape_cast %59 : vector<4x8x4xbf16> to vector<32x4xbf16>
    %c6 = arith.constant 6 : index
    %c0_44 = arith.constant 0 : index
    %c0_45 = arith.constant 0 : index
    %61 = vector.load %arg3[%c6, %c0_44, %c0_45] : memref<9x4x128xbf16, #tpu.memory_space<vmem>>, vector<1x4x128xbf16>
    %62 = vector.shape_cast %61 : vector<1x4x128xbf16> to vector<4x128xbf16>
    %cst_46 = arith.constant dense<0.000000e+00> : vector<32x128xf32>
    %63 = tpu.matmul %60, %62, %cst_46 {dimension_numbers = #tpu.dot_dimension_numbers<[1], [0], [0], [1], [0, 0, 1, 1], [], []>} : vector<32x4xbf16>, vector<4x128xbf16>, vector<32x128xf32> -> vector<32x128xf32>
    %64 = arith.addf %55, %63 : vector<32x128xf32>
    %c1_i32_47 = arith.constant 1 : i32
    %65 = arith.addi %0, %c1_i32_47 : i32
    %c1_48 = arith.constant 1 : index
    %66 = arith.index_cast %65 : i32 to index
    %c0_49 = arith.constant 0 : index
    %c0_50 = arith.constant 0 : index
    %67 = vector.load %arg2[%c1_48, %66, %c0_49, %c0_50] : memref<4x9x9x4xbf16, #tpu.memory_space<vmem>>, vector<1x4x8x4xbf16>
    %68 = vector.shape_cast %67 : vector<1x4x8x4xbf16> to vector<4x8x4xbf16>
    %69 = vector.shape_cast %68 : vector<4x8x4xbf16> to vector<32x4xbf16>
    %c7 = arith.constant 7 : index
    %c0_51 = arith.constant 0 : index
    %c0_52 = arith.constant 0 : index
    %70 = vector.load %arg3[%c7, %c0_51, %c0_52] : memref<9x4x128xbf16, #tpu.memory_space<vmem>>, vector<1x4x128xbf16>
    %71 = vector.shape_cast %70 : vector<1x4x128xbf16> to vector<4x128xbf16>
    %cst_53 = arith.constant dense<0.000000e+00> : vector<32x128xf32>
    %72 = tpu.matmul %69, %71, %cst_53 {dimension_numbers = #tpu.dot_dimension_numbers<[1], [0], [0], [1], [0, 0, 1, 1], [], []>} : vector<32x4xbf16>, vector<4x128xbf16>, vector<32x128xf32> -> vector<32x128xf32>
    %73 = arith.addf %64, %72 : vector<32x128xf32>
    %c1_i32_54 = arith.constant 1 : i32
    %74 = arith.addi %0, %c1_i32_54 : i32
    %c0_55 = arith.constant 0 : index
    %75 = arith.index_cast %74 : i32 to index
    %c1_56 = arith.constant 1 : index
    %c0_57 = arith.constant 0 : index
    %76 = vector.load %arg2[%c0_55, %75, %c1_56, %c0_57] : memref<4x9x9x4xbf16, #tpu.memory_space<vmem>>, vector<1x4x8x4xbf16>
    %77 = vector.shape_cast %76 : vector<1x4x8x4xbf16> to vector<4x8x4xbf16>
    %78 = vector.shape_cast %77 : vector<4x8x4xbf16> to vector<32x4xbf16>
    %c8 = arith.constant 8 : index
    %c0_58 = arith.constant 0 : index
    %c0_59 = arith.constant 0 : index
    %79 = vector.load %arg3[%c8, %c0_58, %c0_59] : memref<9x4x128xbf16, #tpu.memory_space<vmem>>, vector<1x4x128xbf16>
    %80 = vector.shape_cast %79 : vector<1x4x128xbf16> to vector<4x128xbf16>
    %cst_60 = arith.constant dense<0.000000e+00> : vector<32x128xf32>
    %81 = tpu.matmul %78, %80, %cst_60 {dimension_numbers = #tpu.dot_dimension_numbers<[1], [0], [0], [1], [0, 0, 1, 1], [], []>} : vector<32x4xbf16>, vector<4x128xbf16>, vector<32x128xf32> -> vector<32x128xf32>
    %82 = arith.addf %73, %81 : vector<32x128xf32>
    %c0_61 = arith.constant 0 : index
    %c0_62 = arith.constant 0 : index
    %83 = vector.load %arg4[%c0_61, %c0_62] : memref<32x128xf32, #tpu.memory_space<vmem>>, vector<32x128xf32>
    tpu.vector_store %arg4[%c0_61, %c0_62], %82 {strides = array<i32>} : memref<32x128xf32, #tpu.memory_space<vmem>>, vector<32x128xf32>,
    %cst_63 = arith.constant dense<0.000000e+00> : vector<128xf32>
    %84 = vector.multi_reduction <add>, %82, %cst_63 [0] : vector<32x128xf32> to vector<128xf32>
    %85 = vector.shape_cast %84 : vector<128xf32> to vector<1x128xf32>
    %86 = arith.mulf %82, %82 : vector<32x128xf32>
    %cst_64 = arith.constant dense<0.000000e+00> : vector<128xf32>
    %87 = vector.multi_reduction <add>, %86, %cst_64 [0] : vector<32x128xf32> to vector<128xf32>
    %88 = vector.shape_cast %87 : vector<128xf32> to vector<1x128xf32>
    %89 = tpu.concatenate %85, %88 in 0 : vector<1x128xf32>, vector<1x128xf32> -> vector<2x128xf32>
    %90 = vector.shape_cast %89 : vector<2x128xf32> to vector<1x2x128xf32>
    %c0_65 = arith.constant 0 : index
    %c0_66 = arith.constant 0 : index
    %c0_67 = arith.constant 0 : index
    %91 = vector.load %arg5[%c0_65, %c0_66, %c0_67] : memref<1x2x128xf32, #tpu.memory_space<vmem>>, vector<1x2x128xf32>
    tpu.vector_store %arg5[%c0_65, %c0_66, %c0_67], %90 {strides = array<i32>} : memref<1x2x128xf32, #tpu.memory_space<vmem>>, vector<1x2x128xf32>,
    return
  }
  func.func @transform_0(%arg0: i32, %arg1: i32) -> (i32, i32, i32, i32) {
    %c0_i32 = arith.constant 0 : i32
    %c0_i32_0 = arith.constant 0 : i32
    %c0_i32_1 = arith.constant 0 : i32
    %c0_i32_2 = arith.constant 0 : i32
    return %arg0, %c0_i32, %c0_i32_0, %c0_i32_1 : i32, i32, i32, i32
  }
  func.func @transform_1(%arg0: i32, %arg1: i32) -> (i32, i32, i32) {
    %c0_i32 = arith.constant 0 : i32
    %c0_i32_0 = arith.constant 0 : i32
    %c0_i32_1 = arith.constant 0 : i32
    %c0_i32_2 = arith.constant 0 : i32
    return %c0_i32, %c0_i32_0, %c0_i32_1 : i32, i32, i32
  }
  func.func @transform_2(%arg0: i32, %arg1: i32) -> (i32, i32) {
    %c2_i32 = arith.constant 2 : i32
    %0 = arith.muli %arg0, %c2_i32 : i32
    %1 = arith.addi %0, %arg1 : i32
    %c0_i32 = arith.constant 0 : i32
    %c0_i32_0 = arith.constant 0 : i32
    return %1, %c0_i32 : i32, i32
  }
  func.func @transform_3(%arg0: i32, %arg1: i32) -> (i32, i32, i32) {
    %c2_i32 = arith.constant 2 : i32
    %0 = arith.muli %arg0, %c2_i32 : i32
    %1 = arith.addi %0, %arg1 : i32
    %c0_i32 = arith.constant 0 : i32
    %c0_i32_0 = arith.constant 0 : i32
    %c0_i32_1 = arith.constant 0 : i32
    return %1, %c0_i32, %c0_i32_0 : i32, i32, i32
  }
}

module attributes {stable_mosaic.version = 11 : i64} {
  func.func @_bn_act_kernel(%arg0: i32, %arg1: memref<128x128xf32, #tpu.memory_space<vmem>>, %arg2: memref<1x128xf32, #tpu.memory_space<vmem>>, %arg3: memref<1x128xf32, #tpu.memory_space<vmem>>, %arg4: memref<128x128xbf16, #tpu.memory_space<vmem>>) attributes {dimension_semantics = [#tpu.dimension_semantics<parallel>], iteration_bounds = array<i64: 1>, scalar_prefetch = 0 : i64, scratch_operands = 0 : i64, tpu.core_type = #tpu.core_type<tc>, window_params = [{transform_indices = @transform_0, window_bounds = array<i64: 128, 128>}, {pipeline_mode = #tpu.pipeline_mode<synchronous>, transform_indices = @transform_1, window_bounds = array<i64: 1, 128>}, {pipeline_mode = #tpu.pipeline_mode<synchronous>, transform_indices = @transform_2, window_bounds = array<i64: 1, 128>}, {transform_indices = @transform_3, window_bounds = array<i64: 128, 128>}]} {
    %c0 = arith.constant 0 : index
    %c0_0 = arith.constant 0 : index
    %0 = vector.load %arg1[%c0, %c0_0] : memref<128x128xf32, #tpu.memory_space<vmem>>, vector<128x128xf32>
    %c0_1 = arith.constant 0 : index
    %c0_2 = arith.constant 0 : index
    %1 = vector.load %arg2[%c0_1, %c0_2] : memref<1x128xf32, #tpu.memory_space<vmem>>, vector<1x128xf32>
    %2 = vector.broadcast %1 : vector<1x128xf32> to vector<128x128xf32>
    %3 = arith.mulf %0, %2 : vector<128x128xf32>
    %c0_3 = arith.constant 0 : index
    %c0_4 = arith.constant 0 : index
    %4 = vector.load %arg3[%c0_3, %c0_4] : memref<1x128xf32, #tpu.memory_space<vmem>>, vector<1x128xf32>
    %5 = vector.broadcast %4 : vector<1x128xf32> to vector<128x128xf32>
    %6 = arith.addf %3, %5 : vector<128x128xf32>
    %cst = arith.constant 0.000000e+00 : f32
    %7 = vector.broadcast %cst : f32 to vector<128x128xf32>
    %8 = arith.maximumf %6, %7 : vector<128x128xf32>
    %9 = arith.truncf %8 : vector<128x128xf32> to vector<128x128xbf16>
    %c0_5 = arith.constant 0 : index
    %c0_6 = arith.constant 0 : index
    %10 = vector.load %arg4[%c0_5, %c0_6] : memref<128x128xbf16, #tpu.memory_space<vmem>>, vector<128x128xbf16>
    tpu.vector_store %arg4[%c0_5, %c0_6], %9 {strides = array<i32>} : memref<128x128xbf16, #tpu.memory_space<vmem>>, vector<128x128xbf16>,
    return
  }
  func.func @transform_0(%arg0: i32) -> (i32, i32) {
    %c0_i32 = arith.constant 0 : i32
    %c0_i32_0 = arith.constant 0 : i32
    return %arg0, %c0_i32 : i32, i32
  }
  func.func @transform_1(%arg0: i32) -> (i32, i32) {
    %c0_i32 = arith.constant 0 : i32
    %c0_i32_0 = arith.constant 0 : i32
    %c0_i32_1 = arith.constant 0 : i32
    return %c0_i32, %c0_i32_0 : i32, i32
  }
  func.func @transform_2(%arg0: i32) -> (i32, i32) {
    %c0_i32 = arith.constant 0 : i32
    %c0_i32_0 = arith.constant 0 : i32
    %c0_i32_1 = arith.constant 0 : i32
    return %c0_i32, %c0_i32_0 : i32, i32
  }
  func.func @transform_3(%arg0: i32) -> (i32, i32) {
    %c0_i32 = arith.constant 0 : i32
    %c0_i32_0 = arith.constant 0 : i32
    return %arg0, %c0_i32 : i32, i32
  }
}

module attributes {stable_mosaic.version = 11 : i64} {
  func.func @_bn_add_act_kernel(%arg0: i32, %arg1: memref<128x128xf32, #tpu.memory_space<vmem>>, %arg2: memref<1x128xf32, #tpu.memory_space<vmem>>, %arg3: memref<1x128xf32, #tpu.memory_space<vmem>>, %arg4: memref<128x128xf32, #tpu.memory_space<vmem>>, %arg5: memref<1x128xf32, #tpu.memory_space<vmem>>, %arg6: memref<1x128xf32, #tpu.memory_space<vmem>>, %arg7: memref<128x128xf32, #tpu.memory_space<vmem>>) attributes {dimension_semantics = [#tpu.dimension_semantics<parallel>], iteration_bounds = array<i64: 1>, scalar_prefetch = 0 : i64, scratch_operands = 0 : i64, tpu.core_type = #tpu.core_type<tc>, window_params = [{transform_indices = @transform_0, window_bounds = array<i64: 128, 128>}, {pipeline_mode = #tpu.pipeline_mode<synchronous>, transform_indices = @transform_1, window_bounds = array<i64: 1, 128>}, {pipeline_mode = #tpu.pipeline_mode<synchronous>, transform_indices = @transform_2, window_bounds = array<i64: 1, 128>}, {transform_indices = @transform_3, window_bounds = array<i64: 128, 128>}, {pipeline_mode = #tpu.pipeline_mode<synchronous>, transform_indices = @transform_4, window_bounds = array<i64: 1, 128>}, {pipeline_mode = #tpu.pipeline_mode<synchronous>, transform_indices = @transform_5, window_bounds = array<i64: 1, 128>}, {transform_indices = @transform_6, window_bounds = array<i64: 128, 128>}]} {
    %c0 = arith.constant 0 : index
    %c0_0 = arith.constant 0 : index
    %0 = vector.load %arg1[%c0, %c0_0] : memref<128x128xf32, #tpu.memory_space<vmem>>, vector<128x128xf32>
    %c0_1 = arith.constant 0 : index
    %c0_2 = arith.constant 0 : index
    %1 = vector.load %arg2[%c0_1, %c0_2] : memref<1x128xf32, #tpu.memory_space<vmem>>, vector<1x128xf32>
    %2 = vector.broadcast %1 : vector<1x128xf32> to vector<128x128xf32>
    %3 = arith.mulf %0, %2 : vector<128x128xf32>
    %c0_3 = arith.constant 0 : index
    %c0_4 = arith.constant 0 : index
    %4 = vector.load %arg3[%c0_3, %c0_4] : memref<1x128xf32, #tpu.memory_space<vmem>>, vector<1x128xf32>
    %5 = vector.broadcast %4 : vector<1x128xf32> to vector<128x128xf32>
    %6 = arith.addf %3, %5 : vector<128x128xf32>
    %c0_5 = arith.constant 0 : index
    %c0_6 = arith.constant 0 : index
    %7 = vector.load %arg4[%c0_5, %c0_6] : memref<128x128xf32, #tpu.memory_space<vmem>>, vector<128x128xf32>
    %c0_7 = arith.constant 0 : index
    %c0_8 = arith.constant 0 : index
    %8 = vector.load %arg5[%c0_7, %c0_8] : memref<1x128xf32, #tpu.memory_space<vmem>>, vector<1x128xf32>
    %9 = vector.broadcast %8 : vector<1x128xf32> to vector<128x128xf32>
    %10 = arith.mulf %7, %9 : vector<128x128xf32>
    %11 = arith.addf %6, %10 : vector<128x128xf32>
    %c0_9 = arith.constant 0 : index
    %c0_10 = arith.constant 0 : index
    %12 = vector.load %arg6[%c0_9, %c0_10] : memref<1x128xf32, #tpu.memory_space<vmem>>, vector<1x128xf32>
    %13 = vector.broadcast %12 : vector<1x128xf32> to vector<128x128xf32>
    %14 = arith.addf %11, %13 : vector<128x128xf32>
    %cst = arith.constant 0.000000e+00 : f32
    %15 = vector.broadcast %cst : f32 to vector<128x128xf32>
    %16 = arith.maximumf %14, %15 : vector<128x128xf32>
    %c0_11 = arith.constant 0 : index
    %c0_12 = arith.constant 0 : index
    %17 = vector.load %arg7[%c0_11, %c0_12] : memref<128x128xf32, #tpu.memory_space<vmem>>, vector<128x128xf32>
    tpu.vector_store %arg7[%c0_11, %c0_12], %16 {strides = array<i32>} : memref<128x128xf32, #tpu.memory_space<vmem>>, vector<128x128xf32>,
    return
  }
  func.func @transform_0(%arg0: i32) -> (i32, i32) {
    %c0_i32 = arith.constant 0 : i32
    %c0_i32_0 = arith.constant 0 : i32
    return %arg0, %c0_i32 : i32, i32
  }
  func.func @transform_1(%arg0: i32) -> (i32, i32) {
    %c0_i32 = arith.constant 0 : i32
    %c0_i32_0 = arith.constant 0 : i32
    %c0_i32_1 = arith.constant 0 : i32
    return %c0_i32, %c0_i32_0 : i32, i32
  }
  func.func @transform_2(%arg0: i32) -> (i32, i32) {
    %c0_i32 = arith.constant 0 : i32
    %c0_i32_0 = arith.constant 0 : i32
    %c0_i32_1 = arith.constant 0 : i32
    return %c0_i32, %c0_i32_0 : i32, i32
  }
  func.func @transform_3(%arg0: i32) -> (i32, i32) {
    %c0_i32 = arith.constant 0 : i32
    %c0_i32_0 = arith.constant 0 : i32
    return %arg0, %c0_i32 : i32, i32
  }
  func.func @transform_4(%arg0: i32) -> (i32, i32) {
    %c0_i32 = arith.constant 0 : i32
    %c0_i32_0 = arith.constant 0 : i32
    %c0_i32_1 = arith.constant 0 : i32
    return %c0_i32, %c0_i32_0 : i32, i32
  }
  func.func @transform_5(%arg0: i32) -> (i32, i32) {
    %c0_i32 = arith.constant 0 : i32
    %c0_i32_0 = arith.constant 0 : i32
    %c0_i32_1 = arith.constant 0 : i32
    return %c0_i32, %c0_i32_0 : i32, i32
  }
  func.func @transform_6(%arg0: i32) -> (i32, i32) {
    %c0_i32 = arith.constant 0 : i32
    %c0_i32_0 = arith.constant 0 : i32
    return %arg0, %c0_i32 : i32, i32
  }
}

module attributes {stable_mosaic.version = 11 : i64} {
  func.func @_conv_stats_kernel(%arg0: i32, %arg1: i32, %arg2: memref<1x10x10x128xbf16, #tpu.memory_space<vmem>>, %arg3: memref<9x128x128xbf16, #tpu.memory_space<vmem>>, %arg4: memref<32x128xf32, #tpu.memory_space<vmem>>, %arg5: memref<1x2x128xf32, #tpu.memory_space<vmem>>) attributes {dimension_semantics = [#tpu.dimension_semantics<parallel>, #tpu.dimension_semantics<parallel>], iteration_bounds = array<i64: 2, 2>, scalar_prefetch = 0 : i64, scratch_operands = 0 : i64, tpu.core_type = #tpu.core_type<tc>, window_params = [{transform_indices = @transform_0, window_bounds = array<i64: 1, 10, 10, 128>}, {pipeline_mode = #tpu.pipeline_mode<synchronous>, transform_indices = @transform_1, window_bounds = array<i64: 9, 128, 128>}, {transform_indices = @transform_2, window_bounds = array<i64: 32, 128>}, {transform_indices = @transform_3, window_bounds = array<i64: 1, 2, 128>}]} {
    %c4_i32 = arith.constant 4 : i32
    %0 = arith.muli %arg1, %c4_i32 : i32
    %cst = arith.constant 0.000000e+00 : f32
    %1 = vector.broadcast %cst : f32 to vector<32x128xf32>
    %c0_i32 = arith.constant 0 : i32
    %2 = arith.addi %0, %c0_i32 : i32
    %c0 = arith.constant 0 : index
    %3 = arith.index_cast %2 : i32 to index
    %c0_0 = arith.constant 0 : index
    %c0_1 = arith.constant 0 : index
    %4 = vector.load %arg2[%c0, %3, %c0_0, %c0_1] : memref<1x10x10x128xbf16, #tpu.memory_space<vmem>>, vector<1x4x8x128xbf16>
    %5 = vector.shape_cast %4 : vector<1x4x8x128xbf16> to vector<4x8x128xbf16>
    %6 = vector.shape_cast %5 : vector<4x8x128xbf16> to vector<32x128xbf16>
    %c0_2 = arith.constant 0 : index
    %c0_3 = arith.constant 0 : index
    %c0_4 = arith.constant 0 : index
    %7 = vector.load %arg3[%c0_2, %c0_3, %c0_4] : memref<9x128x128xbf16, #tpu.memory_space<vmem>>, vector<1x128x128xbf16>
    %8 = vector.shape_cast %7 : vector<1x128x128xbf16> to vector<128x128xbf16>
    %cst_5 = arith.constant dense<0.000000e+00> : vector<32x128xf32>
    %9 = tpu.matmul %6, %8, %cst_5 {dimension_numbers = #tpu.dot_dimension_numbers<[1], [0], [0], [1], [0, 0, 1, 1], [], []>} : vector<32x128xbf16>, vector<128x128xbf16>, vector<32x128xf32> -> vector<32x128xf32>
    %10 = arith.addf %1, %9 : vector<32x128xf32>
    %c0_i32_6 = arith.constant 0 : i32
    %11 = arith.addi %0, %c0_i32_6 : i32
    %c0_7 = arith.constant 0 : index
    %12 = arith.index_cast %11 : i32 to index
    %c1 = arith.constant 1 : index
    %c0_8 = arith.constant 0 : index
    %13 = vector.load %arg2[%c0_7, %12, %c1, %c0_8] : memref<1x10x10x128xbf16, #tpu.memory_space<vmem>>, vector<1x4x8x128xbf16>
    %14 = vector.shape_cast %13 : vector<1x4x8x128xbf16> to vector<4x8x128xbf16>
    %15 = vector.shape_cast %14 : vector<4x8x128xbf16> to vector<32x128xbf16>
    %c1_9 = arith.constant 1 : index
    %c0_10 = arith.constant 0 : index
    %c0_11 = arith.constant 0 : index
    %16 = vector.load %arg3[%c1_9, %c0_10, %c0_11] : memref<9x128x128xbf16, #tpu.memory_space<vmem>>, vector<1x128x128xbf16>
    %17 = vector.shape_cast %16 : vector<1x128x128xbf16> to vector<128x128xbf16>
    %cst_12 = arith.constant dense<0.000000e+00> : vector<32x128xf32>
    %18 = tpu.matmul %15, %17, %cst_12 {dimension_numbers = #tpu.dot_dimension_numbers<[1], [0], [0], [1], [0, 0, 1, 1], [], []>} : vector<32x128xbf16>, vector<128x128xbf16>, vector<32x128xf32> -> vector<32x128xf32>
    %19 = arith.addf %10, %18 : vector<32x128xf32>
    %c0_i32_13 = arith.constant 0 : i32
    %20 = arith.addi %0, %c0_i32_13 : i32
    %c0_14 = arith.constant 0 : index
    %21 = arith.index_cast %20 : i32 to index
    %c2 = arith.constant 2 : index
    %c0_15 = arith.constant 0 : index
    %22 = vector.load %arg2[%c0_14, %21, %c2, %c0_15] : memref<1x10x10x128xbf16, #tpu.memory_space<vmem>>, vector<1x4x8x128xbf16>
    %23 = vector.shape_cast %22 : vector<1x4x8x128xbf16> to vector<4x8x128xbf16>
    %24 = vector.shape_cast %23 : vector<4x8x128xbf16> to vector<32x128xbf16>
    %c2_16 = arith.constant 2 : index
    %c0_17 = arith.constant 0 : index
    %c0_18 = arith.constant 0 : index
    %25 = vector.load %arg3[%c2_16, %c0_17, %c0_18] : memref<9x128x128xbf16, #tpu.memory_space<vmem>>, vector<1x128x128xbf16>
    %26 = vector.shape_cast %25 : vector<1x128x128xbf16> to vector<128x128xbf16>
    %cst_19 = arith.constant dense<0.000000e+00> : vector<32x128xf32>
    %27 = tpu.matmul %24, %26, %cst_19 {dimension_numbers = #tpu.dot_dimension_numbers<[1], [0], [0], [1], [0, 0, 1, 1], [], []>} : vector<32x128xbf16>, vector<128x128xbf16>, vector<32x128xf32> -> vector<32x128xf32>
    %28 = arith.addf %19, %27 : vector<32x128xf32>
    %c1_i32 = arith.constant 1 : i32
    %29 = arith.addi %0, %c1_i32 : i32
    %c0_20 = arith.constant 0 : index
    %30 = arith.index_cast %29 : i32 to index
    %c0_21 = arith.constant 0 : index
    %c0_22 = arith.constant 0 : index
    %31 = vector.load %arg2[%c0_20, %30, %c0_21, %c0_22] : memref<1x10x10x128xbf16, #tpu.memory_space<vmem>>, vector<1x4x8x128xbf16>
    %32 = vector.shape_cast %31 : vector<1x4x8x128xbf16> to vector<4x8x128xbf16>
    %33 = vector.shape_cast %32 : vector<4x8x128xbf16> to vector<32x128xbf16>
    %c3 = arith.constant 3 : index
    %c0_23 = arith.constant 0 : index
    %c0_24 = arith.constant 0 : index
    %34 = vector.load %arg3[%c3, %c0_23, %c0_24] : memref<9x128x128xbf16, #tpu.memory_space<vmem>>, vector<1x128x128xbf16>
    %35 = vector.shape_cast %34 : vector<1x128x128xbf16> to vector<128x128xbf16>
    %cst_25 = arith.constant dense<0.000000e+00> : vector<32x128xf32>
    %36 = tpu.matmul %33, %35, %cst_25 {dimension_numbers = #tpu.dot_dimension_numbers<[1], [0], [0], [1], [0, 0, 1, 1], [], []>} : vector<32x128xbf16>, vector<128x128xbf16>, vector<32x128xf32> -> vector<32x128xf32>
    %37 = arith.addf %28, %36 : vector<32x128xf32>
    %c1_i32_26 = arith.constant 1 : i32
    %38 = arith.addi %0, %c1_i32_26 : i32
    %c0_27 = arith.constant 0 : index
    %39 = arith.index_cast %38 : i32 to index
    %c1_28 = arith.constant 1 : index
    %c0_29 = arith.constant 0 : index
    %40 = vector.load %arg2[%c0_27, %39, %c1_28, %c0_29] : memref<1x10x10x128xbf16, #tpu.memory_space<vmem>>, vector<1x4x8x128xbf16>
    %41 = vector.shape_cast %40 : vector<1x4x8x128xbf16> to vector<4x8x128xbf16>
    %42 = vector.shape_cast %41 : vector<4x8x128xbf16> to vector<32x128xbf16>
    %c4 = arith.constant 4 : index
    %c0_30 = arith.constant 0 : index
    %c0_31 = arith.constant 0 : index
    %43 = vector.load %arg3[%c4, %c0_30, %c0_31] : memref<9x128x128xbf16, #tpu.memory_space<vmem>>, vector<1x128x128xbf16>
    %44 = vector.shape_cast %43 : vector<1x128x128xbf16> to vector<128x128xbf16>
    %cst_32 = arith.constant dense<0.000000e+00> : vector<32x128xf32>
    %45 = tpu.matmul %42, %44, %cst_32 {dimension_numbers = #tpu.dot_dimension_numbers<[1], [0], [0], [1], [0, 0, 1, 1], [], []>} : vector<32x128xbf16>, vector<128x128xbf16>, vector<32x128xf32> -> vector<32x128xf32>
    %46 = arith.addf %37, %45 : vector<32x128xf32>
    %c1_i32_33 = arith.constant 1 : i32
    %47 = arith.addi %0, %c1_i32_33 : i32
    %c0_34 = arith.constant 0 : index
    %48 = arith.index_cast %47 : i32 to index
    %c2_35 = arith.constant 2 : index
    %c0_36 = arith.constant 0 : index
    %49 = vector.load %arg2[%c0_34, %48, %c2_35, %c0_36] : memref<1x10x10x128xbf16, #tpu.memory_space<vmem>>, vector<1x4x8x128xbf16>
    %50 = vector.shape_cast %49 : vector<1x4x8x128xbf16> to vector<4x8x128xbf16>
    %51 = vector.shape_cast %50 : vector<4x8x128xbf16> to vector<32x128xbf16>
    %c5 = arith.constant 5 : index
    %c0_37 = arith.constant 0 : index
    %c0_38 = arith.constant 0 : index
    %52 = vector.load %arg3[%c5, %c0_37, %c0_38] : memref<9x128x128xbf16, #tpu.memory_space<vmem>>, vector<1x128x128xbf16>
    %53 = vector.shape_cast %52 : vector<1x128x128xbf16> to vector<128x128xbf16>
    %cst_39 = arith.constant dense<0.000000e+00> : vector<32x128xf32>
    %54 = tpu.matmul %51, %53, %cst_39 {dimension_numbers = #tpu.dot_dimension_numbers<[1], [0], [0], [1], [0, 0, 1, 1], [], []>} : vector<32x128xbf16>, vector<128x128xbf16>, vector<32x128xf32> -> vector<32x128xf32>
    %55 = arith.addf %46, %54 : vector<32x128xf32>
    %c2_i32 = arith.constant 2 : i32
    %56 = arith.addi %0, %c2_i32 : i32
    %c0_40 = arith.constant 0 : index
    %57 = arith.index_cast %56 : i32 to index
    %c0_41 = arith.constant 0 : index
    %c0_42 = arith.constant 0 : index
    %58 = vector.load %arg2[%c0_40, %57, %c0_41, %c0_42] : memref<1x10x10x128xbf16, #tpu.memory_space<vmem>>, vector<1x4x8x128xbf16>
    %59 = vector.shape_cast %58 : vector<1x4x8x128xbf16> to vector<4x8x128xbf16>
    %60 = vector.shape_cast %59 : vector<4x8x128xbf16> to vector<32x128xbf16>
    %c6 = arith.constant 6 : index
    %c0_43 = arith.constant 0 : index
    %c0_44 = arith.constant 0 : index
    %61 = vector.load %arg3[%c6, %c0_43, %c0_44] : memref<9x128x128xbf16, #tpu.memory_space<vmem>>, vector<1x128x128xbf16>
    %62 = vector.shape_cast %61 : vector<1x128x128xbf16> to vector<128x128xbf16>
    %cst_45 = arith.constant dense<0.000000e+00> : vector<32x128xf32>
    %63 = tpu.matmul %60, %62, %cst_45 {dimension_numbers = #tpu.dot_dimension_numbers<[1], [0], [0], [1], [0, 0, 1, 1], [], []>} : vector<32x128xbf16>, vector<128x128xbf16>, vector<32x128xf32> -> vector<32x128xf32>
    %64 = arith.addf %55, %63 : vector<32x128xf32>
    %c2_i32_46 = arith.constant 2 : i32
    %65 = arith.addi %0, %c2_i32_46 : i32
    %c0_47 = arith.constant 0 : index
    %66 = arith.index_cast %65 : i32 to index
    %c1_48 = arith.constant 1 : index
    %c0_49 = arith.constant 0 : index
    %67 = vector.load %arg2[%c0_47, %66, %c1_48, %c0_49] : memref<1x10x10x128xbf16, #tpu.memory_space<vmem>>, vector<1x4x8x128xbf16>
    %68 = vector.shape_cast %67 : vector<1x4x8x128xbf16> to vector<4x8x128xbf16>
    %69 = vector.shape_cast %68 : vector<4x8x128xbf16> to vector<32x128xbf16>
    %c7 = arith.constant 7 : index
    %c0_50 = arith.constant 0 : index
    %c0_51 = arith.constant 0 : index
    %70 = vector.load %arg3[%c7, %c0_50, %c0_51] : memref<9x128x128xbf16, #tpu.memory_space<vmem>>, vector<1x128x128xbf16>
    %71 = vector.shape_cast %70 : vector<1x128x128xbf16> to vector<128x128xbf16>
    %cst_52 = arith.constant dense<0.000000e+00> : vector<32x128xf32>
    %72 = tpu.matmul %69, %71, %cst_52 {dimension_numbers = #tpu.dot_dimension_numbers<[1], [0], [0], [1], [0, 0, 1, 1], [], []>} : vector<32x128xbf16>, vector<128x128xbf16>, vector<32x128xf32> -> vector<32x128xf32>
    %73 = arith.addf %64, %72 : vector<32x128xf32>
    %c2_i32_53 = arith.constant 2 : i32
    %74 = arith.addi %0, %c2_i32_53 : i32
    %c0_54 = arith.constant 0 : index
    %75 = arith.index_cast %74 : i32 to index
    %c2_55 = arith.constant 2 : index
    %c0_56 = arith.constant 0 : index
    %76 = vector.load %arg2[%c0_54, %75, %c2_55, %c0_56] : memref<1x10x10x128xbf16, #tpu.memory_space<vmem>>, vector<1x4x8x128xbf16>
    %77 = vector.shape_cast %76 : vector<1x4x8x128xbf16> to vector<4x8x128xbf16>
    %78 = vector.shape_cast %77 : vector<4x8x128xbf16> to vector<32x128xbf16>
    %c8 = arith.constant 8 : index
    %c0_57 = arith.constant 0 : index
    %c0_58 = arith.constant 0 : index
    %79 = vector.load %arg3[%c8, %c0_57, %c0_58] : memref<9x128x128xbf16, #tpu.memory_space<vmem>>, vector<1x128x128xbf16>
    %80 = vector.shape_cast %79 : vector<1x128x128xbf16> to vector<128x128xbf16>
    %cst_59 = arith.constant dense<0.000000e+00> : vector<32x128xf32>
    %81 = tpu.matmul %78, %80, %cst_59 {dimension_numbers = #tpu.dot_dimension_numbers<[1], [0], [0], [1], [0, 0, 1, 1], [], []>} : vector<32x128xbf16>, vector<128x128xbf16>, vector<32x128xf32> -> vector<32x128xf32>
    %82 = arith.addf %73, %81 : vector<32x128xf32>
    %c0_60 = arith.constant 0 : index
    %c0_61 = arith.constant 0 : index
    %83 = vector.load %arg4[%c0_60, %c0_61] : memref<32x128xf32, #tpu.memory_space<vmem>>, vector<32x128xf32>
    tpu.vector_store %arg4[%c0_60, %c0_61], %82 {strides = array<i32>} : memref<32x128xf32, #tpu.memory_space<vmem>>, vector<32x128xf32>,
    %cst_62 = arith.constant dense<0.000000e+00> : vector<128xf32>
    %84 = vector.multi_reduction <add>, %82, %cst_62 [0] : vector<32x128xf32> to vector<128xf32>
    %85 = vector.shape_cast %84 : vector<128xf32> to vector<1x128xf32>
    %86 = arith.mulf %82, %82 : vector<32x128xf32>
    %cst_63 = arith.constant dense<0.000000e+00> : vector<128xf32>
    %87 = vector.multi_reduction <add>, %86, %cst_63 [0] : vector<32x128xf32> to vector<128xf32>
    %88 = vector.shape_cast %87 : vector<128xf32> to vector<1x128xf32>
    %89 = tpu.concatenate %85, %88 in 0 : vector<1x128xf32>, vector<1x128xf32> -> vector<2x128xf32>
    %90 = vector.shape_cast %89 : vector<2x128xf32> to vector<1x2x128xf32>
    %c0_64 = arith.constant 0 : index
    %c0_65 = arith.constant 0 : index
    %c0_66 = arith.constant 0 : index
    %91 = vector.load %arg5[%c0_64, %c0_65, %c0_66] : memref<1x2x128xf32, #tpu.memory_space<vmem>>, vector<1x2x128xf32>
    tpu.vector_store %arg5[%c0_64, %c0_65, %c0_66], %90 {strides = array<i32>} : memref<1x2x128xf32, #tpu.memory_space<vmem>>, vector<1x2x128xf32>,
    return
  }
  func.func @transform_0(%arg0: i32, %arg1: i32) -> (i32, i32, i32, i32) {
    %c0_i32 = arith.constant 0 : i32
    %c0_i32_0 = arith.constant 0 : i32
    %c0_i32_1 = arith.constant 0 : i32
    %c0_i32_2 = arith.constant 0 : i32
    return %arg0, %c0_i32, %c0_i32_0, %c0_i32_1 : i32, i32, i32, i32
  }
  func.func @transform_1(%arg0: i32, %arg1: i32) -> (i32, i32, i32) {
    %c0_i32 = arith.constant 0 : i32
    %c0_i32_0 = arith.constant 0 : i32
    %c0_i32_1 = arith.constant 0 : i32
    %c0_i32_2 = arith.constant 0 : i32
    return %c0_i32, %c0_i32_0, %c0_i32_1 : i32, i32, i32
  }
  func.func @transform_2(%arg0: i32, %arg1: i32) -> (i32, i32) {
    %c2_i32 = arith.constant 2 : i32
    %0 = arith.muli %arg0, %c2_i32 : i32
    %1 = arith.addi %0, %arg1 : i32
    %c0_i32 = arith.constant 0 : i32
    %c0_i32_0 = arith.constant 0 : i32
    return %1, %c0_i32 : i32, i32
  }
  func.func @transform_3(%arg0: i32, %arg1: i32) -> (i32, i32, i32) {
    %c2_i32 = arith.constant 2 : i32
    %0 = arith.muli %arg0, %c2_i32 : i32
    %1 = arith.addi %0, %arg1 : i32
    %c0_i32 = arith.constant 0 : i32
    %c0_i32_0 = arith.constant 0 : i32
    %c0_i32_1 = arith.constant 0 : i32
    return %1, %c0_i32, %c0_i32_0 : i32, i32, i32
  }
}

</mosaic_0001>

<llo_original>
// kernel: _lambda_.7
$region0: #{_lambda_.7}
  #allocation0 [shape = 'u32[]', space=smem, size = 0x4, offset = 0x4, fixed_abs, tag = 'smem constant byte address 0x4 - core index']
  #allocation1 [shape = 'u32[144,128]{1,0:T(1,128)}', space=vmem, size = 0x12000, scoped, tag = 'internal scratch']
  %s0 = inlined_call_operand.vmem [shape: bf16[2,8,8,4], index: 0, kind: input, shape index: {}]
  %s1 = inlined_call_operand.vmem [shape: bf16[1,4,128], index: 1, kind: input, shape index: {}]
  %s2 = inlined_call_operand.vmem [shape: f32[128,128], index: 2, kind: output, shape index: {0}]
  %s3 = inlined_call_operand.vmem [shape: f32[4,2,128], index: 3, kind: output, shape index: {1}]
  %4 = xla_tuple %s2, %s3
  %s5 = sld [smem:[#allocation0]]
  $region49: #{_lambda_.7} parent=0
    _
  %s7 = ssub.s32 1, %s5
  %s8 = scalar_select 0, %s7, %s5
  loop: start=0, step=1, limit=6
  $region2: #{_lambda_.7} parent=0 // loop_pre_header
    _
  $region3: #{_lambda_.7} parent=0 // loop_header
    %s10 = sphi 0, %s14
    %p11 = scmp.ge.s32.totalorder %s10, 6
    %s17 = sphi 0, %s29
    %s18 = sphi 0, %s25
    %s19 = sphi 0, %s17
    %s20 = sphi 0, %s18
    %s21 = sphi 0, %s19
    %s22 = sphi 0, %s20
    %s32 = sphi 0, %s34
    %s35 = sphi 0, %s32
    %s36 = sphi 0, %s35
    %s52 = sphi 0, %s36
    %s56 = sphi 0, %s56
    %s58 = sphi 0, %s56
    %s59 = sphi 0, %s58
    %s73 = sphi 0, %s59
    %s83 = sphi 0, %s85
    %s86 = sphi 0, %s83
    %s87 = sphi 0, %s86
    %s103 = sphi 0, %s87
    %s113 = sphi 0, %s115
    %s116 = sphi 0, %s113
    %s117 = sphi 0, %s116
    %s133 = sphi 0, %s117
  $region4: #{_lambda_.7} parent=0 // loop_header_branch
    %13 = sbr.rel (%p11) target = $region8
  $region5: #{_lambda_.7} parent=0 // loop_body
    %s15 = ssub.s32 %s10, 1
    %s16 = ssub.s32 %s10, 2
    %s23 = sadd.s32 1, %s18
    %p24 = scmp.ge.s32.totalorder %s23, 2
    %s25 = scalar_select %p24, 0, %s23
    %s26 = sadd.s32 1, %s17
    %s27 = scalar_select %p24, %s26, %s17
    %p28 = scmp.ge.s32.totalorder %s27, 2
    %s29 = scalar_select %p28, 0, %s27
    %s30 = ssub.s32 %s17, %s29
    %p31 = scmp.eq.s32.totalorder %s30, 0
    %s33 = sadd.s32 %s32, 1
    %s34 = scalar_select %p31, %s32, %s33
    %p37 = pneg %p31
    %p38 = scmp.eq.s32.totalorder %s10, 3
    %p39 = por %p37, %p38
    %p40 = scmp.ne.s32.totalorder %s32, %s35
    %p41 = scmp.eq.s32.totalorder %s10, 0
    %p42 = por %p40, %p41
    %p43 = scmp.ne.s32.totalorder %s32, %s35
    %p44 = scmp.eq.s32.totalorder %s15, 3
    %p45 = por %p43, %p44
    %p46 = scmp.ne.s32.totalorder %s35, %s36
    %p47 = scmp.eq.s32.totalorder %s15, 0
    %p48 = por %p46, %p47
    %p49 = scmp.ne.s32.totalorder %s35, %s36
    %p50 = scmp.eq.s32.totalorder %s16, 3
    %p51 = por %p49, %p50
    %p53 = scmp.ne.s32.totalorder %s36, %s52
    %p54 = scmp.eq.s32.totalorder %s16, 0
    %p55 = por %p53, %p54
    %s57 = sadd.s32 %s56, 1
    %p60 = scmp.eq.s32.totalorder %s10, 3
    %p61 = scmp.ne.s32.totalorder %s56, %s58
    %p62 = scmp.eq.s32.totalorder %s10, 0
    %p63 = por %p61, %p62
    %p64 = scmp.ne.s32.totalorder %s56, %s58
    %p65 = scmp.eq.s32.totalorder %s15, 3
    %p66 = por %p64, %p65
    %p67 = scmp.ne.s32.totalorder %s58, %s59
    %p68 = scmp.eq.s32.totalorder %s15, 0
    %p69 = por %p67, %p68
    %p70 = scmp.ne.s32.totalorder %s58, %s59
    %p71 = scmp.eq.s32.totalorder %s16, 3
    %p72 = por %p70, %p71
    %p74 = scmp.ne.s32.totalorder %s59, %s73
    %p75 = scmp.eq.s32.totalorder %s16, 0
    %p76 = por %p74, %p75
    %s77 = smul.u32 %s17, 2
    %s78 = sadd.s32 %s77, %s18
    %s79 = smul.u32 %s29, 2
    %s80 = sadd.s32 %s79, %s25
    %s81 = ssub.s32 %s78, %s80
    %p82 = scmp.eq.s32.totalorder %s81, 0
    %s84 = sadd.s32 %s83, 1
    %s85 = scalar_select %p82, %s83, %s84
    %p88 = pneg %p82
    %p89 = scmp.eq.s32.totalorder %s10, 3
    %p90 = por %p88, %p89
    %p91 = scmp.ne.s32.totalorder %s83, %s86
    %p92 = scmp.eq.s32.totalorder %s10, 0
    %p93 = por %p91, %p92
    %p94 = scmp.ne.s32.totalorder %s83, %s86
    %p95 = scmp.eq.s32.totalorder %s15, 3
    %p96 = por %p94, %p95
    %p97 = scmp.ne.s32.totalorder %s86, %s87
    %p98 = scmp.eq.s32.totalorder %s15, 0
    %p99 = por %p97, %p98
    %p100 = scmp.ne.s32.totalorder %s86, %s87
    %p101 = scmp.eq.s32.totalorder %s16, 3
    %p102 = por %p100, %p101
    %p104 = scmp.ne.s32.totalorder %s87, %s103
    %p105 = scmp.eq.s32.totalorder %s16, 0
    %p106 = por %p104, %p105
    %s107 = smul.u32 %s17, 2
    %s108 = sadd.s32 %s107, %s18
    %s109 = smul.u32 %s29, 2
    %s110 = sadd.s32 %s109, %s25
    %s111 = ssub.s32 %s108, %s110
    %p112 = scmp.eq.s32.totalorder %s111, 0
    %s114 = sadd.s32 %s113, 1
    %s115 = scalar_select %p112, %s113, %s114
    %p118 = pneg %p112
    %p119 = scmp.eq.s32.totalorder %s10, 3
    %p120 = por %p118, %p119
    %p121 = scmp.ne.s32.totalorder %s113, %s116
    %p122 = scmp.eq.s32.totalorder %s10, 0
    %p123 = por %p121, %p122
    %p124 = scmp.ne.s32.totalorder %s113, %s116
    %p125 = scmp.eq.s32.totalorder %s15, 3
    %p126 = por %p124, %p125
    %p127 = scmp.ne.s32.totalorder %s116, %s117
    %p128 = scmp.eq.s32.totalorder %s15, 0
    %p129 = por %p127, %p128
    %p130 = scmp.ne.s32.totalorder %s116, %s117
    %p131 = scmp.eq.s32.totalorder %s16, 3
    %p132 = por %p130, %p131
    %p134 = scmp.ne.s32.totalorder %s117, %s133
    %p135 = scmp.eq.s32.totalorder %s16, 0
    %p136 = por %p134, %p135
    %p137 = scmp.le.s32.totalorder 1, %s10
    %p138 = scmp.lt.s32.totalorder %s10, 5
    %p139 = pnand %p137, %p138
    %p140 = pneg %p139
    // Predicated region
    $region9: #{_lambda_.7} parent=5 // pred_check
      _
    $region10: #{_lambda_.7} parent=5 // pred_check_branch
      %142 = sbr.rel (%p139) target = $region12
    $region11: #{_lambda_.7} parent=5 // pred_region
      %s143 = ssub.s32 %s10, 1
      // Predicated region
      $region13: #{_lambda_.7} parent=11 // pred_check
        %p144 = pneg %p69
      $region14: #{_lambda_.7} parent=11 // pred_check_branch
        %146 = sbr.rel (%p144) target = $region16
      $region15: #{_lambda_.7} parent=11 // pred_region
        _
      $region16: #{_lambda_.7} parent=11 // pred_fallthru
        _
    $region12: #{_lambda_.7} parent=5 // pred_fallthru
      _
    %p147 = scmp.lt.s32.totalorder %s10, 4
    // Predicated region
    $region17: #{_lambda_.7} parent=5 // pred_check
      %p148 = pneg %p147
    $region18: #{_lambda_.7} parent=5 // pred_check_branch
      %150 = sbr.rel (%p148) target = $region20
    $region19: #{_lambda_.7} parent=5 // pred_region
      // Predicated region
      $region21: #{_lambda_.7} parent=19 // pred_check
        %p151 = pneg %p42
      $region22: #{_lambda_.7} parent=19 // pred_check_branch
        %153 = sbr.rel (%p151) target = $region24
      $region23: #{_lambda_.7} parent=19 // pred_region
        %p154 = scmp.lt.s32.totalorder %s17, 1
        %s155 = scalar_select %p154, %s17, 1
        %s156 = smul.addr %s155, 8
        %s157 = smul.addr %s156, 4
        %s158 = scalar_lea.vmem %s0, %s157
      $region24: #{_lambda_.7} parent=19 // pred_fallthru
        _
    $region20: #{_lambda_.7} parent=5 // pred_fallthru
      _
    %p159 = scmp.le.s32.totalorder 1, %s10
    %p160 = scmp.lt.s32.totalorder %s10, 5
    %p161 = pnand %p159, %p160
    %p162 = pneg %p161
    // Predicated region
    $region25: #{_lambda_.7} parent=5 // pred_check
      _
    $region26: #{_lambda_.7} parent=5 // pred_check_branch
      %164 = sbr.rel (%p161) target = $region28
    $region27: #{_lambda_.7} parent=5 // pred_region
      %s165 = ssub.s32 %s10, 1
      %p166 = scmp.lt.s32.totalorder %s19, 1
      %s167 = scalar_select %p166, %s19, 1
      %s168 = smul.addr %s167, 8
      %s169 = smul.addr %s168, 4
      %s170 = scalar_lea.vmem %s0, %s169
      %p171 = pneg %p48
      %p172 = pneg %p45
      %p173 = pneg %p69
      %p174 = pneg %p66
      %p175 = pneg %p99
      %p176 = pneg %p96
      %s177 = smul.u32 %s19, 2
      %s178 = sadd.s32 %s177, %s20
      %s179 = smul.u32 4, %s178
      %p180 = scmp.lt.s32.totalorder %s179, 15
      %s181 = scalar_select %p180, %s179, 15
      %s182 = smul.addr %s181, 8
      %s183 = scalar_lea.vmem %s2, %s182
      %p184 = pneg %p129
      %p185 = pneg %p126
      %s186 = smul.u32 %s19, 2
      %s187 = sadd.s32 %s186, %s20
      %p188 = scmp.lt.s32.totalorder %s187, 3
      %s189 = scalar_select %p188, %s187, 3
      %s190 = smul.addr %s189, 2
      %s191 = scalar_lea.vmem %s3, %s190
      %p192 = scmp.lt.s32.totalorder %s19, 1
      %s193 = scalar_select %p192, %s19, 1
      %s194 = smul.addr %s193, 8
      %s195 = smul.addr %s194, 4
      %s196 = scalar_lea.vmem %s0, %s195
      %s197 = smul.u32 %s19, 2
      %s198 = sadd.s32 %s197, %s20
      %s199 = smul.u32 4, %s198
      %p200 = scmp.lt.s32.totalorder %s199, 15
      %s201 = scalar_select %p200, %s199, 15
      %s202 = smul.addr %s201, 8
      %s203 = scalar_lea.vmem %s2, %s202
      %s204 = smul.u32 %s19, 2
      %s205 = sadd.s32 %s204, %s20
      %s206 = smul.u32 4, %s205
      %s207 = smul.u32 %s19, 2
      %s208 = sadd.s32 %s207, %s20
      %p209 = scmp.lt.s32.totalorder %s208, 3
      %s210 = scalar_select %p209, %s208, 3
      %s211 = smul.addr %s210, 2
      %s212 = scalar_lea.vmem %s3, %s211
      %s213 = smul.u32 %s19, 2
      %s214 = sadd.s32 %s213, %s20
      %s216 = smul.u32 %s20, 4
      %s217 = smul.addr %s216, 4
      %s218 = scalar_lea.vmem %s196, %s217
      %v219 = vld [vmem:[%s218] sm:$0xf]
      %v220 = vld [vmem:[%s218 + $0x4] sm:$0xf]
      %v221 = vld [vmem:[%s218 + $0x8] sm:$0xf]
      %v222 = vld [vmem:[%s218 + $0xc] sm:$0xf]
      %v223 = vld [vmem:[%s1] sm:$0x3]
      %v228 = vunpack.c.l.b16 %v219
      %v229 = vunpack.c.l.b16 %v220
      %v230 = vunpack.c.l.b16 %v221
      %v231 = vunpack.c.l.b16 %v222
      %v232 = vpack.c.b16 %v229, %v228
      %v233 = vpack.c.b16 %v231, %v230
      %vm234 = vcmask 31744
      %v236 = vsel %vm234, %v232, 0
      %v239 = vsel %vm234, %v233, 0
      %vm241 = vcmask 1041408
      %v243 = vsel %vm241, %v223, 0
      %245 = vmatprep.subr.bf16.mxu0 0
      %246 = vmatpush1.bf16.msra.mxu0 %v243
      %247 = vmatprep.subr.bf16.mxu0 0
      %248 = vmatpush1.bf16.msra.mxu0 0
      %249 = vmatprep.subr.bf16.mxu0 0
      %250 = vmatpush1.bf16.msra.mxu0 0
      %251 = vmatprep.subr.bf16.mxu0 0
      %252 = vmatpush1.bf16.msra.mxu0 0
      %253 = vmatprep.subr.bf16.mxu0 0
      %254 = vmatpush1.bf16.msra.mxu0 0
      %255 = vmatprep.subr.bf16.mxu0 0
      %256 = vmatpush1.bf16.msra.mxu0 0
      %257 = vmatprep.subr.bf16.mxu0 0
      %258 = vmatpush1.bf16.msra.mxu0 0
      %259 = vmatprep.subr.bf16.mxu0 0
      %260 = vmatpush1.bf16.msra.mxu0 0
      %261 = vmatprep.subr.bf16.mxu0 0
      %262 = vmatpush1.bf16.msra.mxu0 0
      %263 = vmatprep.subr.bf16.mxu0 0
      %264 = vmatpush1.bf16.msra.mxu0 0
      %265 = vmatprep.subr.bf16.mxu0 0
      %266 = vmatpush1.bf16.msra.mxu0 0
      %267 = vmatprep.subr.bf16.mxu0 0
      %268 = vmatpush1.bf16.msra.mxu0 0
      %269 = vmatprep.subr.bf16.mxu0 0
      %270 = vmatpush1.bf16.msra.mxu0 0
      %271 = vmatprep.subr.bf16.mxu0 0
      %272 = vmatpush1.bf16.msra.mxu0 0
      %273 = vmatprep.subr.bf16.mxu0 0
      %274 = vmatpush1.bf16.msra.mxu0 0
      %275 = vmatprep.subr.bf16.mxu0 0
      %276 = vmatpush1.bf16.msra.mxu0 0
      %277 = vmatprep.mubr.bf16.mxu0 0
      %278 = vmatmul.mubr.bf16.gmra.mrb[0].mxu0 %v236
      %v279 = vpop.f32.mrb[0].mxu0
      %v280 = vadd.f32 0.0, %v279
      %v281 = vpop.f32.mrb[0].mxu0
      %v282 = vpop.f32.mrb[0].mxu0
      %v283 = vadd.f32 0.0, %v282
      %v284 = vpop.f32.mrb[0].mxu0
      %285 = vmatprep.mubr.bf16.mxu0 0
      %286 = vmatmul.mubr.bf16.gmra.mrb[0].mxu0 %v239
      %v287 = vpop.f32.mrb[0].mxu0
      %v288 = vadd.f32 0.0, %v287
      %v289 = vpop.f32.mrb[0].mxu0
      %v290 = vpop.f32.mrb[0].mxu0
      %v291 = vadd.f32 0.0, %v290
      %v292 = vpop.f32.mrb[0].mxu0
      %293 = vdwg.mxu0
      %294 = vst [vmem:[%s203] sm:$0xff] %v280
      %295 = vst [vmem:[%s203 + $0x8] sm:$0xff] %v283
      %296 = vst [vmem:[%s203 + $0x10] sm:$0xff] %v288
      %297 = vst [vmem:[%s203 + $0x18] sm:$0xff] %v291
      %v298 = vadd.f32 %v280, %v283
      %v299 = vadd.f32 %v298, %v288
      %v300 = vadd.f32 %v299, %v291
      %v301 = vrot.slane %v300, 4
      %v302 = vadd.f32 %v300, %v301
      %v303 = vrot.slane %v302, 2
      %v304 = vadd.f32 %v302, %v303
      %v305 = vrot.slane %v304, 1
      %v306 = vadd.f32 %v304, %v305
      %v307 = vmul.f32 %v280, %v280
      %v308 = vmul.f32 %v283, %v283
      %v309 = vmul.f32 %v288, %v288
      %v310 = vmul.f32 %v291, %v291
      %v311 = vadd.f32 %v307, %v308
      %v312 = vadd.f32 %v311, %v309
      %v313 = vadd.f32 %v312, %v310
      %v314 = vrot.slane %v313, 4
      %v315 = vadd.f32 %v313, %v314
      %v316 = vrot.slane %v315, 2
      %v317 = vadd.f32 %v315, %v316
      %v318 = vrot.slane %v317, 1
      %v319 = vadd.f32 %v317, %v318
      %vm320 = vcmask 1040384
      %v321 = vsel %vm320, %v306, %v319
      %322 = vst [vmem:[%s212] sm:$0x3] %v321
      %s323 = smul.u32 %s19, 2
      %s324 = sadd.s32 %s323, %s20
      %s325 = smul.u32 4, %s324
      %p326 = scmp.lt.s32.totalorder %s325, 15
      %s327 = scalar_select %p326, %s325, 15
      %s328 = smul.addr %s327, 8
      %s329 = scalar_lea.vmem %s2, %s328
      %s330 = smul.u32 %s19, 2
      %s331 = sadd.s32 %s330, %s20
      %p332 = scmp.lt.s32.totalorder %s331, 3
      %s333 = scalar_select %p332, %s331, 3
      %s334 = smul.addr %s333, 2
      %s335 = scalar_lea.vmem %s3, %s334
      // Predicated region
      $region29: #{_lambda_.7} parent=27 // pred_check
        %p336 = pneg %p96
      $region30: #{_lambda_.7} parent=27 // pred_check_branch
        %338 = sbr.rel (%p336) target = $region32
      $region31: #{_lambda_.7} parent=27 // pred_region
        %s339 = smul.u32 %s19, 2
        %s340 = sadd.s32 %s339, %s20
        %s341 = smul.u32 4, %s340
      $region32: #{_lambda_.7} parent=27 // pred_fallthru
        _
      // Predicated region
      $region33: #{_lambda_.7} parent=27 // pred_check
        %p342 = pneg %p126
      $region34: #{_lambda_.7} parent=27 // pred_check_branch
        %344 = sbr.rel (%p342) target = $region36
      $region35: #{_lambda_.7} parent=27 // pred_region
        %s345 = smul.u32 %s19, 2
        %s346 = sadd.s32 %s345, %s20
      $region36: #{_lambda_.7} parent=27 // pred_fallthru
        _
    $region28: #{_lambda_.7} parent=5 // pred_fallthru
      _
    %p347 = scmp.le.s32.totalorder 2, %s10
    // Predicated region
    $region37: #{_lambda_.7} parent=5 // pred_check
      %p348 = pneg %p347
    $region38: #{_lambda_.7} parent=5 // pred_check_branch
      %350 = sbr.rel (%p348) target = $region40
    $region39: #{_lambda_.7} parent=5 // pred_region
      %s351 = ssub.s32 %s10, 2
      // Predicated region
      $region41: #{_lambda_.7} parent=39 // pred_check
        %p352 = pneg %p102
      $region42: #{_lambda_.7} parent=39 // pred_check_branch
        %354 = sbr.rel (%p352) target = $region44
      $region43: #{_lambda_.7} parent=39 // pred_region
        %s355 = smul.u32 %s21, 2
        %s356 = sadd.s32 %s355, %s22
        %s357 = smul.u32 4, %s356
        %p358 = scmp.lt.s32.totalorder %s357, 15
        %s359 = scalar_select %p358, %s357, 15
        %s360 = smul.addr %s359, 8
        %s361 = scalar_lea.vmem %s2, %s360
      $region44: #{_lambda_.7} parent=39 // pred_fallthru
        _
      // Predicated region
      $region45: #{_lambda_.7} parent=39 // pred_check
        %p362 = pneg %p132
      $region46: #{_lambda_.7} parent=39 // pred_check_branch
        %364 = sbr.rel (%p362) target = $region48
      $region47: #{_lambda_.7} parent=39 // pred_region
        %s365 = smul.u32 %s21, 2
        %s366 = sadd.s32 %s365, %s22
        %p367 = scmp.lt.s32.totalorder %s366, 3
        %s368 = scalar_select %p367, %s366, 3
        %s369 = smul.addr %s368, 2
        %s370 = scalar_lea.vmem %s3, %s369
      $region48: #{_lambda_.7} parent=39 // pred_fallthru
        _
    $region40: #{_lambda_.7} parent=5 // pred_fallthru
      _
  $region6: #{_lambda_.7} parent=0 // loop_footer
    %s14 = sadd.s32 1, %s10
  $region7: #{_lambda_.7} parent=0 // loop_footer_branch
    %9 = sbr.rel target = $region3
  $region8: #{_lambda_.7} parent=0 // loop_exit
    _

// kernel: _lambda_.5
$region0: #{_lambda_.5}
  #allocation0 [shape = 'u32[]', space=smem, size = 0x4, offset = 0x4, fixed_abs, tag = 'smem constant byte address 0x4 - core index']
  #allocation1 [shape = 'u32[144,128]{1,0:T(1,128)}', space=vmem, size = 0x12000, scoped, tag = 'internal scratch']
  %s0 = inlined_call_operand.vmem [shape: bf16[8,9,9,4], index: 0, kind: input, shape index: {}]
  %s1 = inlined_call_operand.vmem [shape: bf16[9,4,128], index: 1, kind: input, shape index: {}]
  %s2 = inlined_call_operand.vmem [shape: f32[128,128], index: 2, kind: output, shape index: {0}]
  %s3 = inlined_call_operand.vmem [shape: f32[4,2,128], index: 3, kind: output, shape index: {1}]
  %4 = xla_tuple %s2, %s3
  %s5 = sld [smem:[#allocation0]]
  $region49: #{_lambda_.5} parent=0
    _
  %s7 = ssub.s32 1, %s5
  %s8 = scalar_select 0, %s7, %s5
  loop: start=0, step=1, limit=6
  $region2: #{_lambda_.5} parent=0 // loop_pre_header
    _
  $region3: #{_lambda_.5} parent=0 // loop_header
    %s10 = sphi 0, %s14
    %p11 = scmp.ge.s32.totalorder %s10, 6
    %s17 = sphi 0, %s29
    %s18 = sphi 0, %s25
    %s19 = sphi 0, %s17
    %s20 = sphi 0, %s18
    %s21 = sphi 0, %s19
    %s22 = sphi 0, %s20
    %s32 = sphi 0, %s34
    %s35 = sphi 0, %s32
    %s36 = sphi 0, %s35
    %s52 = sphi 0, %s36
    %s56 = sphi 0, %s56
    %s58 = sphi 0, %s56
    %s59 = sphi 0, %s58
    %s73 = sphi 0, %s59
    %s83 = sphi 0, %s85
    %s86 = sphi 0, %s83
    %s87 = sphi 0, %s86
    %s103 = sphi 0, %s87
    %s113 = sphi 0, %s115
    %s116 = sphi 0, %s113
    %s117 = sphi 0, %s116
    %s133 = sphi 0, %s117
  $region4: #{_lambda_.5} parent=0 // loop_header_branch
    %13 = sbr.rel (%p11) target = $region8
  $region5: #{_lambda_.5} parent=0 // loop_body
    %s15 = ssub.s32 %s10, 1
    %s16 = ssub.s32 %s10, 2
    %s23 = sadd.s32 1, %s18
    %p24 = scmp.ge.s32.totalorder %s23, 2
    %s25 = scalar_select %p24, 0, %s23
    %s26 = sadd.s32 1, %s17
    %s27 = scalar_select %p24, %s26, %s17
    %p28 = scmp.ge.s32.totalorder %s27, 2
    %s29 = scalar_select %p28, 0, %s27
    %s30 = ssub.s32 %s17, %s29
    %p31 = scmp.eq.s32.totalorder %s30, 0
    %s33 = sadd.s32 %s32, 1
    %s34 = scalar_select %p31, %s32, %s33
    %p37 = pneg %p31
    %p38 = scmp.eq.s32.totalorder %s10, 3
    %p39 = por %p37, %p38
    %p40 = scmp.ne.s32.totalorder %s32, %s35
    %p41 = scmp.eq.s32.totalorder %s10, 0
    %p42 = por %p40, %p41
    %p43 = scmp.ne.s32.totalorder %s32, %s35
    %p44 = scmp.eq.s32.totalorder %s15, 3
    %p45 = por %p43, %p44
    %p46 = scmp.ne.s32.totalorder %s35, %s36
    %p47 = scmp.eq.s32.totalorder %s15, 0
    %p48 = por %p46, %p47
    %p49 = scmp.ne.s32.totalorder %s35, %s36
    %p50 = scmp.eq.s32.totalorder %s16, 3
    %p51 = por %p49, %p50
    %p53 = scmp.ne.s32.totalorder %s36, %s52
    %p54 = scmp.eq.s32.totalorder %s16, 0
    %p55 = por %p53, %p54
    %s57 = sadd.s32 %s56, 1
    %p60 = scmp.eq.s32.totalorder %s10, 3
    %p61 = scmp.ne.s32.totalorder %s56, %s58
    %p62 = scmp.eq.s32.totalorder %s10, 0
    %p63 = por %p61, %p62
    %p64 = scmp.ne.s32.totalorder %s56, %s58
    %p65 = scmp.eq.s32.totalorder %s15, 3
    %p66 = por %p64, %p65
    %p67 = scmp.ne.s32.totalorder %s58, %s59
    %p68 = scmp.eq.s32.totalorder %s15, 0
    %p69 = por %p67, %p68
    %p70 = scmp.ne.s32.totalorder %s58, %s59
    %p71 = scmp.eq.s32.totalorder %s16, 3
    %p72 = por %p70, %p71
    %p74 = scmp.ne.s32.totalorder %s59, %s73
    %p75 = scmp.eq.s32.totalorder %s16, 0
    %p76 = por %p74, %p75
    %s77 = smul.u32 %s17, 2
    %s78 = sadd.s32 %s77, %s18
    %s79 = smul.u32 %s29, 2
    %s80 = sadd.s32 %s79, %s25
    %s81 = ssub.s32 %s78, %s80
    %p82 = scmp.eq.s32.totalorder %s81, 0
    %s84 = sadd.s32 %s83, 1
    %s85 = scalar_select %p82, %s83, %s84
    %p88 = pneg %p82
    %p89 = scmp.eq.s32.totalorder %s10, 3
    %p90 = por %p88, %p89
    %p91 = scmp.ne.s32.totalorder %s83, %s86
    %p92 = scmp.eq.s32.totalorder %s10, 0
    %p93 = por %p91, %p92
    %p94 = scmp.ne.s32.totalorder %s83, %s86
    %p95 = scmp.eq.s32.totalorder %s15, 3
    %p96 = por %p94, %p95
    %p97 = scmp.ne.s32.totalorder %s86, %s87
    %p98 = scmp.eq.s32.totalorder %s15, 0
    %p99 = por %p97, %p98
    %p100 = scmp.ne.s32.totalorder %s86, %s87
    %p101 = scmp.eq.s32.totalorder %s16, 3
    %p102 = por %p100, %p101
    %p104 = scmp.ne.s32.totalorder %s87, %s103
    %p105 = scmp.eq.s32.totalorder %s16, 0
    %p106 = por %p104, %p105
    %s107 = smul.u32 %s17, 2
    %s108 = sadd.s32 %s107, %s18
    %s109 = smul.u32 %s29, 2
    %s110 = sadd.s32 %s109, %s25
    %s111 = ssub.s32 %s108, %s110
    %p112 = scmp.eq.s32.totalorder %s111, 0
    %s114 = sadd.s32 %s113, 1
    %s115 = scalar_select %p112, %s113, %s114
    %p118 = pneg %p112
    %p119 = scmp.eq.s32.totalorder %s10, 3
    %p120 = por %p118, %p119
    %p121 = scmp.ne.s32.totalorder %s113, %s116
    %p122 = scmp.eq.s32.totalorder %s10, 0
    %p123 = por %p121, %p122
    %p124 = scmp.ne.s32.totalorder %s113, %s116
    %p125 = scmp.eq.s32.totalorder %s15, 3
    %p126 = por %p124, %p125
    %p127 = scmp.ne.s32.totalorder %s116, %s117
    %p128 = scmp.eq.s32.totalorder %s15, 0
    %p129 = por %p127, %p128
    %p130 = scmp.ne.s32.totalorder %s116, %s117
    %p131 = scmp.eq.s32.totalorder %s16, 3
    %p132 = por %p130, %p131
    %p134 = scmp.ne.s32.totalorder %s117, %s133
    %p135 = scmp.eq.s32.totalorder %s16, 0
    %p136 = por %p134, %p135
    %p137 = scmp.le.s32.totalorder 1, %s10
    %p138 = scmp.lt.s32.totalorder %s10, 5
    %p139 = pnand %p137, %p138
    %p140 = pneg %p139
    // Predicated region
    $region9: #{_lambda_.5} parent=5 // pred_check
      _
    $region10: #{_lambda_.5} parent=5 // pred_check_branch
      %142 = sbr.rel (%p139) target = $region12
    $region11: #{_lambda_.5} parent=5 // pred_region
      %s143 = ssub.s32 %s10, 1
      // Predicated region
      $region13: #{_lambda_.5} parent=11 // pred_check
        %p144 = pneg %p69
      $region14: #{_lambda_.5} parent=11 // pred_check_branch
        %146 = sbr.rel (%p144) target = $region16
      $region15: #{_lambda_.5} parent=11 // pred_region
        _
      $region16: #{_lambda_.5} parent=11 // pred_fallthru
        _
    $region12: #{_lambda_.5} parent=5 // pred_fallthru
      _
    %p147 = scmp.lt.s32.totalorder %s10, 4
    // Predicated region
    $region17: #{_lambda_.5} parent=5 // pred_check
      %p148 = pneg %p147
    $region18: #{_lambda_.5} parent=5 // pred_check_branch
      %150 = sbr.rel (%p148) target = $region20
    $region19: #{_lambda_.5} parent=5 // pred_region
      // Predicated region
      $region21: #{_lambda_.5} parent=19 // pred_check
        %p151 = pneg %p42
      $region22: #{_lambda_.5} parent=19 // pred_check_branch
        %153 = sbr.rel (%p151) target = $region24
      $region23: #{_lambda_.5} parent=19 // pred_region
        %s154 = smul.u32 4, %s17
        %p155 = scmp.lt.s32.totalorder %s154, 7
        %s156 = scalar_select %p155, %s154, 7
        %s157 = smul.addr %s156, 18
        %s158 = smul.addr %s157, 4
        %s159 = scalar_lea.vmem %s0, %s158
        %s160 = smul.u32 4, %s17
      $region24: #{_lambda_.5} parent=19 // pred_fallthru
        _
    $region20: #{_lambda_.5} parent=5 // pred_fallthru
      _
    %p161 = scmp.le.s32.totalorder 1, %s10
    %p162 = scmp.lt.s32.totalorder %s10, 5
    %p163 = pnand %p161, %p162
    %p164 = pneg %p163
    // Predicated region
    $region25: #{_lambda_.5} parent=5 // pred_check
      _
    $region26: #{_lambda_.5} parent=5 // pred_check_branch
      %166 = sbr.rel (%p163) target = $region28
    $region27: #{_lambda_.5} parent=5 // pred_region
      %s167 = ssub.s32 %s10, 1
      %s168 = smul.u32 4, %s19
      %p169 = scmp.lt.s32.totalorder %s168, 7
      %s170 = scalar_select %p169, %s168, 7
      %s171 = smul.addr %s170, 18
      %s172 = smul.addr %s171, 4
      %s173 = scalar_lea.vmem %s0, %s172
      %p174 = pneg %p48
      %p175 = pneg %p45
      %p176 = pneg %p69
      %p177 = pneg %p66
      %p178 = pneg %p99
      %p179 = pneg %p96
      %s180 = smul.u32 %s19, 2
      %s181 = sadd.s32 %s180, %s20
      %s182 = smul.u32 4, %s181
      %p183 = scmp.lt.s32.totalorder %s182, 15
      %s184 = scalar_select %p183, %s182, 15
      %s185 = smul.addr %s184, 8
      %s186 = scalar_lea.vmem %s2, %s185
      %p187 = pneg %p129
      %p188 = pneg %p126
      %s189 = smul.u32 %s19, 2
      %s190 = sadd.s32 %s189, %s20
      %p191 = scmp.lt.s32.totalorder %s190, 3
      %s192 = scalar_select %p191, %s190, 3
      %s193 = smul.addr %s192, 2
      %s194 = scalar_lea.vmem %s3, %s193
      %s195 = smul.u32 4, %s19
      %p196 = scmp.lt.s32.totalorder %s195, 7
      %s197 = scalar_select %p196, %s195, 7
      %s198 = smul.addr %s197, 18
      %s199 = smul.addr %s198, 4
      %s200 = scalar_lea.vmem %s0, %s199
      %s201 = smul.u32 4, %s19
      %s202 = smul.u32 %s19, 2
      %s203 = sadd.s32 %s202, %s20
      %s204 = smul.u32 4, %s203
      %p205 = scmp.lt.s32.totalorder %s204, 15
      %s206 = scalar_select %p205, %s204, 15
      %s207 = smul.addr %s206, 8
      %s208 = scalar_lea.vmem %s2, %s207
      %s209 = smul.u32 %s19, 2
      %s210 = sadd.s32 %s209, %s20
      %s211 = smul.u32 4, %s210
      %s212 = smul.u32 %s19, 2
      %s213 = sadd.s32 %s212, %s20
      %p214 = scmp.lt.s32.totalorder %s213, 3
      %s215 = scalar_select %p214, %s213, 3
      %s216 = smul.addr %s215, 2
      %s217 = scalar_lea.vmem %s3, %s216
      %s218 = smul.u32 %s19, 2
      %s219 = sadd.s32 %s218, %s20
      %s221 = smul.u32 %s20, 4
      %s222 = smul.u32 %s221, 2
      %s223 = smul.addr %s222, 4
      %s224 = scalar_lea.vmem %s200, %s223
      %v225 = vld [vmem:[%s224] sm:$0xf]
      %v226 = vld [vmem:[%s224 + $0x8] sm:$0xf]
      %v227 = vld [vmem:[%s224 + $0x10] sm:$0xf]
      %v228 = vld [vmem:[%s224 + $0x18] sm:$0xf]
      %v229 = vld [vmem:[%s1] sm:$0x3]
      %s230 = sadd.s32 %s222, 18
      %s231 = smul.addr %s230, 4
      %s232 = scalar_lea.vmem %s200, %s231
      %v233 = vld [vmem:[%s232] sm:$0xf]
      %v234 = vld [vmem:[%s232 + $0x8] sm:$0xf]
      %v235 = vld [vmem:[%s232 + $0x10] sm:$0xf]
      %v236 = vld [vmem:[%s232 + $0x18] sm:$0xf]
      %s237 = scalar_lea.vmem %s1, 2
      %v238 = vld [vmem:[%s237] sm:$0x3]
      %v243 = vunpack.c.l.b16 %v233
      %v244 = vunpack.c.l.b16 %v234
      %v245 = vunpack.c.l.b16 %v235
      %v246 = vunpack.c.l.b16 %v236
      %v247 = vpack.c.b16 %v244, %v243
      %v248 = vpack.c.b16 %v246, %v245
      %vm249 = vcmask 31744
      %v251 = vsel %vm249, %v247, 0
      %v254 = vsel %vm249, %v248, 0
      %vm256 = vcmask 1041408
      %v258 = vsel %vm256, %v238, 0
      %260 = vmatprep.subr.bf16.mxu0 0
      %261 = vmatpush1.bf16.msra.mxu0 %v258
      %262 = vmatprep.subr.bf16.mxu0 0
      %263 = vmatpush1.bf16.msra.mxu0 0
      %264 = vmatprep.subr.bf16.mxu0 0
      %265 = vmatpush1.bf16.msra.mxu0 0
      %266 = vmatprep.subr.bf16.mxu0 0
      %267 = vmatpush1.bf16.msra.mxu0 0
      %268 = vmatprep.subr.bf16.mxu0 0
      %269 = vmatpush1.bf16.msra.mxu0 0
      %270 = vmatprep.subr.bf16.mxu0 0
      %271 = vmatpush1.bf16.msra.mxu0 0
      %272 = vmatprep.subr.bf16.mxu0 0
      %273 = vmatpush1.bf16.msra.mxu0 0
      %274 = vmatprep.subr.bf16.mxu0 0
      %275 = vmatpush1.bf16.msra.mxu0 0
      %276 = vmatprep.subr.bf16.mxu0 0
      %277 = vmatpush1.bf16.msra.mxu0 0
      %278 = vmatprep.subr.bf16.mxu0 0
      %279 = vmatpush1.bf16.msra.mxu0 0
      %280 = vmatprep.subr.bf16.mxu0 0
      %281 = vmatpush1.bf16.msra.mxu0 0
      %282 = vmatprep.subr.bf16.mxu0 0
      %283 = vmatpush1.bf16.msra.mxu0 0
      %284 = vmatprep.subr.bf16.mxu0 0
      %285 = vmatpush1.bf16.msra.mxu0 0
      %286 = vmatprep.subr.bf16.mxu0 0
      %287 = vmatpush1.bf16.msra.mxu0 0
      %288 = vmatprep.subr.bf16.mxu0 0
      %289 = vmatpush1.bf16.msra.mxu0 0
      %290 = vmatprep.subr.bf16.mxu0 0
      %291 = vmatpush1.bf16.msra.mxu0 0
      %292 = vmatprep.mubr.bf16.mxu0 0
      %293 = vmatmul.mubr.bf16.gmra.mrb[0].mxu0 %v251
      %v294 = vpop.f32.mrb[0].mxu0
      %v295 = vadd.f32 0.0, %v294
      %v296 = vpop.f32.mrb[0].mxu0
      %v297 = vpop.f32.mrb[0].mxu0
      %v298 = vadd.f32 0.0, %v297
      %v299 = vpop.f32.mrb[0].mxu0
      %300 = vmatprep.mubr.bf16.mxu0 0
      %301 = vmatmul.mubr.bf16.gmra.mrb[0].mxu0 %v254
      %v302 = vpop.f32.mrb[0].mxu0
      %v303 = vadd.f32 0.0, %v302
      %v304 = vpop.f32.mrb[0].mxu0
      %v305 = vpop.f32.mrb[0].mxu0
      %v306 = vadd.f32 0.0, %v305
      %v307 = vpop.f32.mrb[0].mxu0
      %308 = vdwg.mxu0
      %v313 = vunpack.c.l.b16 %v225
      %v314 = vunpack.c.l.b16 %v226
      %v315 = vunpack.c.l.b16 %v227
      %v316 = vunpack.c.l.b16 %v228
      %v317 = vpack.c.b16 %v314, %v313
      %v318 = vpack.c.b16 %v316, %v315
      %v320 = vsel %vm249, %v317, 0
      %v323 = vsel %vm249, %v318, 0
      %v326 = vsel %vm256, %v229, 0
      %328 = vmatprep.subr.bf16.mxu0 0
      %329 = vmatpush1.bf16.msra.mxu0 %v326
      %330 = vmatprep.subr.bf16.mxu0 0
      %331 = vmatpush1.bf16.msra.mxu0 0
      %332 = vmatprep.subr.bf16.mxu0 0
      %333 = vmatpush1.bf16.msra.mxu0 0
      %334 = vmatprep.subr.bf16.mxu0 0
      %335 = vmatpush1.bf16.msra.mxu0 0
      %336 = vmatprep.subr.bf16.mxu0 0
      %337 = vmatpush1.bf16.msra.mxu0 0
      %338 = vmatprep.subr.bf16.mxu0 0
      %339 = vmatpush1.bf16.msra.mxu0 0
      %340 = vmatprep.subr.bf16.mxu0 0
      %341 = vmatpush1.bf16.msra.mxu0 0
      %342 = vmatprep.subr.bf16.mxu0 0
      %343 = vmatpush1.bf16.msra.mxu0 0
      %344 = vmatprep.subr.bf16.mxu0 0
      %345 = vmatpush1.bf16.msra.mxu0 0
      %346 = vmatprep.subr.bf16.mxu0 0
      %347 = vmatpush1.bf16.msra.mxu0 0
      %348 = vmatprep.subr.bf16.mxu0 0
      %349 = vmatpush1.bf16.msra.mxu0 0
      %350 = vmatprep.subr.bf16.mxu0 0
      %351 = vmatpush1.bf16.msra.mxu0 0
      %352 = vmatprep.subr.bf16.mxu0 0
      %353 = vmatpush1.bf16.msra.mxu0 0
      %354 = vmatprep.subr.bf16.mxu0 0
      %355 = vmatpush1.bf16.msra.mxu0 0
      %356 = vmatprep.subr.bf16.mxu0 0
      %357 = vmatpush1.bf16.msra.mxu0 0
      %358 = vmatprep.subr.bf16.mxu0 0
      %359 = vmatpush1.bf16.msra.mxu0 0
      %360 = vmatprep.mubr.bf16.mxu0 0
      %361 = vmatmul.mubr.bf16.gmra.mrb[0].mxu0 %v320
      %v362 = vpop.f32.mrb[0].mxu0
      %v363 = vadd.f32 %v295, %v362
      %v364 = vpop.f32.mrb[0].mxu0
      %v365 = vpop.f32.mrb[0].mxu0
      %v366 = vadd.f32 %v298, %v365
      %v367 = vpop.f32.mrb[0].mxu0
      %368 = vmatprep.mubr.bf16.mxu0 0
      %369 = vmatmul.mubr.bf16.gmra.mrb[0].mxu0 %v323
      %v370 = vpop.f32.mrb[0].mxu0
      %v371 = vadd.f32 %v303, %v370
      %v372 = vpop.f32.mrb[0].mxu0
      %v373 = vpop.f32.mrb[0].mxu0
      %v374 = vadd.f32 %v306, %v373
      %v375 = vpop.f32.mrb[0].mxu0
      %376 = vdwg.mxu0
      %v377 = vld [vmem:[%s224] sm:$0xf]
      %v378 = vld [vmem:[%s224 + $0x4] sm:$0x1]
      %v379 = vld [vmem:[%s224 + $0x8] sm:$0xf]
      %v380 = vld [vmem:[%s224 + $0xc] sm:$0x1]
      %v381 = vld [vmem:[%s224 + $0x10] sm:$0xf]
      %v382 = vld [vmem:[%s224 + $0x14] sm:$0x1]
      %v383 = vld [vmem:[%s224 + $0x18] sm:$0xf]
      %v384 = vld [vmem:[%s224 + $0x1c] sm:$0x1]
      %vm385 = vsmask.f32 3328
      %vm386 = vsmask.f32 7440
      %vm387 = vmor %vm385, %vm386
      %v389 = vshrl.u32 %v377, 16
      %v391 = vrot.slane %v389, 4
      %v392 = vshll.u32 %v377, 16
      %v394 = vrot.slane %v392, 5
      %v395 = vor.u32 %v391, %v394
      %v396 = vrot.slane %v395, 4
      %v398 = vshll.u32 %v378, 16
      %v400 = vrot.slane %v398, 5
      %v401 = vsel %vm387, %v396, %v400
      %v403 = vshrl.u32 %v379, 16
      %v405 = vrot.slane %v403, 4
      %v406 = vshll.u32 %v379, 16
      %v408 = vrot.slane %v406, 5
      %v409 = vor.u32 %v405, %v408
      %v410 = vrot.slane %v409, 4
      %v412 = vshll.u32 %v380, 16
      %v414 = vrot.slane %v412, 5
      %v415 = vsel %vm387, %v410, %v414
      %v417 = vshrl.u32 %v381, 16
      %v419 = vrot.slane %v417, 4
      %v420 = vshll.u32 %v381, 16
      %v422 = vrot.slane %v420, 5
      %v423 = vor.u32 %v419, %v422
      %v424 = vrot.slane %v423, 4
      %v426 = vshll.u32 %v382, 16
      %v428 = vrot.slane %v426, 5
      %v429 = vsel %vm387, %v424, %v428
      %v431 = vshrl.u32 %v383, 16
      %v433 = vrot.slane %v431, 4
      %v434 = vshll.u32 %v383, 16
      %v436 = vrot.slane %v434, 5
      %v437 = vor.u32 %v433, %v436
      %v438 = vrot.slane %v437, 4
      %v440 = vshll.u32 %v384, 16
      %v442 = vrot.slane %v440, 5
      %v443 = vsel %vm387, %v438, %v442
      %s444 = scalar_lea.vmem %s1, 4
      %v445 = vld [vmem:[%s444] sm:$0x3]
      %v446 = vunpack.c.l.b16 %v401
      %v447 = vunpack.c.l.b16 %v415
      %v448 = vunpack.c.l.b16 %v429
      %v449 = vunpack.c.l.b16 %v443
      %v450 = vpack.c.b16 %v447, %v446
      %v451 = vpack.c.b16 %v449, %v448
      %v453 = vsel %vm249, %v450, 0
      %v456 = vsel %vm249, %v451, 0
      %v459 = vsel %vm256, %v445, 0
      %461 = vmatprep.subr.bf16.mxu0 0
      %462 = vmatpush1.bf16.msra.mxu0 %v459
      %463 = vmatprep.subr.bf16.mxu0 0
      %464 = vmatpush1.bf16.msra.mxu0 0
      %465 = vmatprep.subr.bf16.mxu0 0
      %466 = vmatpush1.bf16.msra.mxu0 0
      %467 = vmatprep.subr.bf16.mxu0 0
      %468 = vmatpush1.bf16.msra.mxu0 0
      %469 = vmatprep.subr.bf16.mxu0 0
      %470 = vmatpush1.bf16.msra.mxu0 0
      %471 = vmatprep.subr.bf16.mxu0 0
      %472 = vmatpush1.bf16.msra.mxu0 0
      %473 = vmatprep.subr.bf16.mxu0 0
      %474 = vmatpush1.bf16.msra.mxu0 0
      %475 = vmatprep.subr.bf16.mxu0 0
      %476 = vmatpush1.bf16.msra.mxu0 0
      %477 = vmatprep.subr.bf16.mxu0 0
      %478 = vmatpush1.bf16.msra.mxu0 0
      %479 = vmatprep.subr.bf16.mxu0 0
      %480 = vmatpush1.bf16.msra.mxu0 0
      %481 = vmatprep.subr.bf16.mxu0 0
      %482 = vmatpush1.bf16.msra.mxu0 0
      %483 = vmatprep.subr.bf16.mxu0 0
      %484 = vmatpush1.bf16.msra.mxu0 0
      %485 = vmatprep.subr.bf16.mxu0 0
      %486 = vmatpush1.bf16.msra.mxu0 0
      %487 = vmatprep.subr.bf16.mxu0 0
      %488 = vmatpush1.bf16.msra.mxu0 0
      %489 = vmatprep.subr.bf16.mxu0 0
      %490 = vmatpush1.bf16.msra.mxu0 0
      %491 = vmatprep.subr.bf16.mxu0 0
      %492 = vmatpush1.bf16.msra.mxu0 0
      %493 = vmatprep.mubr.bf16.mxu0 0
      %494 = vmatmul.mubr.bf16.gmra.mrb[0].mxu0 %v453
      %v495 = vpop.f32.mrb[0].mxu0
      %v496 = vadd.f32 0.0, %v495
      %v497 = vpop.f32.mrb[0].mxu0
      %v498 = vpop.f32.mrb[0].mxu0
      %v499 = vadd.f32 0.0, %v498
      %v500 = vpop.f32.mrb[0].mxu0
      %501 = vmatprep.mubr.bf16.mxu0 0
      %502 = vmatmul.mubr.bf16.gmra.mrb[0].mxu0 %v456
      %v503 = vpop.f32.mrb[0].mxu0
      %v504 = vadd.f32 0.0, %v503
      %v505 = vpop.f32.mrb[0].mxu0
      %v506 = vpop.f32.mrb[0].mxu0
      %v507 = vadd.f32 0.0, %v506
      %v508 = vpop.f32.mrb[0].mxu0
      %509 = vdwg.mxu0
      %v510 = vadd.f32 %v363, %v496
      %v511 = vadd.f32 %v366, %v499
      %v512 = vadd.f32 %v371, %v504
      %v513 = vadd.f32 %v374, %v507
      %s514 = sadd.s32 %s222, 36
      %s515 = smul.addr %s514, 4
      %s516 = scalar_lea.vmem %s200, %s515
      %v517 = vld [vmem:[%s516] sm:$0xf]
      %v518 = vld [vmem:[%s516 + $0x8] sm:$0xf]
      %v519 = vld [vmem:[%s516 + $0x10] sm:$0xf]
      %v520 = vld [vmem:[%s516 + $0x18] sm:$0xf]
      %s521 = scalar_lea.vmem %s1, 6
      %v522 = vld [vmem:[%s521] sm:$0x3]
      %v527 = vunpack.c.l.b16 %v517
      %v528 = vunpack.c.l.b16 %v518
      %v529 = vunpack.c.l.b16 %v519
      %v530 = vunpack.c.l.b16 %v520
      %v531 = vpack.c.b16 %v528, %v527
      %v532 = vpack.c.b16 %v530, %v529
      %v534 = vsel %vm249, %v531, 0
      %v537 = vsel %vm249, %v532, 0
      %v540 = vsel %vm256, %v522, 0
      %542 = vmatprep.subr.bf16.mxu0 0
      %543 = vmatpush1.bf16.msra.mxu0 %v540
      %544 = vmatprep.subr.bf16.mxu0 0
      %545 = vmatpush1.bf16.msra.mxu0 0
      %546 = vmatprep.subr.bf16.mxu0 0
      %547 = vmatpush1.bf16.msra.mxu0 0
      %548 = vmatprep.subr.bf16.mxu0 0
      %549 = vmatpush1.bf16.msra.mxu0 0
      %550 = vmatprep.subr.bf16.mxu0 0
      %551 = vmatpush1.bf16.msra.mxu0 0
      %552 = vmatprep.subr.bf16.mxu0 0
      %553 = vmatpush1.bf16.msra.mxu0 0
      %554 = vmatprep.subr.bf16.mxu0 0
      %555 = vmatpush1.bf16.msra.mxu0 0
      %556 = vmatprep.subr.bf16.mxu0 0
      %557 = vmatpush1.bf16.msra.mxu0 0
      %558 = vmatprep.subr.bf16.mxu0 0
      %559 = vmatpush1.bf16.msra.mxu0 0
      %560 = vmatprep.subr.bf16.mxu0 0
      %561 = vmatpush1.bf16.msra.mxu0 0
      %562 = vmatprep.subr.bf16.mxu0 0
      %563 = vmatpush1.bf16.msra.mxu0 0
      %564 = vmatprep.subr.bf16.mxu0 0
      %565 = vmatpush1.bf16.msra.mxu0 0
      %566 = vmatprep.subr.bf16.mxu0 0
      %567 = vmatpush1.bf16.msra.mxu0 0
      %568 = vmatprep.subr.bf16.mxu0 0
      %569 = vmatpush1.bf16.msra.mxu0 0
      %570 = vmatprep.subr.bf16.mxu0 0
      %571 = vmatpush1.bf16.msra.mxu0 0
      %572 = vmatprep.subr.bf16.mxu0 0
      %573 = vmatpush1.bf16.msra.mxu0 0
      %574 = vmatprep.mubr.bf16.mxu0 0
      %575 = vmatmul.mubr.bf16.gmra.mrb[0].mxu0 %v534
      %v576 = vpop.f32.mrb[0].mxu0
      %v577 = vadd.f32 0.0, %v576
      %v578 = vpop.f32.mrb[0].mxu0
      %v579 = vpop.f32.mrb[0].mxu0
      %v580 = vadd.f32 0.0, %v579
      %v581 = vpop.f32.mrb[0].mxu0
      %582 = vmatprep.mubr.bf16.mxu0 0
      %583 = vmatmul.mubr.bf16.gmra.mrb[0].mxu0 %v537
      %v584 = vpop.f32.mrb[0].mxu0
      %v585 = vadd.f32 0.0, %v584
      %v586 = vpop.f32.mrb[0].mxu0
      %v587 = vpop.f32.mrb[0].mxu0
      %v588 = vadd.f32 0.0, %v587
      %v589 = vpop.f32.mrb[0].mxu0
      %590 = vdwg.mxu0
      %v591 = vadd.f32 %v510, %v577
      %v592 = vadd.f32 %v511, %v580
      %v593 = vadd.f32 %v512, %v585
      %v594 = vadd.f32 %v513, %v588
      %s595 = sadd.s32 %s222, 54
      %s596 = smul.addr %s595, 4
      %s597 = scalar_lea.vmem %s200, %s596
      %v598 = vld [vmem:[%s597] sm:$0xf]
      %v599 = vld [vmem:[%s597 + $0x8] sm:$0xf]
      %v600 = vld [vmem:[%s597 + $0x10] sm:$0xf]
      %v601 = vld [vmem:[%s597 + $0x18] sm:$0xf]
      %s602 = scalar_lea.vmem %s1, 8
      %v603 = vld [vmem:[%s602] sm:$0x3]
      %v608 = vunpack.c.l.b16 %v598
      %v609 = vunpack.c.l.b16 %v599
      %v610 = vunpack.c.l.b16 %v600
      %v611 = vunpack.c.l.b16 %v601
      %v612 = vpack.c.b16 %v609, %v608
      %v613 = vpack.c.b16 %v611, %v610
      %v615 = vsel %vm249, %v612, 0
      %v618 = vsel %vm249, %v613, 0
      %v621 = vsel %vm256, %v603, 0
      %623 = vmatprep.subr.bf16.mxu0 0
      %624 = vmatpush1.bf16.msra.mxu0 %v621
      %625 = vmatprep.subr.bf16.mxu0 0
      %626 = vmatpush1.bf16.msra.mxu0 0
      %627 = vmatprep.subr.bf16.mxu0 0
      %628 = vmatpush1.bf16.msra.mxu0 0
      %629 = vmatprep.subr.bf16.mxu0 0
      %630 = vmatpush1.bf16.msra.mxu0 0
      %631 = vmatprep.subr.bf16.mxu0 0
      %632 = vmatpush1.bf16.msra.mxu0 0
      %633 = vmatprep.subr.bf16.mxu0 0
      %634 = vmatpush1.bf16.msra.mxu0 0
      %635 = vmatprep.subr.bf16.mxu0 0
      %636 = vmatpush1.bf16.msra.mxu0 0
      %637 = vmatprep.subr.bf16.mxu0 0
      %638 = vmatpush1.bf16.msra.mxu0 0
      %639 = vmatprep.subr.bf16.mxu0 0
      %640 = vmatpush1.bf16.msra.mxu0 0
      %641 = vmatprep.subr.bf16.mxu0 0
      %642 = vmatpush1.bf16.msra.mxu0 0
      %643 = vmatprep.subr.bf16.mxu0 0
      %644 = vmatpush1.bf16.msra.mxu0 0
      %645 = vmatprep.subr.bf16.mxu0 0
      %646 = vmatpush1.bf16.msra.mxu0 0
      %647 = vmatprep.subr.bf16.mxu0 0
      %648 = vmatpush1.bf16.msra.mxu0 0
      %649 = vmatprep.subr.bf16.mxu0 0
      %650 = vmatpush1.bf16.msra.mxu0 0
      %651 = vmatprep.subr.bf16.mxu0 0
      %652 = vmatpush1.bf16.msra.mxu0 0
      %653 = vmatprep.subr.bf16.mxu0 0
      %654 = vmatpush1.bf16.msra.mxu0 0
      %655 = vmatprep.mubr.bf16.mxu0 0
      %656 = vmatmul.mubr.bf16.gmra.mrb[0].mxu0 %v615
      %v657 = vpop.f32.mrb[0].mxu0
      %v658 = vadd.f32 0.0, %v657
      %v659 = vpop.f32.mrb[0].mxu0
      %v660 = vpop.f32.mrb[0].mxu0
      %v661 = vadd.f32 0.0, %v660
      %v662 = vpop.f32.mrb[0].mxu0
      %663 = vmatprep.mubr.bf16.mxu0 0
      %664 = vmatmul.mubr.bf16.gmra.mrb[0].mxu0 %v618
      %v665 = vpop.f32.mrb[0].mxu0
      %v666 = vadd.f32 0.0, %v665
      %v667 = vpop.f32.mrb[0].mxu0
      %v668 = vpop.f32.mrb[0].mxu0
      %v669 = vadd.f32 0.0, %v668
      %v670 = vpop.f32.mrb[0].mxu0
      %671 = vdwg.mxu0
      %v672 = vadd.f32 %v591, %v658
      %v673 = vadd.f32 %v592, %v661
      %v674 = vadd.f32 %v593, %v666
      %v675 = vadd.f32 %v594, %v669
      %v676 = vld [vmem:[%s516] sm:$0xf]
      %v677 = vld [vmem:[%s516 + $0x4] sm:$0x1]
      %v678 = vld [vmem:[%s516 + $0x8] sm:$0xf]
      %v679 = vld [vmem:[%s516 + $0xc] sm:$0x1]
      %v680 = vld [vmem:[%s516 + $0x10] sm:$0xf]
      %v681 = vld [vmem:[%s516 + $0x14] sm:$0x1]
      %v682 = vld [vmem:[%s516 + $0x18] sm:$0xf]
      %v683 = vld [vmem:[%s516 + $0x1c] sm:$0x1]
      %v685 = vshrl.u32 %v676, 16
      %v687 = vrot.slane %v685, 4
      %v688 = vshll.u32 %v676, 16
      %v690 = vrot.slane %v688, 5
      %v691 = vor.u32 %v687, %v690
      %v692 = vrot.slane %v691, 4
      %v694 = vshll.u32 %v677, 16
      %v696 = vrot.slane %v694, 5
      %v697 = vsel %vm387, %v692, %v696
      %v699 = vshrl.u32 %v678, 16
      %v701 = vrot.slane %v699, 4
      %v702 = vshll.u32 %v678, 16
      %v704 = vrot.slane %v702, 5
      %v705 = vor.u32 %v701, %v704
      %v706 = vrot.slane %v705, 4
      %v708 = vshll.u32 %v679, 16
      %v710 = vrot.slane %v708, 5
      %v711 = vsel %vm387, %v706, %v710
      %v713 = vshrl.u32 %v680, 16
      %v715 = vrot.slane %v713, 4
      %v716 = vshll.u32 %v680, 16
      %v718 = vrot.slane %v716, 5
      %v719 = vor.u32 %v715, %v718
      %v720 = vrot.slane %v719, 4
      %v722 = vshll.u32 %v681, 16
      %v724 = vrot.slane %v722, 5
      %v725 = vsel %vm387, %v720, %v724
      %v727 = vshrl.u32 %v682, 16
      %v729 = vrot.slane %v727, 4
      %v730 = vshll.u32 %v682, 16
      %v732 = vrot.slane %v730, 5
      %v733 = vor.u32 %v729, %v732
      %v734 = vrot.slane %v733, 4
      %v736 = vshll.u32 %v683, 16
      %v738 = vrot.slane %v736, 5
      %v739 = vsel %vm387, %v734, %v738
      %s740 = scalar_lea.vmem %s1, 10
      %v741 = vld [vmem:[%s740] sm:$0x3]
      %v742 = vunpack.c.l.b16 %v697
      %v743 = vunpack.c.l.b16 %v711
      %v744 = vunpack.c.l.b16 %v725
      %v745 = vunpack.c.l.b16 %v739
      %v746 = vpack.c.b16 %v743, %v742
      %v747 = vpack.c.b16 %v745, %v744
      %v749 = vsel %vm249, %v746, 0
      %v752 = vsel %vm249, %v747, 0
      %v755 = vsel %vm256, %v741, 0
      %757 = vmatprep.subr.bf16.mxu0 0
      %758 = vmatpush1.bf16.msra.mxu0 %v755
      %759 = vmatprep.subr.bf16.mxu0 0
      %760 = vmatpush1.bf16.msra.mxu0 0
      %761 = vmatprep.subr.bf16.mxu0 0
      %762 = vmatpush1.bf16.msra.mxu0 0
      %763 = vmatprep.subr.bf16.mxu0 0
      %764 = vmatpush1.bf16.msra.mxu0 0
      %765 = vmatprep.subr.bf16.mxu0 0
      %766 = vmatpush1.bf16.msra.mxu0 0
      %767 = vmatprep.subr.bf16.mxu0 0
      %768 = vmatpush1.bf16.msra.mxu0 0
      %769 = vmatprep.subr.bf16.mxu0 0
      %770 = vmatpush1.bf16.msra.mxu0 0
      %771 = vmatprep.subr.bf16.mxu0 0
      %772 = vmatpush1.bf16.msra.mxu0 0
      %773 = vmatprep.subr.bf16.mxu0 0
      %774 = vmatpush1.bf16.msra.mxu0 0
      %775 = vmatprep.subr.bf16.mxu0 0
      %776 = vmatpush1.bf16.msra.mxu0 0
      %777 = vmatprep.subr.bf16.mxu0 0
      %778 = vmatpush1.bf16.msra.mxu0 0
      %779 = vmatprep.subr.bf16.mxu0 0
      %780 = vmatpush1.bf16.msra.mxu0 0
      %781 = vmatprep.subr.bf16.mxu0 0
      %782 = vmatpush1.bf16.msra.mxu0 0
      %783 = vmatprep.subr.bf16.mxu0 0
      %784 = vmatpush1.bf16.msra.mxu0 0
      %785 = vmatprep.subr.bf16.mxu0 0
      %786 = vmatpush1.bf16.msra.mxu0 0
      %787 = vmatprep.subr.bf16.mxu0 0
      %788 = vmatpush1.bf16.msra.mxu0 0
      %789 = vmatprep.mubr.bf16.mxu0 0
      %790 = vmatmul.mubr.bf16.gmra.mrb[0].mxu0 %v749
      %v791 = vpop.f32.mrb[0].mxu0
      %v792 = vadd.f32 0.0, %v791
      %v793 = vpop.f32.mrb[0].mxu0
      %v794 = vpop.f32.mrb[0].mxu0
      %v795 = vadd.f32 0.0, %v794
      %v796 = vpop.f32.mrb[0].mxu0
      %797 = vmatprep.mubr.bf16.mxu0 0
      %798 = vmatmul.mubr.bf16.gmra.mrb[0].mxu0 %v752
      %v799 = vpop.f32.mrb[0].mxu0
      %v800 = vadd.f32 0.0, %v799
      %v801 = vpop.f32.mrb[0].mxu0
      %v802 = vpop.f32.mrb[0].mxu0
      %v803 = vadd.f32 0.0, %v802
      %v804 = vpop.f32.mrb[0].mxu0
      %805 = vdwg.mxu0
      %v806 = vadd.f32 %v672, %v792
      %v807 = vadd.f32 %v673, %v795
      %v808 = vadd.f32 %v674, %v800
      %v809 = vadd.f32 %v675, %v803
      %s810 = sadd.s32 %s221, 1
      %s811 = smul.u32 %s810, 2
      %s812 = smul.addr %s811, 4
      %s813 = scalar_lea.vmem %s200, %s812
      %v814 = vld [vmem:[%s813] sm:$0xf]
      %v815 = vld [vmem:[%s813 + $0x8] sm:$0xf]
      %v816 = vld [vmem:[%s813 + $0x10] sm:$0xf]
      %v817 = vld [vmem:[%s813 + $0x18] sm:$0xf]
      %s818 = scalar_lea.vmem %s1, 12
      %v819 = vld [vmem:[%s818] sm:$0x3]
      %v824 = vunpack.c.l.b16 %v814
      %v825 = vunpack.c.l.b16 %v815
      %v826 = vunpack.c.l.b16 %v816
      %v827 = vunpack.c.l.b16 %v817
      %v828 = vpack.c.b16 %v825, %v824
      %v829 = vpack.c.b16 %v827, %v826
      %v831 = vsel %vm249, %v828, 0
      %v834 = vsel %vm249, %v829, 0
      %v837 = vsel %vm256, %v819, 0
      %839 = vmatprep.subr.bf16.mxu0 0
      %840 = vmatpush1.bf16.msra.mxu0 %v837
      %841 = vmatprep.subr.bf16.mxu0 0
      %842 = vmatpush1.bf16.msra.mxu0 0
      %843 = vmatprep.subr.bf16.mxu0 0
      %844 = vmatpush1.bf16.msra.mxu0 0
      %845 = vmatprep.subr.bf16.mxu0 0
      %846 = vmatpush1.bf16.msra.mxu0 0
      %847 = vmatprep.subr.bf16.mxu0 0
      %848 = vmatpush1.bf16.msra.mxu0 0
      %849 = vmatprep.subr.bf16.mxu0 0
      %850 = vmatpush1.bf16.msra.mxu0 0
      %851 = vmatprep.subr.bf16.mxu0 0
      %852 = vmatpush1.bf16.msra.mxu0 0
      %853 = vmatprep.subr.bf16.mxu0 0
      %854 = vmatpush1.bf16.msra.mxu0 0
      %855 = vmatprep.subr.bf16.mxu0 0
      %856 = vmatpush1.bf16.msra.mxu0 0
      %857 = vmatprep.subr.bf16.mxu0 0
      %858 = vmatpush1.bf16.msra.mxu0 0
      %859 = vmatprep.subr.bf16.mxu0 0
      %860 = vmatpush1.bf16.msra.mxu0 0
      %861 = vmatprep.subr.bf16.mxu0 0
      %862 = vmatpush1.bf16.msra.mxu0 0
      %863 = vmatprep.subr.bf16.mxu0 0
      %864 = vmatpush1.bf16.msra.mxu0 0
      %865 = vmatprep.subr.bf16.mxu0 0
      %866 = vmatpush1.bf16.msra.mxu0 0
      %867 = vmatprep.subr.bf16.mxu0 0
      %868 = vmatpush1.bf16.msra.mxu0 0
      %869 = vmatprep.subr.bf16.mxu0 0
      %870 = vmatpush1.bf16.msra.mxu0 0
      %871 = vmatprep.mubr.bf16.mxu0 0
      %872 = vmatmul.mubr.bf16.gmra.mrb[0].mxu0 %v831
      %v873 = vpop.f32.mrb[0].mxu0
      %v874 = vadd.f32 0.0, %v873
      %v875 = vpop.f32.mrb[0].mxu0
      %v876 = vpop.f32.mrb[0].mxu0
      %v877 = vadd.f32 0.0, %v876
      %v878 = vpop.f32.mrb[0].mxu0
      %879 = vmatprep.mubr.bf16.mxu0 0
      %880 = vmatmul.mubr.bf16.gmra.mrb[0].mxu0 %v834
      %v881 = vpop.f32.mrb[0].mxu0
      %v882 = vadd.f32 0.0, %v881
      %v883 = vpop.f32.mrb[0].mxu0
      %v884 = vpop.f32.mrb[0].mxu0
      %v885 = vadd.f32 0.0, %v884
      %v886 = vpop.f32.mrb[0].mxu0
      %887 = vdwg.mxu0
      %v888 = vadd.f32 %v806, %v874
      %v889 = vadd.f32 %v807, %v877
      %v890 = vadd.f32 %v808, %v882
      %v891 = vadd.f32 %v809, %v885
      %s892 = sadd.s32 %s811, 18
      %s893 = smul.addr %s892, 4
      %s894 = scalar_lea.vmem %s200, %s893
      %v895 = vld [vmem:[%s894] sm:$0xf]
      %v896 = vld [vmem:[%s894 + $0x8] sm:$0xf]
      %v897 = vld [vmem:[%s894 + $0x10] sm:$0xf]
      %v898 = vld [vmem:[%s894 + $0x18] sm:$0xf]
      %s899 = scalar_lea.vmem %s1, 14
      %v900 = vld [vmem:[%s899] sm:$0x3]
      %v905 = vunpack.c.l.b16 %v895
      %v906 = vunpack.c.l.b16 %v896
      %v907 = vunpack.c.l.b16 %v897
      %v908 = vunpack.c.l.b16 %v898
      %v909 = vpack.c.b16 %v906, %v905
      %v910 = vpack.c.b16 %v908, %v907
      %v912 = vsel %vm249, %v909, 0
      %v915 = vsel %vm249, %v910, 0
      %v918 = vsel %vm256, %v900, 0
      %920 = vmatprep.subr.bf16.mxu0 0
      %921 = vmatpush1.bf16.msra.mxu0 %v918
      %922 = vmatprep.subr.bf16.mxu0 0
      %923 = vmatpush1.bf16.msra.mxu0 0
      %924 = vmatprep.subr.bf16.mxu0 0
      %925 = vmatpush1.bf16.msra.mxu0 0
      %926 = vmatprep.subr.bf16.mxu0 0
      %927 = vmatpush1.bf16.msra.mxu0 0
      %928 = vmatprep.subr.bf16.mxu0 0
      %929 = vmatpush1.bf16.msra.mxu0 0
      %930 = vmatprep.subr.bf16.mxu0 0
      %931 = vmatpush1.bf16.msra.mxu0 0
      %932 = vmatprep.subr.bf16.mxu0 0
      %933 = vmatpush1.bf16.msra.mxu0 0
      %934 = vmatprep.subr.bf16.mxu0 0
      %935 = vmatpush1.bf16.msra.mxu0 0
      %936 = vmatprep.subr.bf16.mxu0 0
      %937 = vmatpush1.bf16.msra.mxu0 0
      %938 = vmatprep.subr.bf16.mxu0 0
      %939 = vmatpush1.bf16.msra.mxu0 0
      %940 = vmatprep.subr.bf16.mxu0 0
      %941 = vmatpush1.bf16.msra.mxu0 0
      %942 = vmatprep.subr.bf16.mxu0 0
      %943 = vmatpush1.bf16.msra.mxu0 0
      %944 = vmatprep.subr.bf16.mxu0 0
      %945 = vmatpush1.bf16.msra.mxu0 0
      %946 = vmatprep.subr.bf16.mxu0 0
      %947 = vmatpush1.bf16.msra.mxu0 0
      %948 = vmatprep.subr.bf16.mxu0 0
      %949 = vmatpush1.bf16.msra.mxu0 0
      %950 = vmatprep.subr.bf16.mxu0 0
      %951 = vmatpush1.bf16.msra.mxu0 0
      %952 = vmatprep.mubr.bf16.mxu0 0
      %953 = vmatmul.mubr.bf16.gmra.mrb[0].mxu0 %v912
      %v954 = vpop.f32.mrb[0].mxu0
      %v955 = vadd.f32 0.0, %v954
      %v956 = vpop.f32.mrb[0].mxu0
      %v957 = vpop.f32.mrb[0].mxu0
      %v958 = vadd.f32 0.0, %v957
      %v959 = vpop.f32.mrb[0].mxu0
      %960 = vmatprep.mubr.bf16.mxu0 0
      %961 = vmatmul.mubr.bf16.gmra.mrb[0].mxu0 %v915
      %v962 = vpop.f32.mrb[0].mxu0
      %v963 = vadd.f32 0.0, %v962
      %v964 = vpop.f32.mrb[0].mxu0
      %v965 = vpop.f32.mrb[0].mxu0
      %v966 = vadd.f32 0.0, %v965
      %v967 = vpop.f32.mrb[0].mxu0
      %968 = vdwg.mxu0
      %v969 = vadd.f32 %v888, %v955
      %v970 = vadd.f32 %v889, %v958
      %v971 = vadd.f32 %v890, %v963
      %v972 = vadd.f32 %v891, %v966
      %v973 = vld [vmem:[%s813] sm:$0xf]
      %v974 = vld [vmem:[%s813 + $0x4] sm:$0x1]
      %v975 = vld [vmem:[%s813 + $0x8] sm:$0xf]
      %v976 = vld [vmem:[%s813 + $0xc] sm:$0x1]
      %v977 = vld [vmem:[%s813 + $0x10] sm:$0xf]
      %v978 = vld [vmem:[%s813 + $0x14] sm:$0x1]
      %v979 = vld [vmem:[%s813 + $0x18] sm:$0xf]
      %v980 = vld [vmem:[%s813 + $0x1c] sm:$0x1]
      %v982 = vshrl.u32 %v973, 16
      %v984 = vrot.slane %v982, 4
      %v985 = vshll.u32 %v973, 16
      %v987 = vrot.slane %v985, 5
      %v988 = vor.u32 %v984, %v987
      %v989 = vrot.slane %v988, 4
      %v991 = vshll.u32 %v974, 16
      %v993 = vrot.slane %v991, 5
      %v994 = vsel %vm387, %v989, %v993
      %v996 = vshrl.u32 %v975, 16
      %v998 = vrot.slane %v996, 4
      %v999 = vshll.u32 %v975, 16
      %v1001 = vrot.slane %v999, 5
      %v1002 = vor.u32 %v998, %v1001
      %v1003 = vrot.slane %v1002, 4
      %v1005 = vshll.u32 %v976, 16
      %v1007 = vrot.slane %v1005, 5
      %v1008 = vsel %vm387, %v1003, %v1007
      %v1010 = vshrl.u32 %v977, 16
      %v1012 = vrot.slane %v1010, 4
      %v1013 = vshll.u32 %v977, 16
      %v1015 = vrot.slane %v1013, 5
      %v1016 = vor.u32 %v1012, %v1015
      %v1017 = vrot.slane %v1016, 4
      %v1019 = vshll.u32 %v978, 16
      %v1021 = vrot.slane %v1019, 5
      %v1022 = vsel %vm387, %v1017, %v1021
      %v1024 = vshrl.u32 %v979, 16
      %v1026 = vrot.slane %v1024, 4
      %v1027 = vshll.u32 %v979, 16
      %v1029 = vrot.slane %v1027, 5
      %v1030 = vor.u32 %v1026, %v1029
      %v1031 = vrot.slane %v1030, 4
      %v1033 = vshll.u32 %v980, 16
      %v1035 = vrot.slane %v1033, 5
      %v1036 = vsel %vm387, %v1031, %v1035
      %s1037 = scalar_lea.vmem %s1, 16
      %v1038 = vld [vmem:[%s1037] sm:$0x3]
      %v1039 = vunpack.c.l.b16 %v994
      %v1040 = vunpack.c.l.b16 %v1008
      %v1041 = vunpack.c.l.b16 %v1022
      %v1042 = vunpack.c.l.b16 %v1036
      %v1043 = vpack.c.b16 %v1040, %v1039
      %v1044 = vpack.c.b16 %v1042, %v1041
      %v1046 = vsel %vm249, %v1043, 0
      %v1049 = vsel %vm249, %v1044, 0
      %v1052 = vsel %vm256, %v1038, 0
      %1054 = vmatprep.subr.bf16.mxu0 0
      %1055 = vmatpush1.bf16.msra.mxu0 %v1052
      %1056 = vmatprep.subr.bf16.mxu0 0
      %1057 = vmatpush1.bf16.msra.mxu0 0
      %1058 = vmatprep.subr.bf16.mxu0 0
      %1059 = vmatpush1.bf16.msra.mxu0 0
      %1060 = vmatprep.subr.bf16.mxu0 0
      %1061 = vmatpush1.bf16.msra.mxu0 0
      %1062 = vmatprep.subr.bf16.mxu0 0
      %1063 = vmatpush1.bf16.msra.mxu0 0
      %1064 = vmatprep.subr.bf16.mxu0 0
      %1065 = vmatpush1.bf16.msra.mxu0 0
      %1066 = vmatprep.subr.bf16.mxu0 0
      %1067 = vmatpush1.bf16.msra.mxu0 0
      %1068 = vmatprep.subr.bf16.mxu0 0
      %1069 = vmatpush1.bf16.msra.mxu0 0
      %1070 = vmatprep.subr.bf16.mxu0 0
      %1071 = vmatpush1.bf16.msra.mxu0 0
      %1072 = vmatprep.subr.bf16.mxu0 0
      %1073 = vmatpush1.bf16.msra.mxu0 0
      %1074 = vmatprep.subr.bf16.mxu0 0
      %1075 = vmatpush1.bf16.msra.mxu0 0
      %1076 = vmatprep.subr.bf16.mxu0 0
      %1077 = vmatpush1.bf16.msra.mxu0 0
      %1078 = vmatprep.subr.bf16.mxu0 0
      %1079 = vmatpush1.bf16.msra.mxu0 0
      %1080 = vmatprep.subr.bf16.mxu0 0
      %1081 = vmatpush1.bf16.msra.mxu0 0
      %1082 = vmatprep.subr.bf16.mxu0 0
      %1083 = vmatpush1.bf16.msra.mxu0 0
      %1084 = vmatprep.subr.bf16.mxu0 0
      %1085 = vmatpush1.bf16.msra.mxu0 0
      %1086 = vmatprep.mubr.bf16.mxu0 0
      %1087 = vmatmul.mubr.bf16.gmra.mrb[0].mxu0 %v1046
      %v1088 = vpop.f32.mrb[0].mxu0
      %v1089 = vadd.f32 0.0, %v1088
      %v1090 = vpop.f32.mrb[0].mxu0
      %v1091 = vpop.f32.mrb[0].mxu0
      %v1092 = vadd.f32 0.0, %v1091
      %v1093 = vpop.f32.mrb[0].mxu0
      %1094 = vmatprep.mubr.bf16.mxu0 0
      %1095 = vmatmul.mubr.bf16.gmra.mrb[0].mxu0 %v1049
      %v1096 = vpop.f32.mrb[0].mxu0
      %v1097 = vadd.f32 0.0, %v1096
      %v1098 = vpop.f32.mrb[0].mxu0
      %v1099 = vpop.f32.mrb[0].mxu0
      %v1100 = vadd.f32 0.0, %v1099
      %v1101 = vpop.f32.mrb[0].mxu0
      %1102 = vdwg.mxu0
      %v1103 = vadd.f32 %v969, %v1089
      %v1104 = vadd.f32 %v970, %v1092
      %v1105 = vadd.f32 %v971, %v1097
      %v1106 = vadd.f32 %v972, %v1100
      %1107 = vst [vmem:[%s208] sm:$0xff] %v1103
      %1108 = vst [vmem:[%s208 + $0x8] sm:$0xff] %v1104
      %1109 = vst [vmem:[%s208 + $0x10] sm:$0xff] %v1105
      %1110 = vst [vmem:[%s208 + $0x18] sm:$0xff] %v1106
      %v1111 = vadd.f32 %v1103, %v1104
      %v1112 = vadd.f32 %v1111, %v1105
      %v1113 = vadd.f32 %v1112, %v1106
      %v1114 = vrot.slane %v1113, 4
      %v1115 = vadd.f32 %v1113, %v1114
      %v1116 = vrot.slane %v1115, 2
      %v1117 = vadd.f32 %v1115, %v1116
      %v1118 = vrot.slane %v1117, 1
      %v1119 = vadd.f32 %v1117, %v1118
      %v1120 = vmul.f32 %v1103, %v1103
      %v1121 = vmul.f32 %v1104, %v1104
      %v1122 = vmul.f32 %v1105, %v1105
      %v1123 = vmul.f32 %v1106, %v1106
      %v1124 = vadd.f32 %v1120, %v1121
      %v1125 = vadd.f32 %v1124, %v1122
      %v1126 = vadd.f32 %v1125, %v1123
      %v1127 = vrot.slane %v1126, 4
      %v1128 = vadd.f32 %v1126, %v1127
      %v1129 = vrot.slane %v1128, 2
      %v1130 = vadd.f32 %v1128, %v1129
      %v1131 = vrot.slane %v1130, 1
      %v1132 = vadd.f32 %v1130, %v1131
      %vm1133 = vcmask 1040384
      %v1134 = vsel %vm1133, %v1119, %v1132
      %1135 = vst [vmem:[%s217] sm:$0x3] %v1134
      %s1136 = smul.u32 %s19, 2
      %s1137 = sadd.s32 %s1136, %s20
      %s1138 = smul.u32 4, %s1137
      %p1139 = scmp.lt.s32.totalorder %s1138, 15
      %s1140 = scalar_select %p1139, %s1138, 15
      %s1141 = smul.addr %s1140, 8
      %s1142 = scalar_lea.vmem %s2, %s1141
      %s1143 = smul.u32 %s19, 2
      %s1144 = sadd.s32 %s1143, %s20
      %p1145 = scmp.lt.s32.totalorder %s1144, 3
      %s1146 = scalar_select %p1145, %s1144, 3
      %s1147 = smul.addr %s1146, 2
      %s1148 = scalar_lea.vmem %s3, %s1147
      // Predicated region
      $region29: #{_lambda_.5} parent=27 // pred_check
        %p1149 = pneg %p96
      $region30: #{_lambda_.5} parent=27 // pred_check_branch
        %1151 = sbr.rel (%p1149) target = $region32
      $region31: #{_lambda_.5} parent=27 // pred_region
        %s1152 = smul.u32 %s19, 2
        %s1153 = sadd.s32 %s1152, %s20
        %s1154 = smul.u32 4, %s1153
      $region32: #{_lambda_.5} parent=27 // pred_fallthru
        _
      // Predicated region
      $region33: #{_lambda_.5} parent=27 // pred_check
        %p1155 = pneg %p126
      $region34: #{_lambda_.5} parent=27 // pred_check_branch
        %1157 = sbr.rel (%p1155) target = $region36
      $region35: #{_lambda_.5} parent=27 // pred_region
        %s1158 = smul.u32 %s19, 2
        %s1159 = sadd.s32 %s1158, %s20
      $region36: #{_lambda_.5} parent=27 // pred_fallthru
        _
    $region28: #{_lambda_.5} parent=5 // pred_fallthru
      _
    %p1160 = scmp.le.s32.totalorder 2, %s10
    // Predicated region
    $region37: #{_lambda_.5} parent=5 // pred_check
      %p1161 = pneg %p1160
    $region38: #{_lambda_.5} parent=5 // pred_check_branch
      %1163 = sbr.rel (%p1161) target = $region40
    $region39: #{_lambda_.5} parent=5 // pred_region
      %s1164 = ssub.s32 %s10, 2
      // Predicated region
      $region41: #{_lambda_.5} parent=39 // pred_check
        %p1165 = pneg %p102
      $region42: #{_lambda_.5} parent=39 // pred_check_branch
        %1167 = sbr.rel (%p1165) target = $region44
      $region43: #{_lambda_.5} parent=39 // pred_region
        %s1168 = smul.u32 %s21, 2
        %s1169 = sadd.s32 %s1168, %s22
        %s1170 = smul.u32 4, %s1169
        %p1171 = scmp.lt.s32.totalorder %s1170, 15
        %s1172 = scalar_select %p1171, %s1170, 15
        %s1173 = smul.addr %s1172, 8
        %s1174 = scalar_lea.vmem %s2, %s1173
      $region44: #{_lambda_.5} parent=39 // pred_fallthru
        _
      // Predicated region
      $region45: #{_lambda_.5} parent=39 // pred_check
        %p1175 = pneg %p132
      $region46: #{_lambda_.5} parent=39 // pred_check_branch
        %1177 = sbr.rel (%p1175) target = $region48
      $region47: #{_lambda_.5} parent=39 // pred_region
        %s1178 = smul.u32 %s21, 2
        %s1179 = sadd.s32 %s1178, %s22
        %p1180 = scmp.lt.s32.totalorder %s1179, 3
        %s1181 = scalar_select %p1180, %s1179, 3
        %s1182 = smul.addr %s1181, 2
        %s1183 = scalar_lea.vmem %s3, %s1182
      $region48: #{_lambda_.5} parent=39 // pred_fallthru
        _
    $region40: #{_lambda_.5} parent=5 // pred_fallthru
      _
  $region6: #{_lambda_.5} parent=0 // loop_footer
    %s14 = sadd.s32 1, %s10
  $region7: #{_lambda_.5} parent=0 // loop_footer_branch
    %9 = sbr.rel target = $region3
  $region8: #{_lambda_.5} parent=0 // loop_exit
    _

// kernel: _lambda_.6
$region0: #{_lambda_.6}
  #allocation0 [shape = 'u32[]', space=smem, size = 0x4, offset = 0x4, fixed_abs, tag = 'smem constant byte address 0x4 - core index']
  #allocation1 [shape = 'u32[144,128]{1,0:T(1,128)}', space=vmem, size = 0x12000, scoped, tag = 'internal scratch']
  %s0 = inlined_call_operand.vmem [shape: f32[128,128], index: 0, kind: input, shape index: {}]
  %s1 = inlined_call_operand.vmem [shape: f32[1,128], index: 1, kind: input, shape index: {}]
  %s2 = inlined_call_operand.vmem [shape: f32[1,128], index: 2, kind: input, shape index: {}]
  %s3 = inlined_call_operand.vmem [shape: bf16[128,128], index: 3, kind: output, shape index: {}]
  %s4 = sld [smem:[#allocation0]]
  $region22: #{_lambda_.6} parent=0
    _
  %s6 = ssub.s32 1, %s4
  %s7 = scalar_select 0, %s6, %s4
  // Predicated region
  $region2: #{_lambda_.6} parent=0 // pred_check
    _
  $region3: #{_lambda_.6} parent=0 // pred_check_branch
    %9 = sbr.rel (0) target = $region5
  $region4: #{_lambda_.6} parent=0 // pred_region
    _
  $region5: #{_lambda_.6} parent=0 // pred_fallthru
    _
  // Predicated region
  $region6: #{_lambda_.6} parent=0 // pred_check
    _
  $region7: #{_lambda_.6} parent=0 // pred_check_branch
    %11 = sbr.rel (0) target = $region9
  $region8: #{_lambda_.6} parent=0 // pred_region
    _
  $region9: #{_lambda_.6} parent=0 // pred_fallthru
    _
  // Predicated region
  $region10: #{_lambda_.6} parent=0 // pred_check
    _
  $region11: #{_lambda_.6} parent=0 // pred_check_branch
    %13 = sbr.rel (0) target = $region13
  $region12: #{_lambda_.6} parent=0 // pred_region
    _
  $region13: #{_lambda_.6} parent=0 // pred_fallthru
    _
  %v14 = vld [vmem:[%s0] sm:$0xff]
  %v15 = vld [vmem:[%s0 + $0x8] sm:$0xff]
  %v16 = vld [vmem:[%s0 + $0x10] sm:$0xff]
  %v17 = vld [vmem:[%s0 + $0x18] sm:$0xff]
  %v18 = vld [vmem:[%s0 + $0x20] sm:$0xff]
  %v19 = vld [vmem:[%s0 + $0x28] sm:$0xff]
  %v20 = vld [vmem:[%s0 + $0x30] sm:$0xff]
  %v21 = vld [vmem:[%s0 + $0x38] sm:$0xff]
  %v22 = vld [vmem:[%s0 + $0x40] sm:$0xff]
  %v23 = vld [vmem:[%s0 + $0x48] sm:$0xff]
  %v24 = vld [vmem:[%s0 + $0x50] sm:$0xff]
  %v25 = vld [vmem:[%s0 + $0x58] sm:$0xff]
  %v26 = vld [vmem:[%s0 + $0x60] sm:$0xff]
  %v27 = vld [vmem:[%s0 + $0x68] sm:$0xff]
  %v28 = vld [vmem:[%s0 + $0x70] sm:$0xff]
  %v29 = vld [vmem:[%s0 + $0x78] sm:$0xff]
  %v30 = vld [vmem:[%s1] sm:$0x1]
  %v32 = vlaneseq
  %v33 = vshrl.u32 %v32, 7
  %v34 = vsub.s32 0, %v33
  %v35 = vrot.slane %v30, %v34
  %v37 = vmul.f32 %v14, %v35
  %v38 = vmul.f32 %v15, %v35
  %v39 = vmul.f32 %v16, %v35
  %v40 = vmul.f32 %v17, %v35
  %v41 = vmul.f32 %v18, %v35
  %v42 = vmul.f32 %v19, %v35
  %v43 = vmul.f32 %v20, %v35
  %v44 = vmul.f32 %v21, %v35
  %v45 = vmul.f32 %v22, %v35
  %v46 = vmul.f32 %v23, %v35
  %v47 = vmul.f32 %v24, %v35
  %v48 = vmul.f32 %v25, %v35
  %v49 = vmul.f32 %v26, %v35
  %v50 = vmul.f32 %v27, %v35
  %v51 = vmul.f32 %v28, %v35
  %v52 = vmul.f32 %v29, %v35
  %v53 = vld [vmem:[%s2] sm:$0x1]
  %v55 = vlaneseq
  %v56 = vshrl.u32 %v55, 7
  %v57 = vsub.s32 0, %v56
  %v58 = vrot.slane %v53, %v57
  %v60 = vadd.f32 %v37, %v58
  %v61 = vadd.f32 %v38, %v58
  %v62 = vadd.f32 %v39, %v58
  %v63 = vadd.f32 %v40, %v58
  %v64 = vadd.f32 %v41, %v58
  %v65 = vadd.f32 %v42, %v58
  %v66 = vadd.f32 %v43, %v58
  %v67 = vadd.f32 %v44, %v58
  %v68 = vadd.f32 %v45, %v58
  %v69 = vadd.f32 %v46, %v58
  %v70 = vadd.f32 %v47, %v58
  %v71 = vadd.f32 %v48, %v58
  %v72 = vadd.f32 %v49, %v58
  %v73 = vadd.f32 %v50, %v58
  %v74 = vadd.f32 %v51, %v58
  %v75 = vadd.f32 %v52, %v58
  %v76 = vmax.f32 %v60, 0.0
  %v77 = vmax.f32 %v61, 0.0
  %v78 = vmax.f32 %v62, 0.0
  %v79 = vmax.f32 %v63, 0.0
  %v80 = vmax.f32 %v64, 0.0
  %v81 = vmax.f32 %v65, 0.0
  %v82 = vmax.f32 %v66, 0.0
  %v83 = vmax.f32 %v67, 0.0
  %v84 = vmax.f32 %v68, 0.0
  %v85 = vmax.f32 %v69, 0.0
  %v86 = vmax.f32 %v70, 0.0
  %v87 = vmax.f32 %v71, 0.0
  %v88 = vmax.f32 %v72, 0.0
  %v89 = vmax.f32 %v73, 0.0
  %v90 = vmax.f32 %v74, 0.0
  %v91 = vmax.f32 %v75, 0.0
  %v92 = vpack.c.bf16 %v77, %v76
  %v93 = vpack.c.bf16 %v79, %v78
  %v94 = vpack.c.bf16 %v81, %v80
  %v95 = vpack.c.bf16 %v83, %v82
  %v96 = vpack.c.bf16 %v85, %v84
  %v97 = vpack.c.bf16 %v87, %v86
  %v98 = vpack.c.bf16 %v89, %v88
  %v99 = vpack.c.bf16 %v91, %v90
  %v108 = vunpack.c.l.b16 %v92
  %v109 = vunpack.c.h.b16 %v92
  %v110 = vunpack.c.l.b16 %v93
  %v111 = vunpack.c.h.b16 %v93
  %v112 = vunpack.c.l.b16 %v94
  %v113 = vunpack.c.h.b16 %v94
  %v114 = vunpack.c.l.b16 %v95
  %v115 = vunpack.c.h.b16 %v95
  %v116 = vunpack.c.l.b16 %v96
  %v117 = vunpack.c.h.b16 %v96
  %v118 = vunpack.c.l.b16 %v97
  %v119 = vunpack.c.h.b16 %v97
  %v120 = vunpack.c.l.b16 %v98
  %v121 = vunpack.c.h.b16 %v98
  %v122 = vunpack.c.l.b16 %v99
  %v123 = vunpack.c.h.b16 %v99
  %v124 = vpack.c.b16 %v108, %v108
  %v125 = vpack.c.b16 %v109, %v109
  %v126 = vpack.c.b16 %v110, %v110
  %v127 = vpack.c.b16 %v111, %v111
  %v128 = vpack.c.b16 %v112, %v112
  %v129 = vpack.c.b16 %v113, %v113
  %v130 = vpack.c.b16 %v114, %v114
  %v131 = vpack.c.b16 %v115, %v115
  %v132 = vpack.c.b16 %v116, %v116
  %v133 = vpack.c.b16 %v117, %v117
  %v134 = vpack.c.b16 %v118, %v118
  %v135 = vpack.c.b16 %v119, %v119
  %v136 = vpack.c.b16 %v120, %v120
  %v137 = vpack.c.b16 %v121, %v121
  %v138 = vpack.c.b16 %v122, %v122
  %v139 = vpack.c.b16 %v123, %v123
  %156 = vst [vmem:[%s3] sm:$0xf] %v124
  %157 = vst [vmem:[%s3 + $0x4] sm:$0xf] %v125
  %158 = vst [vmem:[%s3 + $0x8] sm:$0xf] %v126
  %159 = vst [vmem:[%s3 + $0xc] sm:$0xf] %v127
  %160 = vst [vmem:[%s3 + $0x10] sm:$0xf] %v128
  %161 = vst [vmem:[%s3 + $0x14] sm:$0xf] %v129
  %162 = vst [vmem:[%s3 + $0x18] sm:$0xf] %v130
  %163 = vst [vmem:[%s3 + $0x1c] sm:$0xf] %v131
  %164 = vst [vmem:[%s3 + $0x20] sm:$0xf] %v132
  %165 = vst [vmem:[%s3 + $0x24] sm:$0xf] %v133
  %166 = vst [vmem:[%s3 + $0x28] sm:$0xf] %v134
  %167 = vst [vmem:[%s3 + $0x2c] sm:$0xf] %v135
  %168 = vst [vmem:[%s3 + $0x30] sm:$0xf] %v136
  %169 = vst [vmem:[%s3 + $0x34] sm:$0xf] %v137
  %170 = vst [vmem:[%s3 + $0x38] sm:$0xf] %v138
  %171 = vst [vmem:[%s3 + $0x3c] sm:$0xf] %v139
  // Predicated region
  $region14: #{_lambda_.6} parent=0 // pred_check
    _
  $region15: #{_lambda_.6} parent=0 // pred_check_branch
    %173 = sbr.rel (0) target = $region17
  $region16: #{_lambda_.6} parent=0 // pred_region
    _
  $region17: #{_lambda_.6} parent=0 // pred_fallthru
    _
  // Predicated region
  $region18: #{_lambda_.6} parent=0 // pred_check
    _
  $region19: #{_lambda_.6} parent=0 // pred_check_branch
    %175 = sbr.rel (0) target = $region21
  $region20: #{_lambda_.6} parent=0 // pred_region
    _
  $region21: #{_lambda_.6} parent=0 // pred_fallthru
    _

// kernel: _lambda_.9
$region0: #{_lambda_.9}
  #allocation0 [shape = 'u32[]', space=smem, size = 0x4, offset = 0x4, fixed_abs, tag = 'smem constant byte address 0x4 - core index']
  #allocation1 [shape = 'u32[144,128]{1,0:T(1,128)}', space=vmem, size = 0x12000, scoped, tag = 'internal scratch']
  %s0 = inlined_call_operand.vmem [shape: f32[128,128], index: 0, kind: input, shape index: {}]
  %s1 = inlined_call_operand.vmem [shape: f32[1,128], index: 1, kind: input, shape index: {}]
  %s2 = inlined_call_operand.vmem [shape: f32[1,128], index: 2, kind: input, shape index: {}]
  %s3 = inlined_call_operand.vmem [shape: f32[128,128], index: 3, kind: input, shape index: {}]
  %s4 = inlined_call_operand.vmem [shape: f32[1,128], index: 4, kind: input, shape index: {}]
  %s5 = inlined_call_operand.vmem [shape: f32[1,128], index: 5, kind: input, shape index: {}]
  %s6 = inlined_call_operand.vmem [shape: f32[128,128], index: 6, kind: output, shape index: {}]
  %s7 = sld [smem:[#allocation0]]
  $region34: #{_lambda_.9} parent=0
    _
  %s9 = ssub.s32 1, %s7
  %s10 = scalar_select 0, %s9, %s7
  // Predicated region
  $region2: #{_lambda_.9} parent=0 // pred_check
    _
  $region3: #{_lambda_.9} parent=0 // pred_check_branch
    %12 = sbr.rel (0) target = $region5
  $region4: #{_lambda_.9} parent=0 // pred_region
    _
  $region5: #{_lambda_.9} parent=0 // pred_fallthru
    _
  // Predicated region
  $region6: #{_lambda_.9} parent=0 // pred_check
    _
  $region7: #{_lambda_.9} parent=0 // pred_check_branch
    %14 = sbr.rel (0) target = $region9
  $region8: #{_lambda_.9} parent=0 // pred_region
    _
  $region9: #{_lambda_.9} parent=0 // pred_fallthru
    _
  // Predicated region
  $region10: #{_lambda_.9} parent=0 // pred_check
    _
  $region11: #{_lambda_.9} parent=0 // pred_check_branch
    %16 = sbr.rel (0) target = $region13
  $region12: #{_lambda_.9} parent=0 // pred_region
    _
  $region13: #{_lambda_.9} parent=0 // pred_fallthru
    _
  // Predicated region
  $region14: #{_lambda_.9} parent=0 // pred_check
    _
  $region15: #{_lambda_.9} parent=0 // pred_check_branch
    %18 = sbr.rel (0) target = $region17
  $region16: #{_lambda_.9} parent=0 // pred_region
    _
  $region17: #{_lambda_.9} parent=0 // pred_fallthru
    _
  // Predicated region
  $region18: #{_lambda_.9} parent=0 // pred_check
    _
  $region19: #{_lambda_.9} parent=0 // pred_check_branch
    %20 = sbr.rel (0) target = $region21
  $region20: #{_lambda_.9} parent=0 // pred_region
    _
  $region21: #{_lambda_.9} parent=0 // pred_fallthru
    _
  // Predicated region
  $region22: #{_lambda_.9} parent=0 // pred_check
    _
  $region23: #{_lambda_.9} parent=0 // pred_check_branch
    %22 = sbr.rel (0) target = $region25
  $region24: #{_lambda_.9} parent=0 // pred_region
    _
  $region25: #{_lambda_.9} parent=0 // pred_fallthru
    _
  %v23 = vld [vmem:[%s0] sm:$0xff]
  %v24 = vld [vmem:[%s0 + $0x8] sm:$0xff]
  %v25 = vld [vmem:[%s0 + $0x10] sm:$0xff]
  %v26 = vld [vmem:[%s0 + $0x18] sm:$0xff]
  %v27 = vld [vmem:[%s0 + $0x20] sm:$0xff]
  %v28 = vld [vmem:[%s0 + $0x28] sm:$0xff]
  %v29 = vld [vmem:[%s0 + $0x30] sm:$0xff]
  %v30 = vld [vmem:[%s0 + $0x38] sm:$0xff]
  %v31 = vld [vmem:[%s0 + $0x40] sm:$0xff]
  %v32 = vld [vmem:[%s0 + $0x48] sm:$0xff]
  %v33 = vld [vmem:[%s0 + $0x50] sm:$0xff]
  %v34 = vld [vmem:[%s0 + $0x58] sm:$0xff]
  %v35 = vld [vmem:[%s0 + $0x60] sm:$0xff]
  %v36 = vld [vmem:[%s0 + $0x68] sm:$0xff]
  %v37 = vld [vmem:[%s0 + $0x70] sm:$0xff]
  %v38 = vld [vmem:[%s0 + $0x78] sm:$0xff]
  %v39 = vld [vmem:[%s1] sm:$0x1]
  %v41 = vlaneseq
  %v42 = vshrl.u32 %v41, 7
  %v43 = vsub.s32 0, %v42
  %v44 = vrot.slane %v39, %v43
  %v46 = vmul.f32 %v23, %v44
  %v47 = vmul.f32 %v24, %v44
  %v48 = vmul.f32 %v25, %v44
  %v49 = vmul.f32 %v26, %v44
  %v50 = vmul.f32 %v27, %v44
  %v51 = vmul.f32 %v28, %v44
  %v52 = vmul.f32 %v29, %v44
  %v53 = vmul.f32 %v30, %v44
  %v54 = vmul.f32 %v31, %v44
  %v55 = vmul.f32 %v32, %v44
  %v56 = vmul.f32 %v33, %v44
  %v57 = vmul.f32 %v34, %v44
  %v58 = vmul.f32 %v35, %v44
  %v59 = vmul.f32 %v36, %v44
  %v60 = vmul.f32 %v37, %v44
  %v61 = vmul.f32 %v38, %v44
  %v62 = vld [vmem:[%s2] sm:$0x1]
  %v64 = vlaneseq
  %v65 = vshrl.u32 %v64, 7
  %v66 = vsub.s32 0, %v65
  %v67 = vrot.slane %v62, %v66
  %v69 = vadd.f32 %v46, %v67
  %v70 = vadd.f32 %v47, %v67
  %v71 = vadd.f32 %v48, %v67
  %v72 = vadd.f32 %v49, %v67
  %v73 = vadd.f32 %v50, %v67
  %v74 = vadd.f32 %v51, %v67
  %v75 = vadd.f32 %v52, %v67
  %v76 = vadd.f32 %v53, %v67
  %v77 = vadd.f32 %v54, %v67
  %v78 = vadd.f32 %v55, %v67
  %v79 = vadd.f32 %v56, %v67
  %v80 = vadd.f32 %v57, %v67
  %v81 = vadd.f32 %v58, %v67
  %v82 = vadd.f32 %v59, %v67
  %v83 = vadd.f32 %v60, %v67
  %v84 = vadd.f32 %v61, %v67
  %v85 = vld [vmem:[%s3] sm:$0xff]
  %v86 = vld [vmem:[%s3 + $0x8] sm:$0xff]
  %v87 = vld [vmem:[%s3 + $0x10] sm:$0xff]
  %v88 = vld [vmem:[%s3 + $0x18] sm:$0xff]
  %v89 = vld [vmem:[%s3 + $0x20] sm:$0xff]
  %v90 = vld [vmem:[%s3 + $0x28] sm:$0xff]
  %v91 = vld [vmem:[%s3 + $0x30] sm:$0xff]
  %v92 = vld [vmem:[%s3 + $0x38] sm:$0xff]
  %v93 = vld [vmem:[%s3 + $0x40] sm:$0xff]
  %v94 = vld [vmem:[%s3 + $0x48] sm:$0xff]
  %v95 = vld [vmem:[%s3 + $0x50] sm:$0xff]
  %v96 = vld [vmem:[%s3 + $0x58] sm:$0xff]
  %v97 = vld [vmem:[%s3 + $0x60] sm:$0xff]
  %v98 = vld [vmem:[%s3 + $0x68] sm:$0xff]
  %v99 = vld [vmem:[%s3 + $0x70] sm:$0xff]
  %v100 = vld [vmem:[%s3 + $0x78] sm:$0xff]
  %v101 = vld [vmem:[%s4] sm:$0x1]
  %v103 = vlaneseq
  %v104 = vshrl.u32 %v103, 7
  %v105 = vsub.s32 0, %v104
  %v106 = vrot.slane %v101, %v105
  %v108 = vmul.f32 %v85, %v106
  %v109 = vmul.f32 %v86, %v106
  %v110 = vmul.f32 %v87, %v106
  %v111 = vmul.f32 %v88, %v106
  %v112 = vmul.f32 %v89, %v106
  %v113 = vmul.f32 %v90, %v106
  %v114 = vmul.f32 %v91, %v106
  %v115 = vmul.f32 %v92, %v106
  %v116 = vmul.f32 %v93, %v106
  %v117 = vmul.f32 %v94, %v106
  %v118 = vmul.f32 %v95, %v106
  %v119 = vmul.f32 %v96, %v106
  %v120 = vmul.f32 %v97, %v106
  %v121 = vmul.f32 %v98, %v106
  %v122 = vmul.f32 %v99, %v106
  %v123 = vmul.f32 %v100, %v106
  %v124 = vadd.f32 %v69, %v108
  %v125 = vadd.f32 %v70, %v109
  %v126 = vadd.f32 %v71, %v110
  %v127 = vadd.f32 %v72, %v111
  %v128 = vadd.f32 %v73, %v112
  %v129 = vadd.f32 %v74, %v113
  %v130 = vadd.f32 %v75, %v114
  %v131 = vadd.f32 %v76, %v115
  %v132 = vadd.f32 %v77, %v116
  %v133 = vadd.f32 %v78, %v117
  %v134 = vadd.f32 %v79, %v118
  %v135 = vadd.f32 %v80, %v119
  %v136 = vadd.f32 %v81, %v120
  %v137 = vadd.f32 %v82, %v121
  %v138 = vadd.f32 %v83, %v122
  %v139 = vadd.f32 %v84, %v123
  %v140 = vld [vmem:[%s5] sm:$0x1]
  %v142 = vlaneseq
  %v143 = vshrl.u32 %v142, 7
  %v144 = vsub.s32 0, %v143
  %v145 = vrot.slane %v140, %v144
  %v147 = vadd.f32 %v124, %v145
  %v148 = vadd.f32 %v125, %v145
  %v149 = vadd.f32 %v126, %v145
  %v150 = vadd.f32 %v127, %v145
  %v151 = vadd.f32 %v128, %v145
  %v152 = vadd.f32 %v129, %v145
  %v153 = vadd.f32 %v130, %v145
  %v154 = vadd.f32 %v131, %v145
  %v155 = vadd.f32 %v132, %v145
  %v156 = vadd.f32 %v133, %v145
  %v157 = vadd.f32 %v134, %v145
  %v158 = vadd.f32 %v135, %v145
  %v159 = vadd.f32 %v136, %v145
  %v160 = vadd.f32 %v137, %v145
  %v161 = vadd.f32 %v138, %v145
  %v162 = vadd.f32 %v139, %v145
  %v163 = vmax.f32 %v147, 0.0
  %v164 = vmax.f32 %v148, 0.0
  %v165 = vmax.f32 %v149, 0.0
  %v166 = vmax.f32 %v150, 0.0
  %v167 = vmax.f32 %v151, 0.0
  %v168 = vmax.f32 %v152, 0.0
  %v169 = vmax.f32 %v153, 0.0
  %v170 = vmax.f32 %v154, 0.0
  %v171 = vmax.f32 %v155, 0.0
  %v172 = vmax.f32 %v156, 0.0
  %v173 = vmax.f32 %v157, 0.0
  %v174 = vmax.f32 %v158, 0.0
  %v175 = vmax.f32 %v159, 0.0
  %v176 = vmax.f32 %v160, 0.0
  %v177 = vmax.f32 %v161, 0.0
  %v178 = vmax.f32 %v162, 0.0
  %179 = vst [vmem:[%s6] sm:$0xff] %v163
  %180 = vst [vmem:[%s6 + $0x8] sm:$0xff] %v164
  %181 = vst [vmem:[%s6 + $0x10] sm:$0xff] %v165
  %182 = vst [vmem:[%s6 + $0x18] sm:$0xff] %v166
  %183 = vst [vmem:[%s6 + $0x20] sm:$0xff] %v167
  %184 = vst [vmem:[%s6 + $0x28] sm:$0xff] %v168
  %185 = vst [vmem:[%s6 + $0x30] sm:$0xff] %v169
  %186 = vst [vmem:[%s6 + $0x38] sm:$0xff] %v170
  %187 = vst [vmem:[%s6 + $0x40] sm:$0xff] %v171
  %188 = vst [vmem:[%s6 + $0x48] sm:$0xff] %v172
  %189 = vst [vmem:[%s6 + $0x50] sm:$0xff] %v173
  %190 = vst [vmem:[%s6 + $0x58] sm:$0xff] %v174
  %191 = vst [vmem:[%s6 + $0x60] sm:$0xff] %v175
  %192 = vst [vmem:[%s6 + $0x68] sm:$0xff] %v176
  %193 = vst [vmem:[%s6 + $0x70] sm:$0xff] %v177
  %194 = vst [vmem:[%s6 + $0x78] sm:$0xff] %v178
  // Predicated region
  $region26: #{_lambda_.9} parent=0 // pred_check
    _
  $region27: #{_lambda_.9} parent=0 // pred_check_branch
    %196 = sbr.rel (0) target = $region29
  $region28: #{_lambda_.9} parent=0 // pred_region
    _
  $region29: #{_lambda_.9} parent=0 // pred_fallthru
    _
  // Predicated region
  $region30: #{_lambda_.9} parent=0 // pred_check
    _
  $region31: #{_lambda_.9} parent=0 // pred_check_branch
    %198 = sbr.rel (0) target = $region33
  $region32: #{_lambda_.9} parent=0 // pred_region
    _
  $region33: #{_lambda_.9} parent=0 // pred_fallthru
    _

// kernel: _lambda_.8
$region0: #{_lambda_.8}
  #allocation0 [shape = 'u32[]', space=smem, size = 0x4, offset = 0x4, fixed_abs, tag = 'smem constant byte address 0x4 - core index']
  #allocation1 [shape = 'u32[144,128]{1,0:T(1,128)}', space=vmem, size = 0x12000, scoped, tag = 'internal scratch']
  %s0 = inlined_call_operand.vmem [shape: bf16[2,10,10,128], index: 0, kind: input, shape index: {}]
  %s1 = inlined_call_operand.vmem [shape: bf16[9,128,128], index: 1, kind: input, shape index: {}]
  %s2 = inlined_call_operand.vmem [shape: f32[128,128], index: 2, kind: output, shape index: {0}]
  %s3 = inlined_call_operand.vmem [shape: f32[4,2,128], index: 3, kind: output, shape index: {1}]
  %4 = xla_tuple %s2, %s3
  %s5 = sld [smem:[#allocation0]]
  $region49: #{_lambda_.8} parent=0
    _
  %s7 = ssub.s32 1, %s5
  %s8 = scalar_select 0, %s7, %s5
  loop: start=0, step=1, limit=6
  $region2: #{_lambda_.8} parent=0 // loop_pre_header
    _
  $region3: #{_lambda_.8} parent=0 // loop_header
    %s10 = sphi 0, %s14
    %p11 = scmp.ge.s32.totalorder %s10, 6
    %s17 = sphi 0, %s29
    %s18 = sphi 0, %s25
    %s19 = sphi 0, %s17
    %s20 = sphi 0, %s18
    %s21 = sphi 0, %s19
    %s22 = sphi 0, %s20
    %s32 = sphi 0, %s34
    %s35 = sphi 0, %s32
    %s36 = sphi 0, %s35
    %s52 = sphi 0, %s36
    %s56 = sphi 0, %s56
    %s58 = sphi 0, %s56
    %s59 = sphi 0, %s58
    %s73 = sphi 0, %s59
    %s83 = sphi 0, %s85
    %s86 = sphi 0, %s83
    %s87 = sphi 0, %s86
    %s103 = sphi 0, %s87
    %s113 = sphi 0, %s115
    %s116 = sphi 0, %s113
    %s117 = sphi 0, %s116
    %s133 = sphi 0, %s117
  $region4: #{_lambda_.8} parent=0 // loop_header_branch
    %13 = sbr.rel (%p11) target = $region8
  $region5: #{_lambda_.8} parent=0 // loop_body
    %s15 = ssub.s32 %s10, 1
    %s16 = ssub.s32 %s10, 2
    %s23 = sadd.s32 1, %s18
    %p24 = scmp.ge.s32.totalorder %s23, 2
    %s25 = scalar_select %p24, 0, %s23
    %s26 = sadd.s32 1, %s17
    %s27 = scalar_select %p24, %s26, %s17
    %p28 = scmp.ge.s32.totalorder %s27, 2
    %s29 = scalar_select %p28, 0, %s27
    %s30 = ssub.s32 %s17, %s29
    %p31 = scmp.eq.s32.totalorder %s30, 0
    %s33 = sadd.s32 %s32, 1
    %s34 = scalar_select %p31, %s32, %s33
    %p37 = pneg %p31
    %p38 = scmp.eq.s32.totalorder %s10, 3
    %p39 = por %p37, %p38
    %p40 = scmp.ne.s32.totalorder %s32, %s35
    %p41 = scmp.eq.s32.totalorder %s10, 0
    %p42 = por %p40, %p41
    %p43 = scmp.ne.s32.totalorder %s32, %s35
    %p44 = scmp.eq.s32.totalorder %s15, 3
    %p45 = por %p43, %p44
    %p46 = scmp.ne.s32.totalorder %s35, %s36
    %p47 = scmp.eq.s32.totalorder %s15, 0
    %p48 = por %p46, %p47
    %p49 = scmp.ne.s32.totalorder %s35, %s36
    %p50 = scmp.eq.s32.totalorder %s16, 3
    %p51 = por %p49, %p50
    %p53 = scmp.ne.s32.totalorder %s36, %s52
    %p54 = scmp.eq.s32.totalorder %s16, 0
    %p55 = por %p53, %p54
    %s57 = sadd.s32 %s56, 1
    %p60 = scmp.eq.s32.totalorder %s10, 3
    %p61 = scmp.ne.s32.totalorder %s56, %s58
    %p62 = scmp.eq.s32.totalorder %s10, 0
    %p63 = por %p61, %p62
    %p64 = scmp.ne.s32.totalorder %s56, %s58
    %p65 = scmp.eq.s32.totalorder %s15, 3
    %p66 = por %p64, %p65
    %p67 = scmp.ne.s32.totalorder %s58, %s59
    %p68 = scmp.eq.s32.totalorder %s15, 0
    %p69 = por %p67, %p68
    %p70 = scmp.ne.s32.totalorder %s58, %s59
    %p71 = scmp.eq.s32.totalorder %s16, 3
    %p72 = por %p70, %p71
    %p74 = scmp.ne.s32.totalorder %s59, %s73
    %p75 = scmp.eq.s32.totalorder %s16, 0
    %p76 = por %p74, %p75
    %s77 = smul.u32 %s17, 2
    %s78 = sadd.s32 %s77, %s18
    %s79 = smul.u32 %s29, 2
    %s80 = sadd.s32 %s79, %s25
    %s81 = ssub.s32 %s78, %s80
    %p82 = scmp.eq.s32.totalorder %s81, 0
    %s84 = sadd.s32 %s83, 1
    %s85 = scalar_select %p82, %s83, %s84
    %p88 = pneg %p82
    %p89 = scmp.eq.s32.totalorder %s10, 3
    %p90 = por %p88, %p89
    %p91 = scmp.ne.s32.totalorder %s83, %s86
    %p92 = scmp.eq.s32.totalorder %s10, 0
    %p93 = por %p91, %p92
    %p94 = scmp.ne.s32.totalorder %s83, %s86
    %p95 = scmp.eq.s32.totalorder %s15, 3
    %p96 = por %p94, %p95
    %p97 = scmp.ne.s32.totalorder %s86, %s87
    %p98 = scmp.eq.s32.totalorder %s15, 0
    %p99 = por %p97, %p98
    %p100 = scmp.ne.s32.totalorder %s86, %s87
    %p101 = scmp.eq.s32.totalorder %s16, 3
    %p102 = por %p100, %p101
    %p104 = scmp.ne.s32.totalorder %s87, %s103
    %p105 = scmp.eq.s32.totalorder %s16, 0
    %p106 = por %p104, %p105
    %s107 = smul.u32 %s17, 2
    %s108 = sadd.s32 %s107, %s18
    %s109 = smul.u32 %s29, 2
    %s110 = sadd.s32 %s109, %s25
    %s111 = ssub.s32 %s108, %s110
    %p112 = scmp.eq.s32.totalorder %s111, 0
    %s114 = sadd.s32 %s113, 1
    %s115 = scalar_select %p112, %s113, %s114
    %p118 = pneg %p112
    %p119 = scmp.eq.s32.totalorder %s10, 3
    %p120 = por %p118, %p119
    %p121 = scmp.ne.s32.totalorder %s113, %s116
    %p122 = scmp.eq.s32.totalorder %s10, 0
    %p123 = por %p121, %p122
    %p124 = scmp.ne.s32.totalorder %s113, %s116
    %p125 = scmp.eq.s32.totalorder %s15, 3
    %p126 = por %p124, %p125
    %p127 = scmp.ne.s32.totalorder %s116, %s117
    %p128 = scmp.eq.s32.totalorder %s15, 0
    %p129 = por %p127, %p128
    %p130 = scmp.ne.s32.totalorder %s116, %s117
    %p131 = scmp.eq.s32.totalorder %s16, 3
    %p132 = por %p130, %p131
    %p134 = scmp.ne.s32.totalorder %s117, %s133
    %p135 = scmp.eq.s32.totalorder %s16, 0
    %p136 = por %p134, %p135
    %p137 = scmp.le.s32.totalorder 1, %s10
    %p138 = scmp.lt.s32.totalorder %s10, 5
    %p139 = pnand %p137, %p138
    %p140 = pneg %p139
    // Predicated region
    $region9: #{_lambda_.8} parent=5 // pred_check
      _
    $region10: #{_lambda_.8} parent=5 // pred_check_branch
      %142 = sbr.rel (%p139) target = $region12
    $region11: #{_lambda_.8} parent=5 // pred_region
      %s143 = ssub.s32 %s10, 1
      // Predicated region
      $region13: #{_lambda_.8} parent=11 // pred_check
        %p144 = pneg %p69
      $region14: #{_lambda_.8} parent=11 // pred_check_branch
        %146 = sbr.rel (%p144) target = $region16
      $region15: #{_lambda_.8} parent=11 // pred_region
        _
      $region16: #{_lambda_.8} parent=11 // pred_fallthru
        _
    $region12: #{_lambda_.8} parent=5 // pred_fallthru
      _
    %p147 = scmp.lt.s32.totalorder %s10, 4
    // Predicated region
    $region17: #{_lambda_.8} parent=5 // pred_check
      %p148 = pneg %p147
    $region18: #{_lambda_.8} parent=5 // pred_check_branch
      %150 = sbr.rel (%p148) target = $region20
    $region19: #{_lambda_.8} parent=5 // pred_region
      // Predicated region
      $region21: #{_lambda_.8} parent=19 // pred_check
        %p151 = pneg %p42
      $region22: #{_lambda_.8} parent=19 // pred_check_branch
        %153 = sbr.rel (%p151) target = $region24
      $region23: #{_lambda_.8} parent=19 // pred_region
        %p154 = scmp.lt.s32.totalorder %s17, 1
        %s155 = scalar_select %p154, %s17, 1
        %s156 = smul.addr %s155, 20
        %s157 = smul.addr %s156, 4
        %s158 = scalar_lea.vmem %s0, %s157
      $region24: #{_lambda_.8} parent=19 // pred_fallthru
        _
    $region20: #{_lambda_.8} parent=5 // pred_fallthru
      _
    %p159 = scmp.le.s32.totalorder 1, %s10
    %p160 = scmp.lt.s32.totalorder %s10, 5
    %p161 = pnand %p159, %p160
    %p162 = pneg %p161
    // Predicated region
    $region25: #{_lambda_.8} parent=5 // pred_check
      _
    $region26: #{_lambda_.8} parent=5 // pred_check_branch
      %164 = sbr.rel (%p161) target = $region28
    $region27: #{_lambda_.8} parent=5 // pred_region
      %s165 = ssub.s32 %s10, 1
      %p166 = scmp.lt.s32.totalorder %s19, 1
      %s167 = scalar_select %p166, %s19, 1
      %s168 = smul.addr %s167, 20
      %s169 = smul.addr %s168, 4
      %s170 = scalar_lea.vmem %s0, %s169
      %p171 = pneg %p48
      %p172 = pneg %p45
      %p173 = pneg %p69
      %p174 = pneg %p66
      %p175 = pneg %p99
      %p176 = pneg %p96
      %s177 = smul.u32 %s19, 2
      %s178 = sadd.s32 %s177, %s20
      %s179 = smul.u32 4, %s178
      %p180 = scmp.lt.s32.totalorder %s179, 15
      %s181 = scalar_select %p180, %s179, 15
      %s182 = smul.addr %s181, 8
      %s183 = scalar_lea.vmem %s2, %s182
      %p184 = pneg %p129
      %p185 = pneg %p126
      %s186 = smul.u32 %s19, 2
      %s187 = sadd.s32 %s186, %s20
      %p188 = scmp.lt.s32.totalorder %s187, 3
      %s189 = scalar_select %p188, %s187, 3
      %s190 = smul.addr %s189, 2
      %s191 = scalar_lea.vmem %s3, %s190
      %p192 = scmp.lt.s32.totalorder %s19, 1
      %s193 = scalar_select %p192, %s19, 1
      %s194 = smul.addr %s193, 20
      %s195 = smul.addr %s194, 4
      %s196 = scalar_lea.vmem %s0, %s195
      %s197 = smul.u32 %s19, 2
      %s198 = sadd.s32 %s197, %s20
      %s199 = smul.u32 4, %s198
      %p200 = scmp.lt.s32.totalorder %s199, 15
      %s201 = scalar_select %p200, %s199, 15
      %s202 = smul.addr %s201, 8
      %s203 = scalar_lea.vmem %s2, %s202
      %s204 = smul.u32 %s19, 2
      %s205 = sadd.s32 %s204, %s20
      %s206 = smul.u32 4, %s205
      %s207 = smul.u32 %s19, 2
      %s208 = sadd.s32 %s207, %s20
      %p209 = scmp.lt.s32.totalorder %s208, 3
      %s210 = scalar_select %p209, %s208, 3
      %s211 = smul.addr %s210, 2
      %s212 = scalar_lea.vmem %s3, %s211
      %s213 = smul.u32 %s19, 2
      %s214 = sadd.s32 %s213, %s20
      %s216 = smul.u32 %s20, 4
      %s217 = smul.u32 %s216, 2
      %s218 = smul.addr %s217, 4
      %s219 = scalar_lea.vmem %s196, %s218
      %v220 = vld [vmem:[%s219] sm:$0xf]
      %v221 = vld [vmem:[%s219 + $0x8] sm:$0xf]
      %v222 = vld [vmem:[%s219 + $0x10] sm:$0xf]
      %v223 = vld [vmem:[%s219 + $0x18] sm:$0xf]
      %v224 = vld [vmem:[%s1] sm:$0xf]
      %v225 = vld [vmem:[%s1 + $0x4] sm:$0xf]
      %v226 = vld [vmem:[%s1 + $0x8] sm:$0xf]
      %v227 = vld [vmem:[%s1 + $0xc] sm:$0xf]
      %v228 = vld [vmem:[%s1 + $0x10] sm:$0xf]
      %v229 = vld [vmem:[%s1 + $0x14] sm:$0xf]
      %v230 = vld [vmem:[%s1 + $0x18] sm:$0xf]
      %v231 = vld [vmem:[%s1 + $0x1c] sm:$0xf]
      %v232 = vld [vmem:[%s1 + $0x20] sm:$0xf]
      %v233 = vld [vmem:[%s1 + $0x24] sm:$0xf]
      %v234 = vld [vmem:[%s1 + $0x28] sm:$0xf]
      %v235 = vld [vmem:[%s1 + $0x2c] sm:$0xf]
      %v236 = vld [vmem:[%s1 + $0x30] sm:$0xf]
      %v237 = vld [vmem:[%s1 + $0x34] sm:$0xf]
      %v238 = vld [vmem:[%s1 + $0x38] sm:$0xf]
      %v239 = vld [vmem:[%s1 + $0x3c] sm:$0xf]
      %v240 = vld [vmem:[%s219 + $0x4] sm:$0x1]
      %v241 = vld [vmem:[%s219 + $0xc] sm:$0x1]
      %v242 = vld [vmem:[%s219 + $0x14] sm:$0x1]
      %v243 = vld [vmem:[%s219 + $0x1c] sm:$0x1]
      %vm244 = vsmask.f32 3328
      %vm245 = vsmask.f32 7440
      %vm246 = vmor %vm244, %vm245
      %v248 = vshrl.u32 %v220, 16
      %v250 = vrot.slane %v248, 4
      %v251 = vshll.u32 %v220, 16
      %v253 = vrot.slane %v251, 5
      %v254 = vor.u32 %v250, %v253
      %v255 = vrot.slane %v254, 4
      %v257 = vshll.u32 %v240, 16
      %v259 = vrot.slane %v257, 5
      %v260 = vsel %vm246, %v255, %v259
      %v262 = vshrl.u32 %v221, 16
      %v264 = vrot.slane %v262, 4
      %v265 = vshll.u32 %v221, 16
      %v267 = vrot.slane %v265, 5
      %v268 = vor.u32 %v264, %v267
      %v269 = vrot.slane %v268, 4
      %v271 = vshll.u32 %v241, 16
      %v273 = vrot.slane %v271, 5
      %v274 = vsel %vm246, %v269, %v273
      %v276 = vshrl.u32 %v222, 16
      %v278 = vrot.slane %v276, 4
      %v279 = vshll.u32 %v222, 16
      %v281 = vrot.slane %v279, 5
      %v282 = vor.u32 %v278, %v281
      %v283 = vrot.slane %v282, 4
      %v285 = vshll.u32 %v242, 16
      %v287 = vrot.slane %v285, 5
      %v288 = vsel %vm246, %v283, %v287
      %v290 = vshrl.u32 %v223, 16
      %v292 = vrot.slane %v290, 4
      %v293 = vshll.u32 %v223, 16
      %v295 = vrot.slane %v293, 5
      %v296 = vor.u32 %v292, %v295
      %v297 = vrot.slane %v296, 4
      %v299 = vshll.u32 %v243, 16
      %v301 = vrot.slane %v299, 5
      %v302 = vsel %vm246, %v297, %v301
      %s303 = scalar_lea.vmem %s1, 64
      %v304 = vld [vmem:[%s303] sm:$0xf]
      %v305 = vld [vmem:[%s303 + $0x4] sm:$0xf]
      %v306 = vld [vmem:[%s303 + $0x8] sm:$0xf]
      %v307 = vld [vmem:[%s303 + $0xc] sm:$0xf]
      %v308 = vld [vmem:[%s303 + $0x10] sm:$0xf]
      %v309 = vld [vmem:[%s303 + $0x14] sm:$0xf]
      %v310 = vld [vmem:[%s303 + $0x18] sm:$0xf]
      %v311 = vld [vmem:[%s303 + $0x1c] sm:$0xf]
      %v312 = vld [vmem:[%s303 + $0x20] sm:$0xf]
      %v313 = vld [vmem:[%s303 + $0x24] sm:$0xf]
      %v314 = vld [vmem:[%s303 + $0x28] sm:$0xf]
      %v315 = vld [vmem:[%s303 + $0x2c] sm:$0xf]
      %v316 = vld [vmem:[%s303 + $0x30] sm:$0xf]
      %v317 = vld [vmem:[%s303 + $0x34] sm:$0xf]
      %v318 = vld [vmem:[%s303 + $0x38] sm:$0xf]
      %v319 = vld [vmem:[%s303 + $0x3c] sm:$0xf]
      %v320 = vunpack.c.l.b16 %v260
      %v321 = vunpack.c.l.b16 %v274
      %v322 = vunpack.c.l.b16 %v288
      %v323 = vunpack.c.l.b16 %v302
      %v324 = vpack.c.b16 %v321, %v320
      %v325 = vpack.c.b16 %v323, %v322
      %v344 = vunpack.c.l.b16 %v304
      %v345 = vunpack.c.l.b16 %v305
      %v346 = vunpack.c.l.b16 %v306
      %v347 = vunpack.c.l.b16 %v307
      %v348 = vunpack.c.l.b16 %v308
      %v349 = vunpack.c.l.b16 %v309
      %v350 = vunpack.c.l.b16 %v310
      %v351 = vunpack.c.l.b16 %v311
      %v352 = vunpack.c.l.b16 %v312
      %v353 = vunpack.c.l.b16 %v313
      %v354 = vunpack.c.l.b16 %v314
      %v355 = vunpack.c.l.b16 %v315
      %v356 = vunpack.c.l.b16 %v316
      %v357 = vunpack.c.l.b16 %v317
      %v358 = vunpack.c.l.b16 %v318
      %v359 = vunpack.c.l.b16 %v319
      %v360 = vpack.c.b16 %v345, %v344
      %v361 = vpack.c.b16 %v347, %v346
      %v362 = vpack.c.b16 %v349, %v348
      %v363 = vpack.c.b16 %v351, %v350
      %v364 = vpack.c.b16 %v353, %v352
      %v365 = vpack.c.b16 %v355, %v354
      %v366 = vpack.c.b16 %v357, %v356
      %v367 = vpack.c.b16 %v359, %v358
      %376 = vmatprep.subr.bf16.mxu0 0
      %377 = vmatpush1.bf16.msra.mxu0 %v360
      %378 = vmatprep.subr.bf16.mxu0 0
      %379 = vmatpush1.bf16.msra.mxu0 %v361
      %380 = vmatprep.subr.bf16.mxu0 0
      %381 = vmatpush1.bf16.msra.mxu0 %v362
      %382 = vmatprep.subr.bf16.mxu0 0
      %383 = vmatpush1.bf16.msra.mxu0 %v363
      %384 = vmatprep.subr.bf16.mxu0 0
      %385 = vmatpush1.bf16.msra.mxu0 %v364
      %386 = vmatprep.subr.bf16.mxu0 0
      %387 = vmatpush1.bf16.msra.mxu0 %v365
      %388 = vmatprep.subr.bf16.mxu0 0
      %389 = vmatpush1.bf16.msra.mxu0 %v366
      %390 = vmatprep.subr.bf16.mxu0 0
      %391 = vmatpush1.bf16.msra.mxu0 %v367
      %392 = vmatprep.subr.bf16.mxu0 0
      %393 = vmatpush1.bf16.msra.mxu0 0
      %394 = vmatprep.subr.bf16.mxu0 0
      %395 = vmatpush1.bf16.msra.mxu0 0
      %396 = vmatprep.subr.bf16.mxu0 0
      %397 = vmatpush1.bf16.msra.mxu0 0
      %398 = vmatprep.subr.bf16.mxu0 0
      %399 = vmatpush1.bf16.msra.mxu0 0
      %400 = vmatprep.subr.bf16.mxu0 0
      %401 = vmatpush1.bf16.msra.mxu0 0
      %402 = vmatprep.subr.bf16.mxu0 0
      %403 = vmatpush1.bf16.msra.mxu0 0
      %404 = vmatprep.subr.bf16.mxu0 0
      %405 = vmatpush1.bf16.msra.mxu0 0
      %406 = vmatprep.subr.bf16.mxu0 0
      %407 = vmatpush1.bf16.msra.mxu0 0
      %408 = vmatprep.mubr.bf16.mxu0 0
      %409 = vmatmul.mubr.bf16.gmra.mrb[0].mxu0 %v324
      %v410 = vpop.f32.mrb[0].mxu0
      %v411 = vadd.f32 0.0, %v410
      %v412 = vpop.f32.mrb[0].mxu0
      %v413 = vpop.f32.mrb[0].mxu0
      %v414 = vadd.f32 0.0, %v413
      %v415 = vpop.f32.mrb[0].mxu0
      %416 = vmatprep.mubr.bf16.mxu0 0
      %417 = vmatmul.mubr.bf16.gmra.mrb[0].mxu0 %v325
      %v418 = vpop.f32.mrb[0].mxu0
      %v419 = vadd.f32 0.0, %v418
      %v420 = vpop.f32.mrb[0].mxu0
      %v421 = vpop.f32.mrb[0].mxu0
      %v422 = vadd.f32 0.0, %v421
      %v423 = vpop.f32.mrb[0].mxu0
      %424 = vdwg.mxu0
      %v429 = vunpack.c.l.b16 %v220
      %v430 = vunpack.c.l.b16 %v221
      %v431 = vunpack.c.l.b16 %v222
      %v432 = vunpack.c.l.b16 %v223
      %v433 = vpack.c.b16 %v430, %v429
      %v434 = vpack.c.b16 %v432, %v431
      %v453 = vunpack.c.l.b16 %v224
      %v454 = vunpack.c.l.b16 %v225
      %v455 = vunpack.c.l.b16 %v226
      %v456 = vunpack.c.l.b16 %v227
      %v457 = vunpack.c.l.b16 %v228
      %v458 = vunpack.c.l.b16 %v229
      %v459 = vunpack.c.l.b16 %v230
      %v460 = vunpack.c.l.b16 %v231
      %v461 = vunpack.c.l.b16 %v232
      %v462 = vunpack.c.l.b16 %v233
      %v463 = vunpack.c.l.b16 %v234
      %v464 = vunpack.c.l.b16 %v235
      %v465 = vunpack.c.l.b16 %v236
      %v466 = vunpack.c.l.b16 %v237
      %v467 = vunpack.c.l.b16 %v238
      %v468 = vunpack.c.l.b16 %v239
      %v469 = vpack.c.b16 %v454, %v453
      %v470 = vpack.c.b16 %v456, %v455
      %v471 = vpack.c.b16 %v458, %v457
      %v472 = vpack.c.b16 %v460, %v459
      %v473 = vpack.c.b16 %v462, %v461
      %v474 = vpack.c.b16 %v464, %v463
      %v475 = vpack.c.b16 %v466, %v465
      %v476 = vpack.c.b16 %v468, %v467
      %485 = vmatprep.subr.bf16.mxu0 0
      %486 = vmatpush1.bf16.msra.mxu0 %v469
      %487 = vmatprep.subr.bf16.mxu0 0
      %488 = vmatpush1.bf16.msra.mxu0 %v470
      %489 = vmatprep.subr.bf16.mxu0 0
      %490 = vmatpush1.bf16.msra.mxu0 %v471
      %491 = vmatprep.subr.bf16.mxu0 0
      %492 = vmatpush1.bf16.msra.mxu0 %v472
      %493 = vmatprep.subr.bf16.mxu0 0
      %494 = vmatpush1.bf16.msra.mxu0 %v473
      %495 = vmatprep.subr.bf16.mxu0 0
      %496 = vmatpush1.bf16.msra.mxu0 %v474
      %497 = vmatprep.subr.bf16.mxu0 0
      %498 = vmatpush1.bf16.msra.mxu0 %v475
      %499 = vmatprep.subr.bf16.mxu0 0
      %500 = vmatpush1.bf16.msra.mxu0 %v476
      %501 = vmatprep.subr.bf16.mxu0 0
      %502 = vmatpush1.bf16.msra.mxu0 0
      %503 = vmatprep.subr.bf16.mxu0 0
      %504 = vmatpush1.bf16.msra.mxu0 0
      %505 = vmatprep.subr.bf16.mxu0 0
      %506 = vmatpush1.bf16.msra.mxu0 0
      %507 = vmatprep.subr.bf16.mxu0 0
      %508 = vmatpush1.bf16.msra.mxu0 0
      %509 = vmatprep.subr.bf16.mxu0 0
      %510 = vmatpush1.bf16.msra.mxu0 0
      %511 = vmatprep.subr.bf16.mxu0 0
      %512 = vmatpush1.bf16.msra.mxu0 0
      %513 = vmatprep.subr.bf16.mxu0 0
      %514 = vmatpush1.bf16.msra.mxu0 0
      %515 = vmatprep.subr.bf16.mxu0 0
      %516 = vmatpush1.bf16.msra.mxu0 0
      %517 = vmatprep.mubr.bf16.mxu0 0
      %518 = vmatmul.mubr.bf16.gmra.mrb[0].mxu0 %v433
      %v519 = vpop.f32.mrb[0].mxu0
      %v520 = vadd.f32 %v411, %v519
      %v521 = vpop.f32.mrb[0].mxu0
      %v522 = vpop.f32.mrb[0].mxu0
      %v523 = vadd.f32 %v414, %v522
      %v524 = vpop.f32.mrb[0].mxu0
      %525 = vmatprep.mubr.bf16.mxu0 0
      %526 = vmatmul.mubr.bf16.gmra.mrb[0].mxu0 %v434
      %v527 = vpop.f32.mrb[0].mxu0
      %v528 = vadd.f32 %v419, %v527
      %v529 = vpop.f32.mrb[0].mxu0
      %v530 = vpop.f32.mrb[0].mxu0
      %v531 = vadd.f32 %v422, %v530
      %v532 = vpop.f32.mrb[0].mxu0
      %533 = vdwg.mxu0
      %v534 = vld [vmem:[%s219] sm:$0xe]
      %v535 = vld [vmem:[%s219 + $0x8] sm:$0xe]
      %v536 = vld [vmem:[%s219 + $0x10] sm:$0xe]
      %v537 = vld [vmem:[%s219 + $0x18] sm:$0xe]
      %vm546 = vcmask 1042432
      %vm547 = vcmask 1046532
      %vm548 = vmor %vm546, %vm547
      %v549 = vrot.slane %v534, 5
      %v550 = vrot.slane %v549, 4
      %v551 = vrot.slane %v240, 5
      %v552 = vsel %vm548, %v550, %v551
      %v553 = vrot.slane %v535, 5
      %v554 = vrot.slane %v553, 4
      %v555 = vrot.slane %v241, 5
      %v556 = vsel %vm548, %v554, %v555
      %v557 = vrot.slane %v536, 5
      %v558 = vrot.slane %v557, 4
      %v559 = vrot.slane %v242, 5
      %v560 = vsel %vm548, %v558, %v559
      %v561 = vrot.slane %v537, 5
      %v562 = vrot.slane %v561, 4
      %v563 = vrot.slane %v243, 5
      %v564 = vsel %vm548, %v562, %v563
      %s565 = scalar_lea.vmem %s1, 128
      %v566 = vld [vmem:[%s565] sm:$0xf]
      %v567 = vld [vmem:[%s565 + $0x4] sm:$0xf]
      %v568 = vld [vmem:[%s565 + $0x8] sm:$0xf]
      %v569 = vld [vmem:[%s565 + $0xc] sm:$0xf]
      %v570 = vld [vmem:[%s565 + $0x10] sm:$0xf]
      %v571 = vld [vmem:[%s565 + $0x14] sm:$0xf]
      %v572 = vld [vmem:[%s565 + $0x18] sm:$0xf]
      %v573 = vld [vmem:[%s565 + $0x1c] sm:$0xf]
      %v574 = vld [vmem:[%s565 + $0x20] sm:$0xf]
      %v575 = vld [vmem:[%s565 + $0x24] sm:$0xf]
      %v576 = vld [vmem:[%s565 + $0x28] sm:$0xf]
      %v577 = vld [vmem:[%s565 + $0x2c] sm:$0xf]
      %v578 = vld [vmem:[%s565 + $0x30] sm:$0xf]
      %v579 = vld [vmem:[%s565 + $0x34] sm:$0xf]
      %v580 = vld [vmem:[%s565 + $0x38] sm:$0xf]
      %v581 = vld [vmem:[%s565 + $0x3c] sm:$0xf]
      %v582 = vunpack.c.l.b16 %v552
      %v583 = vunpack.c.l.b16 %v556
      %v584 = vunpack.c.l.b16 %v560
      %v585 = vunpack.c.l.b16 %v564
      %v586 = vpack.c.b16 %v583, %v582
      %v587 = vpack.c.b16 %v585, %v584
      %v606 = vunpack.c.l.b16 %v566
      %v607 = vunpack.c.l.b16 %v567
      %v608 = vunpack.c.l.b16 %v568
      %v609 = vunpack.c.l.b16 %v569
      %v610 = vunpack.c.l.b16 %v570
      %v611 = vunpack.c.l.b16 %v571
      %v612 = vunpack.c.l.b16 %v572
      %v613 = vunpack.c.l.b16 %v573
      %v614 = vunpack.c.l.b16 %v574
      %v615 = vunpack.c.l.b16 %v575
      %v616 = vunpack.c.l.b16 %v576
      %v617 = vunpack.c.l.b16 %v577
      %v618 = vunpack.c.l.b16 %v578
      %v619 = vunpack.c.l.b16 %v579
      %v620 = vunpack.c.l.b16 %v580
      %v621 = vunpack.c.l.b16 %v581
      %v622 = vpack.c.b16 %v607, %v606
      %v623 = vpack.c.b16 %v609, %v608
      %v624 = vpack.c.b16 %v611, %v610
      %v625 = vpack.c.b16 %v613, %v612
      %v626 = vpack.c.b16 %v615, %v614
      %v627 = vpack.c.b16 %v617, %v616
      %v628 = vpack.c.b16 %v619, %v618
      %v629 = vpack.c.b16 %v621, %v620
      %638 = vmatprep.subr.bf16.mxu0 0
      %639 = vmatpush1.bf16.msra.mxu0 %v622
      %640 = vmatprep.subr.bf16.mxu0 0
      %641 = vmatpush1.bf16.msra.mxu0 %v623
      %642 = vmatprep.subr.bf16.mxu0 0
      %643 = vmatpush1.bf16.msra.mxu0 %v624
      %644 = vmatprep.subr.bf16.mxu0 0
      %645 = vmatpush1.bf16.msra.mxu0 %v625
      %646 = vmatprep.subr.bf16.mxu0 0
      %647 = vmatpush1.bf16.msra.mxu0 %v626
      %648 = vmatprep.subr.bf16.mxu0 0
      %649 = vmatpush1.bf16.msra.mxu0 %v627
      %650 = vmatprep.subr.bf16.mxu0 0
      %651 = vmatpush1.bf16.msra.mxu0 %v628
      %652 = vmatprep.subr.bf16.mxu0 0
      %653 = vmatpush1.bf16.msra.mxu0 %v629
      %654 = vmatprep.subr.bf16.mxu0 0
      %655 = vmatpush1.bf16.msra.mxu0 0
      %656 = vmatprep.subr.bf16.mxu0 0
      %657 = vmatpush1.bf16.msra.mxu0 0
      %658 = vmatprep.subr.bf16.mxu0 0
      %659 = vmatpush1.bf16.msra.mxu0 0
      %660 = vmatprep.subr.bf16.mxu0 0
      %661 = vmatpush1.bf16.msra.mxu0 0
      %662 = vmatprep.subr.bf16.mxu0 0
      %663 = vmatpush1.bf16.msra.mxu0 0
      %664 = vmatprep.subr.bf16.mxu0 0
      %665 = vmatpush1.bf16.msra.mxu0 0
      %666 = vmatprep.subr.bf16.mxu0 0
      %667 = vmatpush1.bf16.msra.mxu0 0
      %668 = vmatprep.subr.bf16.mxu0 0
      %669 = vmatpush1.bf16.msra.mxu0 0
      %670 = vmatprep.mubr.bf16.mxu0 0
      %671 = vmatmul.mubr.bf16.gmra.mrb[0].mxu0 %v586
      %v672 = vpop.f32.mrb[0].mxu0
      %v673 = vadd.f32 0.0, %v672
      %v674 = vpop.f32.mrb[0].mxu0
      %v675 = vpop.f32.mrb[0].mxu0
      %v676 = vadd.f32 0.0, %v675
      %v677 = vpop.f32.mrb[0].mxu0
      %678 = vmatprep.mubr.bf16.mxu0 0
      %679 = vmatmul.mubr.bf16.gmra.mrb[0].mxu0 %v587
      %v680 = vpop.f32.mrb[0].mxu0
      %v681 = vadd.f32 0.0, %v680
      %v682 = vpop.f32.mrb[0].mxu0
      %v683 = vpop.f32.mrb[0].mxu0
      %v684 = vadd.f32 0.0, %v683
      %v685 = vpop.f32.mrb[0].mxu0
      %686 = vdwg.mxu0
      %v687 = vadd.f32 %v520, %v673
      %v688 = vadd.f32 %v523, %v676
      %v689 = vadd.f32 %v528, %v681
      %v690 = vadd.f32 %v531, %v684
      %s691 = sadd.s32 %s216, 1
      %s692 = smul.u32 %s691, 2
      %s693 = smul.addr %s692, 4
      %s694 = scalar_lea.vmem %s196, %s693
      %v695 = vld [vmem:[%s694] sm:$0xf]
      %v696 = vld [vmem:[%s694 + $0x8] sm:$0xf]
      %v697 = vld [vmem:[%s694 + $0x10] sm:$0xf]
      %v698 = vld [vmem:[%s694 + $0x18] sm:$0xf]
      %s699 = scalar_lea.vmem %s1, 192
      %v700 = vld [vmem:[%s699] sm:$0xf]
      %v701 = vld [vmem:[%s699 + $0x4] sm:$0xf]
      %v702 = vld [vmem:[%s699 + $0x8] sm:$0xf]
      %v703 = vld [vmem:[%s699 + $0xc] sm:$0xf]
      %v704 = vld [vmem:[%s699 + $0x10] sm:$0xf]
      %v705 = vld [vmem:[%s699 + $0x14] sm:$0xf]
      %v706 = vld [vmem:[%s699 + $0x18] sm:$0xf]
      %v707 = vld [vmem:[%s699 + $0x1c] sm:$0xf]
      %v708 = vld [vmem:[%s699 + $0x20] sm:$0xf]
      %v709 = vld [vmem:[%s699 + $0x24] sm:$0xf]
      %v710 = vld [vmem:[%s699 + $0x28] sm:$0xf]
      %v711 = vld [vmem:[%s699 + $0x2c] sm:$0xf]
      %v712 = vld [vmem:[%s699 + $0x30] sm:$0xf]
      %v713 = vld [vmem:[%s699 + $0x34] sm:$0xf]
      %v714 = vld [vmem:[%s699 + $0x38] sm:$0xf]
      %v715 = vld [vmem:[%s699 + $0x3c] sm:$0xf]
      %v720 = vunpack.c.l.b16 %v695
      %v721 = vunpack.c.l.b16 %v696
      %v722 = vunpack.c.l.b16 %v697
      %v723 = vunpack.c.l.b16 %v698
      %v724 = vpack.c.b16 %v721, %v720
      %v725 = vpack.c.b16 %v723, %v722
      %v744 = vunpack.c.l.b16 %v700
      %v745 = vunpack.c.l.b16 %v701
      %v746 = vunpack.c.l.b16 %v702
      %v747 = vunpack.c.l.b16 %v703
      %v748 = vunpack.c.l.b16 %v704
      %v749 = vunpack.c.l.b16 %v705
      %v750 = vunpack.c.l.b16 %v706
      %v751 = vunpack.c.l.b16 %v707
      %v752 = vunpack.c.l.b16 %v708
      %v753 = vunpack.c.l.b16 %v709
      %v754 = vunpack.c.l.b16 %v710
      %v755 = vunpack.c.l.b16 %v711
      %v756 = vunpack.c.l.b16 %v712
      %v757 = vunpack.c.l.b16 %v713
      %v758 = vunpack.c.l.b16 %v714
      %v759 = vunpack.c.l.b16 %v715
      %v760 = vpack.c.b16 %v745, %v744
      %v761 = vpack.c.b16 %v747, %v746
      %v762 = vpack.c.b16 %v749, %v748
      %v763 = vpack.c.b16 %v751, %v750
      %v764 = vpack.c.b16 %v753, %v752
      %v765 = vpack.c.b16 %v755, %v754
      %v766 = vpack.c.b16 %v757, %v756
      %v767 = vpack.c.b16 %v759, %v758
      %776 = vmatprep.subr.bf16.mxu0 0
      %777 = vmatpush1.bf16.msra.mxu0 %v760
      %778 = vmatprep.subr.bf16.mxu0 0
      %779 = vmatpush1.bf16.msra.mxu0 %v761
      %780 = vmatprep.subr.bf16.mxu0 0
      %781 = vmatpush1.bf16.msra.mxu0 %v762
      %782 = vmatprep.subr.bf16.mxu0 0
      %783 = vmatpush1.bf16.msra.mxu0 %v763
      %784 = vmatprep.subr.bf16.mxu0 0
      %785 = vmatpush1.bf16.msra.mxu0 %v764
      %786 = vmatprep.subr.bf16.mxu0 0
      %787 = vmatpush1.bf16.msra.mxu0 %v765
      %788 = vmatprep.subr.bf16.mxu0 0
      %789 = vmatpush1.bf16.msra.mxu0 %v766
      %790 = vmatprep.subr.bf16.mxu0 0
      %791 = vmatpush1.bf16.msra.mxu0 %v767
      %792 = vmatprep.subr.bf16.mxu0 0
      %793 = vmatpush1.bf16.msra.mxu0 0
      %794 = vmatprep.subr.bf16.mxu0 0
      %795 = vmatpush1.bf16.msra.mxu0 0
      %796 = vmatprep.subr.bf16.mxu0 0
      %797 = vmatpush1.bf16.msra.mxu0 0
      %798 = vmatprep.subr.bf16.mxu0 0
      %799 = vmatpush1.bf16.msra.mxu0 0
      %800 = vmatprep.subr.bf16.mxu0 0
      %801 = vmatpush1.bf16.msra.mxu0 0
      %802 = vmatprep.subr.bf16.mxu0 0
      %803 = vmatpush1.bf16.msra.mxu0 0
      %804 = vmatprep.subr.bf16.mxu0 0
      %805 = vmatpush1.bf16.msra.mxu0 0
      %806 = vmatprep.subr.bf16.mxu0 0
      %807 = vmatpush1.bf16.msra.mxu0 0
      %808 = vmatprep.mubr.bf16.mxu0 0
      %809 = vmatmul.mubr.bf16.gmra.mrb[0].mxu0 %v724
      %v810 = vpop.f32.mrb[0].mxu0
      %v811 = vadd.f32 0.0, %v810
      %v812 = vpop.f32.mrb[0].mxu0
      %v813 = vpop.f32.mrb[0].mxu0
      %v814 = vadd.f32 0.0, %v813
      %v815 = vpop.f32.mrb[0].mxu0
      %816 = vmatprep.mubr.bf16.mxu0 0
      %817 = vmatmul.mubr.bf16.gmra.mrb[0].mxu0 %v725
      %v818 = vpop.f32.mrb[0].mxu0
      %v819 = vadd.f32 0.0, %v818
      %v820 = vpop.f32.mrb[0].mxu0
      %v821 = vpop.f32.mrb[0].mxu0
      %v822 = vadd.f32 0.0, %v821
      %v823 = vpop.f32.mrb[0].mxu0
      %824 = vdwg.mxu0
      %v825 = vadd.f32 %v687, %v811
      %v826 = vadd.f32 %v688, %v814
      %v827 = vadd.f32 %v689, %v819
      %v828 = vadd.f32 %v690, %v822
      %v829 = vld [vmem:[%s694] sm:$0xf]
      %v830 = vld [vmem:[%s694 + $0x4] sm:$0x1]
      %v831 = vld [vmem:[%s694 + $0x8] sm:$0xf]
      %v832 = vld [vmem:[%s694 + $0xc] sm:$0x1]
      %v833 = vld [vmem:[%s694 + $0x10] sm:$0xf]
      %v834 = vld [vmem:[%s694 + $0x14] sm:$0x1]
      %v835 = vld [vmem:[%s694 + $0x18] sm:$0xf]
      %v836 = vld [vmem:[%s694 + $0x1c] sm:$0x1]
      %v838 = vshrl.u32 %v829, 16
      %v840 = vrot.slane %v838, 4
      %v841 = vshll.u32 %v829, 16
      %v843 = vrot.slane %v841, 5
      %v844 = vor.u32 %v840, %v843
      %v845 = vrot.slane %v844, 4
      %v847 = vshll.u32 %v830, 16
      %v849 = vrot.slane %v847, 5
      %v850 = vsel %vm246, %v845, %v849
      %v852 = vshrl.u32 %v831, 16
      %v854 = vrot.slane %v852, 4
      %v855 = vshll.u32 %v831, 16
      %v857 = vrot.slane %v855, 5
      %v858 = vor.u32 %v854, %v857
      %v859 = vrot.slane %v858, 4
      %v861 = vshll.u32 %v832, 16
      %v863 = vrot.slane %v861, 5
      %v864 = vsel %vm246, %v859, %v863
      %v866 = vshrl.u32 %v833, 16
      %v868 = vrot.slane %v866, 4
      %v869 = vshll.u32 %v833, 16
      %v871 = vrot.slane %v869, 5
      %v872 = vor.u32 %v868, %v871
      %v873 = vrot.slane %v872, 4
      %v875 = vshll.u32 %v834, 16
      %v877 = vrot.slane %v875, 5
      %v878 = vsel %vm246, %v873, %v877
      %v880 = vshrl.u32 %v835, 16
      %v882 = vrot.slane %v880, 4
      %v883 = vshll.u32 %v835, 16
      %v885 = vrot.slane %v883, 5
      %v886 = vor.u32 %v882, %v885
      %v887 = vrot.slane %v886, 4
      %v889 = vshll.u32 %v836, 16
      %v891 = vrot.slane %v889, 5
      %v892 = vsel %vm246, %v887, %v891
      %s893 = scalar_lea.vmem %s1, 256
      %v894 = vld [vmem:[%s893] sm:$0xf]
      %v895 = vld [vmem:[%s893 + $0x4] sm:$0xf]
      %v896 = vld [vmem:[%s893 + $0x8] sm:$0xf]
      %v897 = vld [vmem:[%s893 + $0xc] sm:$0xf]
      %v898 = vld [vmem:[%s893 + $0x10] sm:$0xf]
      %v899 = vld [vmem:[%s893 + $0x14] sm:$0xf]
      %v900 = vld [vmem:[%s893 + $0x18] sm:$0xf]
      %v901 = vld [vmem:[%s893 + $0x1c] sm:$0xf]
      %v902 = vld [vmem:[%s893 + $0x20] sm:$0xf]
      %v903 = vld [vmem:[%s893 + $0x24] sm:$0xf]
      %v904 = vld [vmem:[%s893 + $0x28] sm:$0xf]
      %v905 = vld [vmem:[%s893 + $0x2c] sm:$0xf]
      %v906 = vld [vmem:[%s893 + $0x30] sm:$0xf]
      %v907 = vld [vmem:[%s893 + $0x34] sm:$0xf]
      %v908 = vld [vmem:[%s893 + $0x38] sm:$0xf]
      %v909 = vld [vmem:[%s893 + $0x3c] sm:$0xf]
      %v910 = vunpack.c.l.b16 %v850
      %v911 = vunpack.c.l.b16 %v864
      %v912 = vunpack.c.l.b16 %v878
      %v913 = vunpack.c.l.b16 %v892
      %v914 = vpack.c.b16 %v911, %v910
      %v915 = vpack.c.b16 %v913, %v912
      %v934 = vunpack.c.l.b16 %v894
      %v935 = vunpack.c.l.b16 %v895
      %v936 = vunpack.c.l.b16 %v896
      %v937 = vunpack.c.l.b16 %v897
      %v938 = vunpack.c.l.b16 %v898
      %v939 = vunpack.c.l.b16 %v899
      %v940 = vunpack.c.l.b16 %v900
      %v941 = vunpack.c.l.b16 %v901
      %v942 = vunpack.c.l.b16 %v902
      %v943 = vunpack.c.l.b16 %v903
      %v944 = vunpack.c.l.b16 %v904
      %v945 = vunpack.c.l.b16 %v905
      %v946 = vunpack.c.l.b16 %v906
      %v947 = vunpack.c.l.b16 %v907
      %v948 = vunpack.c.l.b16 %v908
      %v949 = vunpack.c.l.b16 %v909
      %v950 = vpack.c.b16 %v935, %v934
      %v951 = vpack.c.b16 %v937, %v936
      %v952 = vpack.c.b16 %v939, %v938
      %v953 = vpack.c.b16 %v941, %v940
      %v954 = vpack.c.b16 %v943, %v942
      %v955 = vpack.c.b16 %v945, %v944
      %v956 = vpack.c.b16 %v947, %v946
      %v957 = vpack.c.b16 %v949, %v948
      %966 = vmatprep.subr.bf16.mxu0 0
      %967 = vmatpush1.bf16.msra.mxu0 %v950
      %968 = vmatprep.subr.bf16.mxu0 0
      %969 = vmatpush1.bf16.msra.mxu0 %v951
      %970 = vmatprep.subr.bf16.mxu0 0
      %971 = vmatpush1.bf16.msra.mxu0 %v952
      %972 = vmatprep.subr.bf16.mxu0 0
      %973 = vmatpush1.bf16.msra.mxu0 %v953
      %974 = vmatprep.subr.bf16.mxu0 0
      %975 = vmatpush1.bf16.msra.mxu0 %v954
      %976 = vmatprep.subr.bf16.mxu0 0
      %977 = vmatpush1.bf16.msra.mxu0 %v955
      %978 = vmatprep.subr.bf16.mxu0 0
      %979 = vmatpush1.bf16.msra.mxu0 %v956
      %980 = vmatprep.subr.bf16.mxu0 0
      %981 = vmatpush1.bf16.msra.mxu0 %v957
      %982 = vmatprep.subr.bf16.mxu0 0
      %983 = vmatpush1.bf16.msra.mxu0 0
      %984 = vmatprep.subr.bf16.mxu0 0
      %985 = vmatpush1.bf16.msra.mxu0 0
      %986 = vmatprep.subr.bf16.mxu0 0
      %987 = vmatpush1.bf16.msra.mxu0 0
      %988 = vmatprep.subr.bf16.mxu0 0
      %989 = vmatpush1.bf16.msra.mxu0 0
      %990 = vmatprep.subr.bf16.mxu0 0
      %991 = vmatpush1.bf16.msra.mxu0 0
      %992 = vmatprep.subr.bf16.mxu0 0
      %993 = vmatpush1.bf16.msra.mxu0 0
      %994 = vmatprep.subr.bf16.mxu0 0
      %995 = vmatpush1.bf16.msra.mxu0 0
      %996 = vmatprep.subr.bf16.mxu0 0
      %997 = vmatpush1.bf16.msra.mxu0 0
      %998 = vmatprep.mubr.bf16.mxu0 0
      %999 = vmatmul.mubr.bf16.gmra.mrb[0].mxu0 %v914
      %v1000 = vpop.f32.mrb[0].mxu0
      %v1001 = vadd.f32 0.0, %v1000
      %v1002 = vpop.f32.mrb[0].mxu0
      %v1003 = vpop.f32.mrb[0].mxu0
      %v1004 = vadd.f32 0.0, %v1003
      %v1005 = vpop.f32.mrb[0].mxu0
      %1006 = vmatprep.mubr.bf16.mxu0 0
      %1007 = vmatmul.mubr.bf16.gmra.mrb[0].mxu0 %v915
      %v1008 = vpop.f32.mrb[0].mxu0
      %v1009 = vadd.f32 0.0, %v1008
      %v1010 = vpop.f32.mrb[0].mxu0
      %v1011 = vpop.f32.mrb[0].mxu0
      %v1012 = vadd.f32 0.0, %v1011
      %v1013 = vpop.f32.mrb[0].mxu0
      %1014 = vdwg.mxu0
      %v1015 = vadd.f32 %v825, %v1001
      %v1016 = vadd.f32 %v826, %v1004
      %v1017 = vadd.f32 %v827, %v1009
      %v1018 = vadd.f32 %v828, %v1012
      %v1019 = vld [vmem:[%s694] sm:$0xe]
      %v1020 = vld [vmem:[%s694 + $0x8] sm:$0xe]
      %v1021 = vld [vmem:[%s694 + $0x10] sm:$0xe]
      %v1022 = vld [vmem:[%s694 + $0x18] sm:$0xe]
      %v1031 = vrot.slane %v1019, 5
      %v1032 = vrot.slane %v1031, 4
      %v1033 = vrot.slane %v830, 5
      %v1034 = vsel %vm548, %v1032, %v1033
      %v1035 = vrot.slane %v1020, 5
      %v1036 = vrot.slane %v1035, 4
      %v1037 = vrot.slane %v832, 5
      %v1038 = vsel %vm548, %v1036, %v1037
      %v1039 = vrot.slane %v1021, 5
      %v1040 = vrot.slane %v1039, 4
      %v1041 = vrot.slane %v834, 5
      %v1042 = vsel %vm548, %v1040, %v1041
      %v1043 = vrot.slane %v1022, 5
      %v1044 = vrot.slane %v1043, 4
      %v1045 = vrot.slane %v836, 5
      %v1046 = vsel %vm548, %v1044, %v1045
      %s1047 = scalar_lea.vmem %s1, 320
      %v1048 = vld [vmem:[%s1047] sm:$0xf]
      %v1049 = vld [vmem:[%s1047 + $0x4] sm:$0xf]
      %v1050 = vld [vmem:[%s1047 + $0x8] sm:$0xf]
      %v1051 = vld [vmem:[%s1047 + $0xc] sm:$0xf]
      %v1052 = vld [vmem:[%s1047 + $0x10] sm:$0xf]
      %v1053 = vld [vmem:[%s1047 + $0x14] sm:$0xf]
      %v1054 = vld [vmem:[%s1047 + $0x18] sm:$0xf]
      %v1055 = vld [vmem:[%s1047 + $0x1c] sm:$0xf]
      %v1056 = vld [vmem:[%s1047 + $0x20] sm:$0xf]
      %v1057 = vld [vmem:[%s1047 + $0x24] sm:$0xf]
      %v1058 = vld [vmem:[%s1047 + $0x28] sm:$0xf]
      %v1059 = vld [vmem:[%s1047 + $0x2c] sm:$0xf]
      %v1060 = vld [vmem:[%s1047 + $0x30] sm:$0xf]
      %v1061 = vld [vmem:[%s1047 + $0x34] sm:$0xf]
      %v1062 = vld [vmem:[%s1047 + $0x38] sm:$0xf]
      %v1063 = vld [vmem:[%s1047 + $0x3c] sm:$0xf]
      %v1064 = vunpack.c.l.b16 %v1034
      %v1065 = vunpack.c.l.b16 %v1038
      %v1066 = vunpack.c.l.b16 %v1042
      %v1067 = vunpack.c.l.b16 %v1046
      %v1068 = vpack.c.b16 %v1065, %v1064
      %v1069 = vpack.c.b16 %v1067, %v1066
      %v1088 = vunpack.c.l.b16 %v1048
      %v1089 = vunpack.c.l.b16 %v1049
      %v1090 = vunpack.c.l.b16 %v1050
      %v1091 = vunpack.c.l.b16 %v1051
      %v1092 = vunpack.c.l.b16 %v1052
      %v1093 = vunpack.c.l.b16 %v1053
      %v1094 = vunpack.c.l.b16 %v1054
      %v1095 = vunpack.c.l.b16 %v1055
      %v1096 = vunpack.c.l.b16 %v1056
      %v1097 = vunpack.c.l.b16 %v1057
      %v1098 = vunpack.c.l.b16 %v1058
      %v1099 = vunpack.c.l.b16 %v1059
      %v1100 = vunpack.c.l.b16 %v1060
      %v1101 = vunpack.c.l.b16 %v1061
      %v1102 = vunpack.c.l.b16 %v1062
      %v1103 = vunpack.c.l.b16 %v1063
      %v1104 = vpack.c.b16 %v1089, %v1088
      %v1105 = vpack.c.b16 %v1091, %v1090
      %v1106 = vpack.c.b16 %v1093, %v1092
      %v1107 = vpack.c.b16 %v1095, %v1094
      %v1108 = vpack.c.b16 %v1097, %v1096
      %v1109 = vpack.c.b16 %v1099, %v1098
      %v1110 = vpack.c.b16 %v1101, %v1100
      %v1111 = vpack.c.b16 %v1103, %v1102
      %1120 = vmatprep.subr.bf16.mxu0 0
      %1121 = vmatpush1.bf16.msra.mxu0 %v1104
      %1122 = vmatprep.subr.bf16.mxu0 0
      %1123 = vmatpush1.bf16.msra.mxu0 %v1105
      %1124 = vmatprep.subr.bf16.mxu0 0
      %1125 = vmatpush1.bf16.msra.mxu0 %v1106
      %1126 = vmatprep.subr.bf16.mxu0 0
      %1127 = vmatpush1.bf16.msra.mxu0 %v1107
      %1128 = vmatprep.subr.bf16.mxu0 0
      %1129 = vmatpush1.bf16.msra.mxu0 %v1108
      %1130 = vmatprep.subr.bf16.mxu0 0
      %1131 = vmatpush1.bf16.msra.mxu0 %v1109
      %1132 = vmatprep.subr.bf16.mxu0 0
      %1133 = vmatpush1.bf16.msra.mxu0 %v1110
      %1134 = vmatprep.subr.bf16.mxu0 0
      %1135 = vmatpush1.bf16.msra.mxu0 %v1111
      %1136 = vmatprep.subr.bf16.mxu0 0
      %1137 = vmatpush1.bf16.msra.mxu0 0
      %1138 = vmatprep.subr.bf16.mxu0 0
      %1139 = vmatpush1.bf16.msra.mxu0 0
      %1140 = vmatprep.subr.bf16.mxu0 0
      %1141 = vmatpush1.bf16.msra.mxu0 0
      %1142 = vmatprep.subr.bf16.mxu0 0
      %1143 = vmatpush1.bf16.msra.mxu0 0
      %1144 = vmatprep.subr.bf16.mxu0 0
      %1145 = vmatpush1.bf16.msra.mxu0 0
      %1146 = vmatprep.subr.bf16.mxu0 0
      %1147 = vmatpush1.bf16.msra.mxu0 0
      %1148 = vmatprep.subr.bf16.mxu0 0
      %1149 = vmatpush1.bf16.msra.mxu0 0
      %1150 = vmatprep.subr.bf16.mxu0 0
      %1151 = vmatpush1.bf16.msra.mxu0 0
      %1152 = vmatprep.mubr.bf16.mxu0 0
      %1153 = vmatmul.mubr.bf16.gmra.mrb[0].mxu0 %v1068
      %v1154 = vpop.f32.mrb[0].mxu0
      %v1155 = vadd.f32 0.0, %v1154
      %v1156 = vpop.f32.mrb[0].mxu0
      %v1157 = vpop.f32.mrb[0].mxu0
      %v1158 = vadd.f32 0.0, %v1157
      %v1159 = vpop.f32.mrb[0].mxu0
      %1160 = vmatprep.mubr.bf16.mxu0 0
      %1161 = vmatmul.mubr.bf16.gmra.mrb[0].mxu0 %v1069
      %v1162 = vpop.f32.mrb[0].mxu0
      %v1163 = vadd.f32 0.0, %v1162
      %v1164 = vpop.f32.mrb[0].mxu0
      %v1165 = vpop.f32.mrb[0].mxu0
      %v1166 = vadd.f32 0.0, %v1165
      %v1167 = vpop.f32.mrb[0].mxu0
      %1168 = vdwg.mxu0
      %v1169 = vadd.f32 %v1015, %v1155
      %v1170 = vadd.f32 %v1016, %v1158
      %v1171 = vadd.f32 %v1017, %v1163
      %v1172 = vadd.f32 %v1018, %v1166
      %s1173 = sadd.s32 %s216, 2
      %s1174 = smul.u32 %s1173, 2
      %s1175 = smul.addr %s1174, 4
      %s1176 = scalar_lea.vmem %s196, %s1175
      %v1177 = vld [vmem:[%s1176] sm:$0xf]
      %v1178 = vld [vmem:[%s1176 + $0x8] sm:$0xf]
      %v1179 = vld [vmem:[%s1176 + $0x10] sm:$0xf]
      %v1180 = vld [vmem:[%s1176 + $0x18] sm:$0xf]
      %s1181 = scalar_lea.vmem %s1, 384
      %v1182 = vld [vmem:[%s1181] sm:$0xf]
      %v1183 = vld [vmem:[%s1181 + $0x4] sm:$0xf]
      %v1184 = vld [vmem:[%s1181 + $0x8] sm:$0xf]
      %v1185 = vld [vmem:[%s1181 + $0xc] sm:$0xf]
      %v1186 = vld [vmem:[%s1181 + $0x10] sm:$0xf]
      %v1187 = vld [vmem:[%s1181 + $0x14] sm:$0xf]
      %v1188 = vld [vmem:[%s1181 + $0x18] sm:$0xf]
      %v1189 = vld [vmem:[%s1181 + $0x1c] sm:$0xf]
      %v1190 = vld [vmem:[%s1181 + $0x20] sm:$0xf]
      %v1191 = vld [vmem:[%s1181 + $0x24] sm:$0xf]
      %v1192 = vld [vmem:[%s1181 + $0x28] sm:$0xf]
      %v1193 = vld [vmem:[%s1181 + $0x2c] sm:$0xf]
      %v1194 = vld [vmem:[%s1181 + $0x30] sm:$0xf]
      %v1195 = vld [vmem:[%s1181 + $0x34] sm:$0xf]
      %v1196 = vld [vmem:[%s1181 + $0x38] sm:$0xf]
      %v1197 = vld [vmem:[%s1181 + $0x3c] sm:$0xf]
      %v1202 = vunpack.c.l.b16 %v1177
      %v1203 = vunpack.c.l.b16 %v1178
      %v1204 = vunpack.c.l.b16 %v1179
      %v1205 = vunpack.c.l.b16 %v1180
      %v1206 = vpack.c.b16 %v1203, %v1202
      %v1207 = vpack.c.b16 %v1205, %v1204
      %v1226 = vunpack.c.l.b16 %v1182
      %v1227 = vunpack.c.l.b16 %v1183
      %v1228 = vunpack.c.l.b16 %v1184
      %v1229 = vunpack.c.l.b16 %v1185
      %v1230 = vunpack.c.l.b16 %v1186
      %v1231 = vunpack.c.l.b16 %v1187
      %v1232 = vunpack.c.l.b16 %v1188
      %v1233 = vunpack.c.l.b16 %v1189
      %v1234 = vunpack.c.l.b16 %v1190
      %v1235 = vunpack.c.l.b16 %v1191
      %v1236 = vunpack.c.l.b16 %v1192
      %v1237 = vunpack.c.l.b16 %v1193
      %v1238 = vunpack.c.l.b16 %v1194
      %v1239 = vunpack.c.l.b16 %v1195
      %v1240 = vunpack.c.l.b16 %v1196
      %v1241 = vunpack.c.l.b16 %v1197
      %v1242 = vpack.c.b16 %v1227, %v1226
      %v1243 = vpack.c.b16 %v1229, %v1228
      %v1244 = vpack.c.b16 %v1231, %v1230
      %v1245 = vpack.c.b16 %v1233, %v1232
      %v1246 = vpack.c.b16 %v1235, %v1234
      %v1247 = vpack.c.b16 %v1237, %v1236
      %v1248 = vpack.c.b16 %v1239, %v1238
      %v1249 = vpack.c.b16 %v1241, %v1240
      %1258 = vmatprep.subr.bf16.mxu0 0
      %1259 = vmatpush1.bf16.msra.mxu0 %v1242
      %1260 = vmatprep.subr.bf16.mxu0 0
      %1261 = vmatpush1.bf16.msra.mxu0 %v1243
      %1262 = vmatprep.subr.bf16.mxu0 0
      %1263 = vmatpush1.bf16.msra.mxu0 %v1244
      %1264 = vmatprep.subr.bf16.mxu0 0
      %1265 = vmatpush1.bf16.msra.mxu0 %v1245
      %1266 = vmatprep.subr.bf16.mxu0 0
      %1267 = vmatpush1.bf16.msra.mxu0 %v1246
      %1268 = vmatprep.subr.bf16.mxu0 0
      %1269 = vmatpush1.bf16.msra.mxu0 %v1247
      %1270 = vmatprep.subr.bf16.mxu0 0
      %1271 = vmatpush1.bf16.msra.mxu0 %v1248
      %1272 = vmatprep.subr.bf16.mxu0 0
      %1273 = vmatpush1.bf16.msra.mxu0 %v1249
      %1274 = vmatprep.subr.bf16.mxu0 0
      %1275 = vmatpush1.bf16.msra.mxu0 0
      %1276 = vmatprep.subr.bf16.mxu0 0
      %1277 = vmatpush1.bf16.msra.mxu0 0
      %1278 = vmatprep.subr.bf16.mxu0 0
      %1279 = vmatpush1.bf16.msra.mxu0 0
      %1280 = vmatprep.subr.bf16.mxu0 0
      %1281 = vmatpush1.bf16.msra.mxu0 0
      %1282 = vmatprep.subr.bf16.mxu0 0
      %1283 = vmatpush1.bf16.msra.mxu0 0
      %1284 = vmatprep.subr.bf16.mxu0 0
      %1285 = vmatpush1.bf16.msra.mxu0 0
      %1286 = vmatprep.subr.bf16.mxu0 0
      %1287 = vmatpush1.bf16.msra.mxu0 0
      %1288 = vmatprep.subr.bf16.mxu0 0
      %1289 = vmatpush1.bf16.msra.mxu0 0
      %1290 = vmatprep.mubr.bf16.mxu0 0
      %1291 = vmatmul.mubr.bf16.gmra.mrb[0].mxu0 %v1206
      %v1292 = vpop.f32.mrb[0].mxu0
      %v1293 = vadd.f32 0.0, %v1292
      %v1294 = vpop.f32.mrb[0].mxu0
      %v1295 = vpop.f32.mrb[0].mxu0
      %v1296 = vadd.f32 0.0, %v1295
      %v1297 = vpop.f32.mrb[0].mxu0
      %1298 = vmatprep.mubr.bf16.mxu0 0
      %1299 = vmatmul.mubr.bf16.gmra.mrb[0].mxu0 %v1207
      %v1300 = vpop.f32.mrb[0].mxu0
      %v1301 = vadd.f32 0.0, %v1300
      %v1302 = vpop.f32.mrb[0].mxu0
      %v1303 = vpop.f32.mrb[0].mxu0
      %v1304 = vadd.f32 0.0, %v1303
      %v1305 = vpop.f32.mrb[0].mxu0
      %1306 = vdwg.mxu0
      %v1307 = vadd.f32 %v1169, %v1293
      %v1308 = vadd.f32 %v1170, %v1296
      %v1309 = vadd.f32 %v1171, %v1301
      %v1310 = vadd.f32 %v1172, %v1304
      %v1311 = vld [vmem:[%s1176] sm:$0xf]
      %v1312 = vld [vmem:[%s1176 + $0x4] sm:$0x1]
      %v1313 = vld [vmem:[%s1176 + $0x8] sm:$0xf]
      %v1314 = vld [vmem:[%s1176 + $0xc] sm:$0x1]
      %v1315 = vld [vmem:[%s1176 + $0x10] sm:$0xf]
      %v1316 = vld [vmem:[%s1176 + $0x14] sm:$0x1]
      %v1317 = vld [vmem:[%s1176 + $0x18] sm:$0xf]
      %v1318 = vld [vmem:[%s1176 + $0x1c] sm:$0x1]
      %v1320 = vshrl.u32 %v1311, 16
      %v1322 = vrot.slane %v1320, 4
      %v1323 = vshll.u32 %v1311, 16
      %v1325 = vrot.slane %v1323, 5
      %v1326 = vor.u32 %v1322, %v1325
      %v1327 = vrot.slane %v1326, 4
      %v1329 = vshll.u32 %v1312, 16
      %v1331 = vrot.slane %v1329, 5
      %v1332 = vsel %vm246, %v1327, %v1331
      %v1334 = vshrl.u32 %v1313, 16
      %v1336 = vrot.slane %v1334, 4
      %v1337 = vshll.u32 %v1313, 16
      %v1339 = vrot.slane %v1337, 5
      %v1340 = vor.u32 %v1336, %v1339
      %v1341 = vrot.slane %v1340, 4
      %v1343 = vshll.u32 %v1314, 16
      %v1345 = vrot.slane %v1343, 5
      %v1346 = vsel %vm246, %v1341, %v1345
      %v1348 = vshrl.u32 %v1315, 16
      %v1350 = vrot.slane %v1348, 4
      %v1351 = vshll.u32 %v1315, 16
      %v1353 = vrot.slane %v1351, 5
      %v1354 = vor.u32 %v1350, %v1353
      %v1355 = vrot.slane %v1354, 4
      %v1357 = vshll.u32 %v1316, 16
      %v1359 = vrot.slane %v1357, 5
      %v1360 = vsel %vm246, %v1355, %v1359
      %v1362 = vshrl.u32 %v1317, 16
      %v1364 = vrot.slane %v1362, 4
      %v1365 = vshll.u32 %v1317, 16
      %v1367 = vrot.slane %v1365, 5
      %v1368 = vor.u32 %v1364, %v1367
      %v1369 = vrot.slane %v1368, 4
      %v1371 = vshll.u32 %v1318, 16
      %v1373 = vrot.slane %v1371, 5
      %v1374 = vsel %vm246, %v1369, %v1373
      %s1375 = scalar_lea.vmem %s1, 448
      %v1376 = vld [vmem:[%s1375] sm:$0xf]
      %v1377 = vld [vmem:[%s1375 + $0x4] sm:$0xf]
      %v1378 = vld [vmem:[%s1375 + $0x8] sm:$0xf]
      %v1379 = vld [vmem:[%s1375 + $0xc] sm:$0xf]
      %v1380 = vld [vmem:[%s1375 + $0x10] sm:$0xf]
      %v1381 = vld [vmem:[%s1375 + $0x14] sm:$0xf]
      %v1382 = vld [vmem:[%s1375 + $0x18] sm:$0xf]
      %v1383 = vld [vmem:[%s1375 + $0x1c] sm:$0xf]
      %v1384 = vld [vmem:[%s1375 + $0x20] sm:$0xf]
      %v1385 = vld [vmem:[%s1375 + $0x24] sm:$0xf]
      %v1386 = vld [vmem:[%s1375 + $0x28] sm:$0xf]
      %v1387 = vld [vmem:[%s1375 + $0x2c] sm:$0xf]
      %v1388 = vld [vmem:[%s1375 + $0x30] sm:$0xf]
      %v1389 = vld [vmem:[%s1375 + $0x34] sm:$0xf]
      %v1390 = vld [vmem:[%s1375 + $0x38] sm:$0xf]
      %v1391 = vld [vmem:[%s1375 + $0x3c] sm:$0xf]
      %v1392 = vunpack.c.l.b16 %v1332
      %v1393 = vunpack.c.l.b16 %v1346
      %v1394 = vunpack.c.l.b16 %v1360
      %v1395 = vunpack.c.l.b16 %v1374
      %v1396 = vpack.c.b16 %v1393, %v1392
      %v1397 = vpack.c.b16 %v1395, %v1394
      %v1416 = vunpack.c.l.b16 %v1376
      %v1417 = vunpack.c.l.b16 %v1377
      %v1418 = vunpack.c.l.b16 %v1378
      %v1419 = vunpack.c.l.b16 %v1379
      %v1420 = vunpack.c.l.b16 %v1380
      %v1421 = vunpack.c.l.b16 %v1381
      %v1422 = vunpack.c.l.b16 %v1382
      %v1423 = vunpack.c.l.b16 %v1383
      %v1424 = vunpack.c.l.b16 %v1384
      %v1425 = vunpack.c.l.b16 %v1385
      %v1426 = vunpack.c.l.b16 %v1386
      %v1427 = vunpack.c.l.b16 %v1387
      %v1428 = vunpack.c.l.b16 %v1388
      %v1429 = vunpack.c.l.b16 %v1389
      %v1430 = vunpack.c.l.b16 %v1390
      %v1431 = vunpack.c.l.b16 %v1391
      %v1432 = vpack.c.b16 %v1417, %v1416
      %v1433 = vpack.c.b16 %v1419, %v1418
      %v1434 = vpack.c.b16 %v1421, %v1420
      %v1435 = vpack.c.b16 %v1423, %v1422
      %v1436 = vpack.c.b16 %v1425, %v1424
      %v1437 = vpack.c.b16 %v1427, %v1426
      %v1438 = vpack.c.b16 %v1429, %v1428
      %v1439 = vpack.c.b16 %v1431, %v1430
      %1448 = vmatprep.subr.bf16.mxu0 0
      %1449 = vmatpush1.bf16.msra.mxu0 %v1432
      %1450 = vmatprep.subr.bf16.mxu0 0
      %1451 = vmatpush1.bf16.msra.mxu0 %v1433
      %1452 = vmatprep.subr.bf16.mxu0 0
      %1453 = vmatpush1.bf16.msra.mxu0 %v1434
      %1454 = vmatprep.subr.bf16.mxu0 0
      %1455 = vmatpush1.bf16.msra.mxu0 %v1435
      %1456 = vmatprep.subr.bf16.mxu0 0
      %1457 = vmatpush1.bf16.msra.mxu0 %v1436
      %1458 = vmatprep.subr.bf16.mxu0 0
      %1459 = vmatpush1.bf16.msra.mxu0 %v1437
      %1460 = vmatprep.subr.bf16.mxu0 0
      %1461 = vmatpush1.bf16.msra.mxu0 %v1438
      %1462 = vmatprep.subr.bf16.mxu0 0
      %1463 = vmatpush1.bf16.msra.mxu0 %v1439
      %1464 = vmatprep.subr.bf16.mxu0 0
      %1465 = vmatpush1.bf16.msra.mxu0 0
      %1466 = vmatprep.subr.bf16.mxu0 0
      %1467 = vmatpush1.bf16.msra.mxu0 0
      %1468 = vmatprep.subr.bf16.mxu0 0
      %1469 = vmatpush1.bf16.msra.mxu0 0
      %1470 = vmatprep.subr.bf16.mxu0 0
      %1471 = vmatpush1.bf16.msra.mxu0 0
      %1472 = vmatprep.subr.bf16.mxu0 0
      %1473 = vmatpush1.bf16.msra.mxu0 0
      %1474 = vmatprep.subr.bf16.mxu0 0
      %1475 = vmatpush1.bf16.msra.mxu0 0
      %1476 = vmatprep.subr.bf16.mxu0 0
      %1477 = vmatpush1.bf16.msra.mxu0 0
      %1478 = vmatprep.subr.bf16.mxu0 0
      %1479 = vmatpush1.bf16.msra.mxu0 0
      %1480 = vmatprep.mubr.bf16.mxu0 0
      %1481 = vmatmul.mubr.bf16.gmra.mrb[0].mxu0 %v1396
      %v1482 = vpop.f32.mrb[0].mxu0
      %v1483 = vadd.f32 0.0, %v1482
      %v1484 = vpop.f32.mrb[0].mxu0
      %v1485 = vpop.f32.mrb[0].mxu0
      %v1486 = vadd.f32 0.0, %v1485
      %v1487 = vpop.f32.mrb[0].mxu0
      %1488 = vmatprep.mubr.bf16.mxu0 0
      %1489 = vmatmul.mubr.bf16.gmra.mrb[0].mxu0 %v1397
      %v1490 = vpop.f32.mrb[0].mxu0
      %v1491 = vadd.f32 0.0, %v1490
      %v1492 = vpop.f32.mrb[0].mxu0
      %v1493 = vpop.f32.mrb[0].mxu0
      %v1494 = vadd.f32 0.0, %v1493
      %v1495 = vpop.f32.mrb[0].mxu0
      %1496 = vdwg.mxu0
      %v1497 = vadd.f32 %v1307, %v1483
      %v1498 = vadd.f32 %v1308, %v1486
      %v1499 = vadd.f32 %v1309, %v1491
      %v1500 = vadd.f32 %v1310, %v1494
      %v1501 = vld [vmem:[%s1176] sm:$0xe]
      %v1502 = vld [vmem:[%s1176 + $0x8] sm:$0xe]
      %v1503 = vld [vmem:[%s1176 + $0x10] sm:$0xe]
      %v1504 = vld [vmem:[%s1176 + $0x18] sm:$0xe]
      %v1513 = vrot.slane %v1501, 5
      %v1514 = vrot.slane %v1513, 4
      %v1515 = vrot.slane %v1312, 5
      %v1516 = vsel %vm548, %v1514, %v1515
      %v1517 = vrot.slane %v1502, 5
      %v1518 = vrot.slane %v1517, 4
      %v1519 = vrot.slane %v1314, 5
      %v1520 = vsel %vm548, %v1518, %v1519
      %v1521 = vrot.slane %v1503, 5
      %v1522 = vrot.slane %v1521, 4
      %v1523 = vrot.slane %v1316, 5
      %v1524 = vsel %vm548, %v1522, %v1523
      %v1525 = vrot.slane %v1504, 5
      %v1526 = vrot.slane %v1525, 4
      %v1527 = vrot.slane %v1318, 5
      %v1528 = vsel %vm548, %v1526, %v1527
      %s1529 = scalar_lea.vmem %s1, 512
      %v1530 = vld [vmem:[%s1529] sm:$0xf]
      %v1531 = vld [vmem:[%s1529 + $0x4] sm:$0xf]
      %v1532 = vld [vmem:[%s1529 + $0x8] sm:$0xf]
      %v1533 = vld [vmem:[%s1529 + $0xc] sm:$0xf]
      %v1534 = vld [vmem:[%s1529 + $0x10] sm:$0xf]
      %v1535 = vld [vmem:[%s1529 + $0x14] sm:$0xf]
      %v1536 = vld [vmem:[%s1529 + $0x18] sm:$0xf]
      %v1537 = vld [vmem:[%s1529 + $0x1c] sm:$0xf]
      %v1538 = vld [vmem:[%s1529 + $0x20] sm:$0xf]
      %v1539 = vld [vmem:[%s1529 + $0x24] sm:$0xf]
      %v1540 = vld [vmem:[%s1529 + $0x28] sm:$0xf]
      %v1541 = vld [vmem:[%s1529 + $0x2c] sm:$0xf]
      %v1542 = vld [vmem:[%s1529 + $0x30] sm:$0xf]
      %v1543 = vld [vmem:[%s1529 + $0x34] sm:$0xf]
      %v1544 = vld [vmem:[%s1529 + $0x38] sm:$0xf]
      %v1545 = vld [vmem:[%s1529 + $0x3c] sm:$0xf]
      %v1546 = vunpack.c.l.b16 %v1516
      %v1547 = vunpack.c.l.b16 %v1520
      %v1548 = vunpack.c.l.b16 %v1524
      %v1549 = vunpack.c.l.b16 %v1528
      %v1550 = vpack.c.b16 %v1547, %v1546
      %v1551 = vpack.c.b16 %v1549, %v1548
      %v1570 = vunpack.c.l.b16 %v1530
      %v1571 = vunpack.c.l.b16 %v1531
      %v1572 = vunpack.c.l.b16 %v1532
      %v1573 = vunpack.c.l.b16 %v1533
      %v1574 = vunpack.c.l.b16 %v1534
      %v1575 = vunpack.c.l.b16 %v1535
      %v1576 = vunpack.c.l.b16 %v1536
      %v1577 = vunpack.c.l.b16 %v1537
      %v1578 = vunpack.c.l.b16 %v1538
      %v1579 = vunpack.c.l.b16 %v1539
      %v1580 = vunpack.c.l.b16 %v1540
      %v1581 = vunpack.c.l.b16 %v1541
      %v1582 = vunpack.c.l.b16 %v1542
      %v1583 = vunpack.c.l.b16 %v1543
      %v1584 = vunpack.c.l.b16 %v1544
      %v1585 = vunpack.c.l.b16 %v1545
      %v1586 = vpack.c.b16 %v1571, %v1570
      %v1587 = vpack.c.b16 %v1573, %v1572
      %v1588 = vpack.c.b16 %v1575, %v1574
      %v1589 = vpack.c.b16 %v1577, %v1576
      %v1590 = vpack.c.b16 %v1579, %v1578
      %v1591 = vpack.c.b16 %v1581, %v1580
      %v1592 = vpack.c.b16 %v1583, %v1582
      %v1593 = vpack.c.b16 %v1585, %v1584
      %1602 = vmatprep.subr.bf16.mxu0 0
      %1603 = vmatpush1.bf16.msra.mxu0 %v1586
      %1604 = vmatprep.subr.bf16.mxu0 0
      %1605 = vmatpush1.bf16.msra.mxu0 %v1587
      %1606 = vmatprep.subr.bf16.mxu0 0
      %1607 = vmatpush1.bf16.msra.mxu0 %v1588
      %1608 = vmatprep.subr.bf16.mxu0 0
      %1609 = vmatpush1.bf16.msra.mxu0 %v1589
      %1610 = vmatprep.subr.bf16.mxu0 0
      %1611 = vmatpush1.bf16.msra.mxu0 %v1590
      %1612 = vmatprep.subr.bf16.mxu0 0
      %1613 = vmatpush1.bf16.msra.mxu0 %v1591
      %1614 = vmatprep.subr.bf16.mxu0 0
      %1615 = vmatpush1.bf16.msra.mxu0 %v1592
      %1616 = vmatprep.subr.bf16.mxu0 0
      %1617 = vmatpush1.bf16.msra.mxu0 %v1593
      %1618 = vmatprep.subr.bf16.mxu0 0
      %1619 = vmatpush1.bf16.msra.mxu0 0
      %1620 = vmatprep.subr.bf16.mxu0 0
      %1621 = vmatpush1.bf16.msra.mxu0 0
      %1622 = vmatprep.subr.bf16.mxu0 0
      %1623 = vmatpush1.bf16.msra.mxu0 0
      %1624 = vmatprep.subr.bf16.mxu0 0
      %1625 = vmatpush1.bf16.msra.mxu0 0
      %1626 = vmatprep.subr.bf16.mxu0 0
      %1627 = vmatpush1.bf16.msra.mxu0 0
      %1628 = vmatprep.subr.bf16.mxu0 0
      %1629 = vmatpush1.bf16.msra.mxu0 0
      %1630 = vmatprep.subr.bf16.mxu0 0
      %1631 = vmatpush1.bf16.msra.mxu0 0
      %1632 = vmatprep.subr.bf16.mxu0 0
      %1633 = vmatpush1.bf16.msra.mxu0 0
      %1634 = vmatprep.mubr.bf16.mxu0 0
      %1635 = vmatmul.mubr.bf16.gmra.mrb[0].mxu0 %v1550
      %v1636 = vpop.f32.mrb[0].mxu0
      %v1637 = vadd.f32 0.0, %v1636
      %v1638 = vpop.f32.mrb[0].mxu0
      %v1639 = vpop.f32.mrb[0].mxu0
      %v1640 = vadd.f32 0.0, %v1639
      %v1641 = vpop.f32.mrb[0].mxu0
      %1642 = vmatprep.mubr.bf16.mxu0 0
      %1643 = vmatmul.mubr.bf16.gmra.mrb[0].mxu0 %v1551
      %v1644 = vpop.f32.mrb[0].mxu0
      %v1645 = vadd.f32 0.0, %v1644
      %v1646 = vpop.f32.mrb[0].mxu0
      %v1647 = vpop.f32.mrb[0].mxu0
      %v1648 = vadd.f32 0.0, %v1647
      %v1649 = vpop.f32.mrb[0].mxu0
      %1650 = vdwg.mxu0
      %v1651 = vadd.f32 %v1497, %v1637
      %v1652 = vadd.f32 %v1498, %v1640
      %v1653 = vadd.f32 %v1499, %v1645
      %v1654 = vadd.f32 %v1500, %v1648
      %1655 = vst [vmem:[%s203] sm:$0xff] %v1651
      %1656 = vst [vmem:[%s203 + $0x8] sm:$0xff] %v1652
      %1657 = vst [vmem:[%s203 + $0x10] sm:$0xff] %v1653
      %1658 = vst [vmem:[%s203 + $0x18] sm:$0xff] %v1654
      %v1659 = vadd.f32 %v1651, %v1652
      %v1660 = vadd.f32 %v1659, %v1653
      %v1661 = vadd.f32 %v1660, %v1654
      %v1662 = vrot.slane %v1661, 4
      %v1663 = vadd.f32 %v1661, %v1662
      %v1664 = vrot.slane %v1663, 2
      %v1665 = vadd.f32 %v1663, %v1664
      %v1666 = vrot.slane %v1665, 1
      %v1667 = vadd.f32 %v1665, %v1666
      %v1668 = vmul.f32 %v1651, %v1651
      %v1669 = vmul.f32 %v1652, %v1652
      %v1670 = vmul.f32 %v1653, %v1653
      %v1671 = vmul.f32 %v1654, %v1654
      %v1672 = vadd.f32 %v1668, %v1669
      %v1673 = vadd.f32 %v1672, %v1670
      %v1674 = vadd.f32 %v1673, %v1671
      %v1675 = vrot.slane %v1674, 4
      %v1676 = vadd.f32 %v1674, %v1675
      %v1677 = vrot.slane %v1676, 2
      %v1678 = vadd.f32 %v1676, %v1677
      %v1679 = vrot.slane %v1678, 1
      %v1680 = vadd.f32 %v1678, %v1679
      %vm1681 = vcmask 1040384
      %v1682 = vsel %vm1681, %v1667, %v1680
      %1683 = vst [vmem:[%s212] sm:$0x3] %v1682
      %s1684 = smul.u32 %s19, 2
      %s1685 = sadd.s32 %s1684, %s20
      %s1686 = smul.u32 4, %s1685
      %p1687 = scmp.lt.s32.totalorder %s1686, 15
      %s1688 = scalar_select %p1687, %s1686, 15
      %s1689 = smul.addr %s1688, 8
      %s1690 = scalar_lea.vmem %s2, %s1689
      %s1691 = smul.u32 %s19, 2
      %s1692 = sadd.s32 %s1691, %s20
      %p1693 = scmp.lt.s32.totalorder %s1692, 3
      %s1694 = scalar_select %p1693, %s1692, 3
      %s1695 = smul.addr %s1694, 2
      %s1696 = scalar_lea.vmem %s3, %s1695
      // Predicated region
      $region29: #{_lambda_.8} parent=27 // pred_check
        %p1697 = pneg %p96
      $region30: #{_lambda_.8} parent=27 // pred_check_branch
        %1699 = sbr.rel (%p1697) target = $region32
      $region31: #{_lambda_.8} parent=27 // pred_region
        %s1700 = smul.u32 %s19, 2
        %s1701 = sadd.s32 %s1700, %s20
        %s1702 = smul.u32 4, %s1701
      $region32: #{_lambda_.8} parent=27 // pred_fallthru
        _
      // Predicated region
      $region33: #{_lambda_.8} parent=27 // pred_check
        %p1703 = pneg %p126
      $region34: #{_lambda_.8} parent=27 // pred_check_branch
        %1705 = sbr.rel (%p1703) target = $region36
      $region35: #{_lambda_.8} parent=27 // pred_region
        %s1706 = smul.u32 %s19, 2
        %s1707 = sadd.s32 %s1706, %s20
      $region36: #{_lambda_.8} parent=27 // pred_fallthru
        _
    $region28: #{_lambda_.8} parent=5 // pred_fallthru
      _
    %p1708 = scmp.le.s32.totalorder 2, %s10
    // Predicated region
    $region37: #{_lambda_.8} parent=5 // pred_check
      %p1709 = pneg %p1708
    $region38: #{_lambda_.8} parent=5 // pred_check_branch
      %1711 = sbr.rel (%p1709) target = $region40
    $region39: #{_lambda_.8} parent=5 // pred_region
      %s1712 = ssub.s32 %s10, 2
      // Predicated region
      $region41: #{_lambda_.8} parent=39 // pred_check
        %p1713 = pneg %p102
      $region42: #{_lambda_.8} parent=39 // pred_check_branch
        %1715 = sbr.rel (%p1713) target = $region44
      $region43: #{_lambda_.8} parent=39 // pred_region
        %s1716 = smul.u32 %s21, 2
        %s1717 = sadd.s32 %s1716, %s22
        %s1718 = smul.u32 4, %s1717
        %p1719 = scmp.lt.s32.totalorder %s1718, 15
        %s1720 = scalar_select %p1719, %s1718, 15
        %s1721 = smul.addr %s1720, 8
        %s1722 = scalar_lea.vmem %s2, %s1721
      $region44: #{_lambda_.8} parent=39 // pred_fallthru
        _
      // Predicated region
      $region45: #{_lambda_.8} parent=39 // pred_check
        %p1723 = pneg %p132
      $region46: #{_lambda_.8} parent=39 // pred_check_branch
        %1725 = sbr.rel (%p1723) target = $region48
      $region47: #{_lambda_.8} parent=39 // pred_region
        %s1726 = smul.u32 %s21, 2
        %s1727 = sadd.s32 %s1726, %s22
        %p1728 = scmp.lt.s32.totalorder %s1727, 3
        %s1729 = scalar_select %p1728, %s1727, 3
        %s1730 = smul.addr %s1729, 2
        %s1731 = scalar_lea.vmem %s3, %s1730
      $region48: #{_lambda_.8} parent=39 // pred_fallthru
        _
    $region40: #{_lambda_.8} parent=5 // pred_fallthru
      _
  $region6: #{_lambda_.8} parent=0 // loop_footer
    %s14 = sadd.s32 1, %s10
  $region7: #{_lambda_.8} parent=0 // loop_footer_branch
    %9 = sbr.rel target = $region3
  $region8: #{_lambda_.8} parent=0 // loop_exit
    _

</llo_original>
